<compile_context>
chip_gen: v7x
topology: tpu7x:2x2x1
jax: 0.10.0
libtpu: 0.0.40
codegen_flags: <defaults>
</compile_context>

<pallas_src>
import functools

import jax
import jax.numpy as jnp
from jax import lax
from jax.experimental import pallas as pl
from jax.experimental.pallas import tpu as pltpu


# ----------------------------------------------------------------------------
# Fused kernel: (conv -> bias -> relu) x 2 on one row tile, all in VMEM.
# ----------------------------------------------------------------------------
def _fused_block_kernel(x_ref, w1_ref, b1_ref, w2_ref, b2_ref, o_ref, ypad_ref,
                        *, H, W, TH, K, Cin, Cmid, Cout):
    # x_ref   : (TH+4P, W+2P, Cin) bf16   pre-padded overlapping row tile (NHWC)
    # w1_ref  : (K*K, Cin,  Cmid)  bf16   tap-major conv1 weights (HWIO order)
    # b1_ref  : (1, Cmid)          f32
    # w2_ref  : (K*K, Cmid, Cout)  bf16   tap-major conv2 weights
    # b2_ref  : (1, Cout)          f32
    # o_ref   : (TH, W, Cout)             output row tile (NHWC)
    # ypad_ref: VMEM (TH+2P, W+2P, Cmid) bf16   width-padded intermediate
    P = K // 2
    TH2 = TH + 2 * P
    t = pl.program_id(1)

    # ---- conv1: K*K shifted matmuls, f32 accumulation (no im2col scratch) ----
    acc1 = jnp.zeros((TH2 * W, Cmid), jnp.float32)
    for dy in range(K):
        for dx in range(K):
            patch = x_ref[dy:dy + TH2, dx:dx + W, :].reshape(TH2 * W, Cin)
            acc1 += jnp.dot(patch, w1_ref[dy * K + dx],
                            preferred_element_type=jnp.float32)
    y1 = jnp.maximum(acc1 + b1_ref[...], 0.0)          # bias + ReLU in f32
    y1 = y1.reshape(TH2, W, Cmid)

    # Rows of the y1 halo outside the image must be ZERO (conv2's zero padding).
    row0 = t * TH - P
    rows = lax.broadcasted_iota(jnp.int32, (TH2, 1, 1), 0) + row0
    y1 = jnp.where(jnp.logical_and(rows >= 0, rows < H), y1, 0.0)

    # Stage y1 as bf16; zero ONLY the width-halo columns (interior is fully
    # overwritten every step, so this is correct and cheap).
    ypad_ref[:, 0:P, :] = jnp.zeros((TH2, P, Cmid), ypad_ref.dtype)
    ypad_ref[:, P + W:P + W + P, :] = jnp.zeros((TH2, P, Cmid), ypad_ref.dtype)
    ypad_ref[:, P:P + W, :] = y1.astype(ypad_ref.dtype)

    # ---- conv2: same per-tap accumulation -----------------------------------
    acc2 = jnp.zeros((TH * W, Cout), jnp.float32)
    for dy in range(K):
        for dx in range(K):
            patch = ypad_ref[dy:dy + TH, dx:dx + W, :].reshape(TH * W, Cmid)
            acc2 += jnp.dot(patch, w2_ref[dy * K + dx],
                            preferred_element_type=jnp.float32)
    y2 = jnp.maximum(acc2 + b2_ref[...], 0.0)           # (TH*W, Cout) f32
    o_ref[...] = y2.reshape(TH, W, Cout).astype(o_ref.dtype)


# ----------------------------------------------------------------------------
# Public forward: PyTorch-style NCHW in / NCHW out.
# ----------------------------------------------------------------------------
def unet_basic_block(x_nchw, params, *, tile_h=8, compute_dtype=jnp.bfloat16):
    w1, b1 = params["conv1"]["w"], params["conv1"]["b"]   # HWIO
    w2, b2 = params["conv2"]["w"], params["conv2"]["b"]

    N, Cin, H, W = x_nchw.shape
    K = w1.shape[0]
    Cmid, Cout = w1.shape[-1], w2.shape[-1]
    P = K // 2

    TH = tile_h if (tile_h <= H and H % tile_h == 0) else H
    nT = H // TH
    TH2 = TH + 2 * P

    # NCHW -> NHWC, cast to bf16 once (MXU consumes bf16 anyway; halves traffic),
    # then pad 2P rows (fused 2-conv receptive field) and P columns with zeros.
    x = jnp.transpose(x_nchw, (0, 2, 3, 1)).astype(compute_dtype)
    xp = jnp.pad(x, ((0, 0), (2 * P, 2 * P), (P, P), (0, 0)))
    # Overlapping row tiles with a (K-1)-row halo on each side (built once in HBM).
    tiles = jnp.stack([xp[:, t * TH:t * TH + TH + 4 * P] for t in range(nT)],
                      axis=1)                           # (N, nT, TH+4P, W+2P, Cin)

    # Tap-major weights; (dy, dx) order matches HWIO / the reference conv.
    w1m = w1.reshape(K * K, Cin, Cmid).astype(compute_dtype)
    w2m = w2.reshape(K * K, Cmid, Cout).astype(compute_dtype)
    b1m = b1.reshape(1, Cmid).astype(jnp.float32)
    b2m = b2.reshape(1, Cout).astype(jnp.float32)

    kernel = functools.partial(_fused_block_kernel, H=H, W=W, TH=TH, K=K,
                               Cin=Cin, Cmid=Cmid, Cout=Cout)

    out_dtype = x_nchw.dtype
    out_isz = jnp.dtype(out_dtype).itemsize

    # Explicit VMEM budget: double-buffered in/out blocks + weights + scratch + slack.
    in_blk = (TH + 4 * P) * (W + 2 * P) * Cin * 2
    out_blk = TH * W * Cout * out_isz
    w_bytes = K * K * (Cin * Cmid + Cmid * Cout) * 2 + (Cmid + Cout) * 4
    scratch_bytes = TH2 * (W + 2 * P) * Cmid * 2
    vmem_limit = int(min(max(2 * (in_blk + out_blk) + 2 * w_bytes + scratch_bytes
                             + (24 << 20), 32 << 20), 64 << 20))

    flops = 2 * N * H * W * K * K * (Cin * Cmid + Cmid * Cout)
    bytes_accessed = (tiles.size * 2 + (w1m.size + w2m.size) * 2
                      + (b1m.size + b2m.size) * 4 + N * H * W * Cout * out_isz)

    out = pl.pallas_call(
        kernel,
        out_shape=jax.ShapeDtypeStruct((N, H, W, Cout), out_dtype),
        grid=(N, nT),
        in_specs=[
            pl.BlockSpec((None, None, TH + 4 * P, W + 2 * P, Cin),
                         lambda n, t: (n, t, 0, 0, 0)),
            pl.BlockSpec((K * K, Cin, Cmid), lambda n, t: (0, 0, 0)),
            pl.BlockSpec((1, Cmid), lambda n, t: (0, 0)),
            pl.BlockSpec((K * K, Cmid, Cout), lambda n, t: (0, 0, 0)),
            pl.BlockSpec((1, Cout), lambda n, t: (0, 0)),
        ],
        out_specs=pl.BlockSpec((None, TH, W, Cout), lambda n, t: (n, t, 0, 0)),
        scratch_shapes=[pltpu.VMEM((TH2, W + 2 * P, Cmid), compute_dtype)],
        compiler_params=pltpu.CompilerParams(
            dimension_semantics=("parallel", "parallel"),
            vmem_limit_bytes=vmem_limit),
        cost_estimate=pl.CostEstimate(flops=flops, transcendentals=0,
                                      bytes_accessed=bytes_accessed),
    )(tiles, w1m, b1m, w2m, b2m)

    return jnp.transpose(out, (0, 3, 1, 2))             # NHWC -> NCHW


# ----------------------------------------------------------------------------
# Pure-JAX reference (f32, highest precision) for validation.
# ----------------------------------------------------------------------------
def unet_basic_block_ref(x_nchw, params):
    dn = ("NHWC", "HWIO", "NHWC")
    x = jnp.transpose(x_nchw, (0, 2, 3, 1))
    y = lax.conv_general_dilated(x, params["conv1"]["w"], (1, 1), "SAME",
                                 dimension_numbers=dn,
                                 precision=lax.Precision.HIGHEST)
    y = jnp.maximum(y + params["conv1"]["b"], 0.0)
    y = lax.conv_general_dilated(y, params["conv2"]["w"], (1, 1), "SAME",
                                 dimension_numbers=dn,
                                 precision=lax.Precision.HIGHEST)
    y = jnp.maximum(y + params["conv2"]["b"], 0.0)
    return jnp.transpose(y, (0, 3, 1, 2))


# ----------------------------------------------------------------------------
# Deterministic synthetic parameters.
# ----------------------------------------------------------------------------
def init_params(key, in_features, out_features, mid_features=None):
    if mid_features is None:
        mid_features = out_features
    k1, k2, k3, k4 = jax.random.split(key, 4)
    return {
        "conv1": {
            "w": jax.random.normal(k1, (3, 3, in_features, mid_features), jnp.float32) * 0.1,
            "b": jax.random.normal(k2, (mid_features,), jnp.float32) * 0.1,
        },
        "conv2": {
            "w": jax.random.normal(k3, (3, 3, mid_features, out_features), jnp.float32) * 0.1,
            "b": jax.random.normal(k4, (out_features,), jnp.float32) * 0.1,
        },
    }


# ----------------------------------------------------------------------------
# main
# ----------------------------------------------------------------------------
if __name__ == "__main__":
    key = jax.random.PRNGKey(0)
    k_x, k_p = jax.random.split(key)

    batch, in_features, H, W = 2, 4, 16, 16
    mid_features, out_features = 16, 32

    x = jax.random.normal(k_x, (batch, in_features, H, W), jnp.float32)
    params = init_params(k_p, in_features, out_features, mid_features)

    fwd = jax.jit(unet_basic_block)
    out = jax.block_until_ready(fwd(x, params))

    assert out.shape == (batch, out_features, H, W), out.shape
    assert bool(jnp.all(jnp.isfinite(out)))

    # Validate against the pure-JAX f32 reference (bf16 MXU inputs, f32 accumulate).
    ref = unet_basic_block_ref(x, params)
    max_err = float(jnp.max(jnp.abs(out - ref)))
    assert bool(jnp.allclose(out, ref, atol=5e-2, rtol=5e-2)), max_err

    print("KERNEL_OK")
</pallas_src>

<mosaic_0001>
module attributes {stable_mosaic.version = 11 : i64} {
  func.func @_fused_block_kernel(%arg0: i32, %arg1: i32, %arg2: memref<1x1x12x18x4xbf16, #tpu.memory_space<vmem>>, %arg3: memref<9x4x16xbf16, #tpu.memory_space<vmem>>, %arg4: memref<1x16xf32, #tpu.memory_space<vmem>>, %arg5: memref<9x16x32xbf16, #tpu.memory_space<vmem>>, %arg6: memref<1x32xf32, #tpu.memory_space<vmem>>, %arg7: memref<1x8x16x32xf32, #tpu.memory_space<vmem>>, %arg8: memref<10x18x16xbf16, #tpu.memory_space<vmem>>) attributes {dimension_semantics = [#tpu.dimension_semantics<parallel>, #tpu.dimension_semantics<parallel>], iteration_bounds = array<i64: 2, 2>, scalar_prefetch = 0 : i64, scratch_operands = 1 : i64, tpu.core_type = #tpu.core_type<tc>, window_params = [{transform_indices = @transform_0, window_bounds = array<i64: 1, 1, 12, 18, 4>}, {pipeline_mode = #tpu.pipeline_mode<synchronous>, transform_indices = @transform_1, window_bounds = array<i64: 9, 4, 16>}, {pipeline_mode = #tpu.pipeline_mode<synchronous>, transform_indices = @transform_2, window_bounds = array<i64: 1, 16>}, {pipeline_mode = #tpu.pipeline_mode<synchronous>, transform_indices = @transform_3, window_bounds = array<i64: 9, 16, 32>}, {pipeline_mode = #tpu.pipeline_mode<synchronous>, transform_indices = @transform_4, window_bounds = array<i64: 1, 32>}, {transform_indices = @transform_5, window_bounds = array<i64: 1, 8, 16, 32>}]} {
    %cst = arith.constant 0.000000e+00 : f32
    %0 = vector.broadcast %cst : f32 to vector<160x16xf32>
    %c0 = arith.constant 0 : index
    %c0_0 = arith.constant 0 : index
    %c0_1 = arith.constant 0 : index
    %c0_2 = arith.constant 0 : index
    %c0_3 = arith.constant 0 : index
    %1 = vector.load %arg2[%c0, %c0_0, %c0_1, %c0_2, %c0_3] : memref<1x1x12x18x4xbf16, #tpu.memory_space<vmem>>, vector<1x1x10x16x4xbf16>
    %2 = vector.shape_cast %1 : vector<1x1x10x16x4xbf16> to vector<10x16x4xbf16>
    %3 = vector.shape_cast %2 : vector<10x16x4xbf16> to vector<160x4xbf16>
    %c0_4 = arith.constant 0 : index
    %c0_5 = arith.constant 0 : index
    %c0_6 = arith.constant 0 : index
    %4 = vector.load %arg3[%c0_4, %c0_5, %c0_6] : memref<9x4x16xbf16, #tpu.memory_space<vmem>>, vector<1x4x16xbf16>
    %5 = vector.shape_cast %4 : vector<1x4x16xbf16> to vector<4x16xbf16>
    %cst_7 = arith.constant dense<0.000000e+00> : vector<160x16xf32>
    %6 = tpu.matmul %3, %5, %cst_7 {dimension_numbers = #tpu.dot_dimension_numbers<[1], [0], [0], [1], [0, 0, 1, 1], [], []>} : vector<160x4xbf16>, vector<4x16xbf16>, vector<160x16xf32> -> vector<160x16xf32>
    %7 = arith.addf %0, %6 : vector<160x16xf32>
    %c0_8 = arith.constant 0 : index
    %c0_9 = arith.constant 0 : index
    %c0_10 = arith.constant 0 : index
    %c1 = arith.constant 1 : index
    %c0_11 = arith.constant 0 : index
    %8 = vector.load %arg2[%c0_8, %c0_9, %c0_10, %c1, %c0_11] : memref<1x1x12x18x4xbf16, #tpu.memory_space<vmem>>, vector<1x1x10x16x4xbf16>
    %9 = vector.shape_cast %8 : vector<1x1x10x16x4xbf16> to vector<10x16x4xbf16>
    %10 = vector.shape_cast %9 : vector<10x16x4xbf16> to vector<160x4xbf16>
    %c1_12 = arith.constant 1 : index
    %c0_13 = arith.constant 0 : index
    %c0_14 = arith.constant 0 : index
    %11 = vector.load %arg3[%c1_12, %c0_13, %c0_14] : memref<9x4x16xbf16, #tpu.memory_space<vmem>>, vector<1x4x16xbf16>
    %12 = vector.shape_cast %11 : vector<1x4x16xbf16> to vector<4x16xbf16>
    %cst_15 = arith.constant dense<0.000000e+00> : vector<160x16xf32>
    %13 = tpu.matmul %10, %12, %cst_15 {dimension_numbers = #tpu.dot_dimension_numbers<[1], [0], [0], [1], [0, 0, 1, 1], [], []>} : vector<160x4xbf16>, vector<4x16xbf16>, vector<160x16xf32> -> vector<160x16xf32>
    %14 = arith.addf %7, %13 : vector<160x16xf32>
    %c0_16 = arith.constant 0 : index
    %c0_17 = arith.constant 0 : index
    %c0_18 = arith.constant 0 : index
    %c2 = arith.constant 2 : index
    %c0_19 = arith.constant 0 : index
    %15 = vector.load %arg2[%c0_16, %c0_17, %c0_18, %c2, %c0_19] : memref<1x1x12x18x4xbf16, #tpu.memory_space<vmem>>, vector<1x1x10x16x4xbf16>
    %16 = vector.shape_cast %15 : vector<1x1x10x16x4xbf16> to vector<10x16x4xbf16>
    %17 = vector.shape_cast %16 : vector<10x16x4xbf16> to vector<160x4xbf16>
    %c2_20 = arith.constant 2 : index
    %c0_21 = arith.constant 0 : index
    %c0_22 = arith.constant 0 : index
    %18 = vector.load %arg3[%c2_20, %c0_21, %c0_22] : memref<9x4x16xbf16, #tpu.memory_space<vmem>>, vector<1x4x16xbf16>
    %19 = vector.shape_cast %18 : vector<1x4x16xbf16> to vector<4x16xbf16>
    %cst_23 = arith.constant dense<0.000000e+00> : vector<160x16xf32>
    %20 = tpu.matmul %17, %19, %cst_23 {dimension_numbers = #tpu.dot_dimension_numbers<[1], [0], [0], [1], [0, 0, 1, 1], [], []>} : vector<160x4xbf16>, vector<4x16xbf16>, vector<160x16xf32> -> vector<160x16xf32>
    %21 = arith.addf %14, %20 : vector<160x16xf32>
    %c0_24 = arith.constant 0 : index
    %c0_25 = arith.constant 0 : index
    %c1_26 = arith.constant 1 : index
    %c0_27 = arith.constant 0 : index
    %c0_28 = arith.constant 0 : index
    %22 = vector.load %arg2[%c0_24, %c0_25, %c1_26, %c0_27, %c0_28] : memref<1x1x12x18x4xbf16, #tpu.memory_space<vmem>>, vector<1x1x10x16x4xbf16>
    %23 = vector.shape_cast %22 : vector<1x1x10x16x4xbf16> to vector<10x16x4xbf16>
    %24 = vector.shape_cast %23 : vector<10x16x4xbf16> to vector<160x4xbf16>
    %c3 = arith.constant 3 : index
    %c0_29 = arith.constant 0 : index
    %c0_30 = arith.constant 0 : index
    %25 = vector.load %arg3[%c3, %c0_29, %c0_30] : memref<9x4x16xbf16, #tpu.memory_space<vmem>>, vector<1x4x16xbf16>
    %26 = vector.shape_cast %25 : vector<1x4x16xbf16> to vector<4x16xbf16>
    %cst_31 = arith.constant dense<0.000000e+00> : vector<160x16xf32>
    %27 = tpu.matmul %24, %26, %cst_31 {dimension_numbers = #tpu.dot_dimension_numbers<[1], [0], [0], [1], [0, 0, 1, 1], [], []>} : vector<160x4xbf16>, vector<4x16xbf16>, vector<160x16xf32> -> vector<160x16xf32>
    %28 = arith.addf %21, %27 : vector<160x16xf32>
    %c0_32 = arith.constant 0 : index
    %c0_33 = arith.constant 0 : index
    %c1_34 = arith.constant 1 : index
    %c1_35 = arith.constant 1 : index
    %c0_36 = arith.constant 0 : index
    %29 = vector.load %arg2[%c0_32, %c0_33, %c1_34, %c1_35, %c0_36] : memref<1x1x12x18x4xbf16, #tpu.memory_space<vmem>>, vector<1x1x10x16x4xbf16>
    %30 = vector.shape_cast %29 : vector<1x1x10x16x4xbf16> to vector<10x16x4xbf16>
    %31 = vector.shape_cast %30 : vector<10x16x4xbf16> to vector<160x4xbf16>
    %c4 = arith.constant 4 : index
    %c0_37 = arith.constant 0 : index
    %c0_38 = arith.constant 0 : index
    %32 = vector.load %arg3[%c4, %c0_37, %c0_38] : memref<9x4x16xbf16, #tpu.memory_space<vmem>>, vector<1x4x16xbf16>
    %33 = vector.shape_cast %32 : vector<1x4x16xbf16> to vector<4x16xbf16>
    %cst_39 = arith.constant dense<0.000000e+00> : vector<160x16xf32>
    %34 = tpu.matmul %31, %33, %cst_39 {dimension_numbers = #tpu.dot_dimension_numbers<[1], [0], [0], [1], [0, 0, 1, 1], [], []>} : vector<160x4xbf16>, vector<4x16xbf16>, vector<160x16xf32> -> vector<160x16xf32>
    %35 = arith.addf %28, %34 : vector<160x16xf32>
    %c0_40 = arith.constant 0 : index
    %c0_41 = arith.constant 0 : index
    %c1_42 = arith.constant 1 : index
    %c2_43 = arith.constant 2 : index
    %c0_44 = arith.constant 0 : index
    %36 = vector.load %arg2[%c0_40, %c0_41, %c1_42, %c2_43, %c0_44] : memref<1x1x12x18x4xbf16, #tpu.memory_space<vmem>>, vector<1x1x10x16x4xbf16>
    %37 = vector.shape_cast %36 : vector<1x1x10x16x4xbf16> to vector<10x16x4xbf16>
    %38 = vector.shape_cast %37 : vector<10x16x4xbf16> to vector<160x4xbf16>
    %c5 = arith.constant 5 : index
    %c0_45 = arith.constant 0 : index
    %c0_46 = arith.constant 0 : index
    %39 = vector.load %arg3[%c5, %c0_45, %c0_46] : memref<9x4x16xbf16, #tpu.memory_space<vmem>>, vector<1x4x16xbf16>
    %40 = vector.shape_cast %39 : vector<1x4x16xbf16> to vector<4x16xbf16>
    %cst_47 = arith.constant dense<0.000000e+00> : vector<160x16xf32>
    %41 = tpu.matmul %38, %40, %cst_47 {dimension_numbers = #tpu.dot_dimension_numbers<[1], [0], [0], [1], [0, 0, 1, 1], [], []>} : vector<160x4xbf16>, vector<4x16xbf16>, vector<160x16xf32> -> vector<160x16xf32>
    %42 = arith.addf %35, %41 : vector<160x16xf32>
    %c0_48 = arith.constant 0 : index
    %c0_49 = arith.constant 0 : index
    %c2_50 = arith.constant 2 : index
    %c0_51 = arith.constant 0 : index
    %c0_52 = arith.constant 0 : index
    %43 = vector.load %arg2[%c0_48, %c0_49, %c2_50, %c0_51, %c0_52] : memref<1x1x12x18x4xbf16, #tpu.memory_space<vmem>>, vector<1x1x10x16x4xbf16>
    %44 = vector.shape_cast %43 : vector<1x1x10x16x4xbf16> to vector<10x16x4xbf16>
    %45 = vector.shape_cast %44 : vector<10x16x4xbf16> to vector<160x4xbf16>
    %c6 = arith.constant 6 : index
    %c0_53 = arith.constant 0 : index
    %c0_54 = arith.constant 0 : index
    %46 = vector.load %arg3[%c6, %c0_53, %c0_54] : memref<9x4x16xbf16, #tpu.memory_space<vmem>>, vector<1x4x16xbf16>
    %47 = vector.shape_cast %46 : vector<1x4x16xbf16> to vector<4x16xbf16>
    %cst_55 = arith.constant dense<0.000000e+00> : vector<160x16xf32>
    %48 = tpu.matmul %45, %47, %cst_55 {dimension_numbers = #tpu.dot_dimension_numbers<[1], [0], [0], [1], [0, 0, 1, 1], [], []>} : vector<160x4xbf16>, vector<4x16xbf16>, vector<160x16xf32> -> vector<160x16xf32>
    %49 = arith.addf %42, %48 : vector<160x16xf32>
    %c0_56 = arith.constant 0 : index
    %c0_57 = arith.constant 0 : index
    %c2_58 = arith.constant 2 : index
    %c1_59 = arith.constant 1 : index
    %c0_60 = arith.constant 0 : index
    %50 = vector.load %arg2[%c0_56, %c0_57, %c2_58, %c1_59, %c0_60] : memref<1x1x12x18x4xbf16, #tpu.memory_space<vmem>>, vector<1x1x10x16x4xbf16>
    %51 = vector.shape_cast %50 : vector<1x1x10x16x4xbf16> to vector<10x16x4xbf16>
    %52 = vector.shape_cast %51 : vector<10x16x4xbf16> to vector<160x4xbf16>
    %c7 = arith.constant 7 : index
    %c0_61 = arith.constant 0 : index
    %c0_62 = arith.constant 0 : index
    %53 = vector.load %arg3[%c7, %c0_61, %c0_62] : memref<9x4x16xbf16, #tpu.memory_space<vmem>>, vector<1x4x16xbf16>
    %54 = vector.shape_cast %53 : vector<1x4x16xbf16> to vector<4x16xbf16>
    %cst_63 = arith.constant dense<0.000000e+00> : vector<160x16xf32>
    %55 = tpu.matmul %52, %54, %cst_63 {dimension_numbers = #tpu.dot_dimension_numbers<[1], [0], [0], [1], [0, 0, 1, 1], [], []>} : vector<160x4xbf16>, vector<4x16xbf16>, vector<160x16xf32> -> vector<160x16xf32>
    %56 = arith.addf %49, %55 : vector<160x16xf32>
    %c0_64 = arith.constant 0 : index
    %c0_65 = arith.constant 0 : index
    %c2_66 = arith.constant 2 : index
    %c2_67 = arith.constant 2 : index
    %c0_68 = arith.constant 0 : index
    %57 = vector.load %arg2[%c0_64, %c0_65, %c2_66, %c2_67, %c0_68] : memref<1x1x12x18x4xbf16, #tpu.memory_space<vmem>>, vector<1x1x10x16x4xbf16>
    %58 = vector.shape_cast %57 : vector<1x1x10x16x4xbf16> to vector<10x16x4xbf16>
    %59 = vector.shape_cast %58 : vector<10x16x4xbf16> to vector<160x4xbf16>
    %c8 = arith.constant 8 : index
    %c0_69 = arith.constant 0 : index
    %c0_70 = arith.constant 0 : index
    %60 = vector.load %arg3[%c8, %c0_69, %c0_70] : memref<9x4x16xbf16, #tpu.memory_space<vmem>>, vector<1x4x16xbf16>
    %61 = vector.shape_cast %60 : vector<1x4x16xbf16> to vector<4x16xbf16>
    %cst_71 = arith.constant dense<0.000000e+00> : vector<160x16xf32>
    %62 = tpu.matmul %59, %61, %cst_71 {dimension_numbers = #tpu.dot_dimension_numbers<[1], [0], [0], [1], [0, 0, 1, 1], [], []>} : vector<160x4xbf16>, vector<4x16xbf16>, vector<160x16xf32> -> vector<160x16xf32>
    %63 = arith.addf %56, %62 : vector<160x16xf32>
    %c0_72 = arith.constant 0 : index
    %c0_73 = arith.constant 0 : index
    %64 = vector.load %arg4[%c0_72, %c0_73] : memref<1x16xf32, #tpu.memory_space<vmem>>, vector<1x16xf32>
    %65 = vector.broadcast %64 : vector<1x16xf32> to vector<160x16xf32>
    %66 = arith.addf %63, %65 : vector<160x16xf32>
    %cst_74 = arith.constant 0.000000e+00 : f32
    %67 = vector.broadcast %cst_74 : f32 to vector<160x16xf32>
    %68 = arith.maximumf %66, %67 : vector<160x16xf32>
    %69 = vector.shape_cast %68 : vector<160x16xf32> to vector<10x16x16xf32>
    %c8_i32 = arith.constant 8 : i32
    %70 = arith.muli %arg1, %c8_i32 : i32
    %c1_i32 = arith.constant 1 : i32
    %71 = arith.subi %70, %c1_i32 : i32
    %72 = tpu.iota {dimensions = array<i32: 0>} : vector<10x1x1xi32>
    %73 = vector.broadcast %71 : i32 to vector<10x1x1xi32>
    %74 = arith.addi %72, %73 : vector<10x1x1xi32>
    %c0_i32 = arith.constant 0 : i32
    %75 = vector.broadcast %c0_i32 : i32 to vector<10x1x1xi32>
    %76 = arith.cmpi sge, %74, %75 : vector<10x1x1xi32>
    %c16_i32 = arith.constant 16 : i32
    %77 = vector.broadcast %c16_i32 : i32 to vector<10x1x1xi32>
    %78 = arith.cmpi slt, %74, %77 : vector<10x1x1xi32>
    %79 = arith.andi %76, %78 : vector<10x1x1xi1>
    %cst_75 = arith.constant 0.000000e+00 : f32
    %80 = vector.shape_cast %79 : vector<10x1x1xi1> to vector<10x1x1xi1>
    %81 = vector.broadcast %80 : vector<10x1x1xi1> to vector<10x16x16xi1>
    %82 = vector.broadcast %cst_75 : f32 to vector<10x16x16xf32>
    %83 = arith.select %81, %69, %82 : vector<10x16x16xi1>, vector<10x16x16xf32>
    %cst_76 = arith.constant 0.000000e+00 : bf16
    %84 = vector.broadcast %cst_76 : bf16 to vector<10x1x16xbf16>
    %c0_77 = arith.constant 0 : index
    %c0_78 = arith.constant 0 : index
    %c0_79 = arith.constant 0 : index
    %85 = vector.load %arg8[%c0_77, %c0_78, %c0_79] : memref<10x18x16xbf16, #tpu.memory_space<vmem>>, vector<10x1x16xbf16>
    tpu.vector_store %arg8[%c0_77, %c0_78, %c0_79], %84 {strides = array<i32>} : memref<10x18x16xbf16, #tpu.memory_space<vmem>>, vector<10x1x16xbf16>,
    %cst_80 = arith.constant 0.000000e+00 : bf16
    %86 = vector.broadcast %cst_80 : bf16 to vector<10x1x16xbf16>
    %c0_81 = arith.constant 0 : index
    %c17 = arith.constant 17 : index
    %c0_82 = arith.constant 0 : index
    %87 = vector.load %arg8[%c0_81, %c17, %c0_82] : memref<10x18x16xbf16, #tpu.memory_space<vmem>>, vector<10x1x16xbf16>
    tpu.vector_store %arg8[%c0_81, %c17, %c0_82], %86 {strides = array<i32>} : memref<10x18x16xbf16, #tpu.memory_space<vmem>>, vector<10x1x16xbf16>,
    %88 = arith.truncf %83 : vector<10x16x16xf32> to vector<10x16x16xbf16>
    %c0_83 = arith.constant 0 : index
    %c1_84 = arith.constant 1 : index
    %c0_85 = arith.constant 0 : index
    %89 = vector.load %arg8[%c0_83, %c1_84, %c0_85] : memref<10x18x16xbf16, #tpu.memory_space<vmem>>, vector<10x16x16xbf16>
    tpu.vector_store %arg8[%c0_83, %c1_84, %c0_85], %88 {strides = array<i32>} : memref<10x18x16xbf16, #tpu.memory_space<vmem>>, vector<10x16x16xbf16>,
    %cst_86 = arith.constant 0.000000e+00 : f32
    %90 = vector.broadcast %cst_86 : f32 to vector<128x32xf32>
    %c0_87 = arith.constant 0 : index
    %c0_88 = arith.constant 0 : index
    %c0_89 = arith.constant 0 : index
    %91 = vector.load %arg8[%c0_87, %c0_88, %c0_89] : memref<10x18x16xbf16, #tpu.memory_space<vmem>>, vector<8x16x16xbf16>
    %92 = vector.shape_cast %91 : vector<8x16x16xbf16> to vector<128x16xbf16>
    %c0_90 = arith.constant 0 : index
    %c0_91 = arith.constant 0 : index
    %c0_92 = arith.constant 0 : index
    %93 = vector.load %arg5[%c0_90, %c0_91, %c0_92] : memref<9x16x32xbf16, #tpu.memory_space<vmem>>, vector<1x16x32xbf16>
    %94 = vector.shape_cast %93 : vector<1x16x32xbf16> to vector<16x32xbf16>
    %cst_93 = arith.constant dense<0.000000e+00> : vector<128x32xf32>
    %95 = tpu.matmul %92, %94, %cst_93 {dimension_numbers = #tpu.dot_dimension_numbers<[1], [0], [0], [1], [0, 0, 1, 1], [], []>} : vector<128x16xbf16>, vector<16x32xbf16>, vector<128x32xf32> -> vector<128x32xf32>
    %96 = arith.addf %90, %95 : vector<128x32xf32>
    %c0_94 = arith.constant 0 : index
    %c1_95 = arith.constant 1 : index
    %c0_96 = arith.constant 0 : index
    %97 = vector.load %arg8[%c0_94, %c1_95, %c0_96] : memref<10x18x16xbf16, #tpu.memory_space<vmem>>, vector<8x16x16xbf16>
    %98 = vector.shape_cast %97 : vector<8x16x16xbf16> to vector<128x16xbf16>
    %c1_97 = arith.constant 1 : index
    %c0_98 = arith.constant 0 : index
    %c0_99 = arith.constant 0 : index
    %99 = vector.load %arg5[%c1_97, %c0_98, %c0_99] : memref<9x16x32xbf16, #tpu.memory_space<vmem>>, vector<1x16x32xbf16>
    %100 = vector.shape_cast %99 : vector<1x16x32xbf16> to vector<16x32xbf16>
    %cst_100 = arith.constant dense<0.000000e+00> : vector<128x32xf32>
    %101 = tpu.matmul %98, %100, %cst_100 {dimension_numbers = #tpu.dot_dimension_numbers<[1], [0], [0], [1], [0, 0, 1, 1], [], []>} : vector<128x16xbf16>, vector<16x32xbf16>, vector<128x32xf32> -> vector<128x32xf32>
    %102 = arith.addf %96, %101 : vector<128x32xf32>
    %c0_101 = arith.constant 0 : index
    %c2_102 = arith.constant 2 : index
    %c0_103 = arith.constant 0 : index
    %103 = vector.load %arg8[%c0_101, %c2_102, %c0_103] : memref<10x18x16xbf16, #tpu.memory_space<vmem>>, vector<8x16x16xbf16>
    %104 = vector.shape_cast %103 : vector<8x16x16xbf16> to vector<128x16xbf16>
    %c2_104 = arith.constant 2 : index
    %c0_105 = arith.constant 0 : index
    %c0_106 = arith.constant 0 : index
    %105 = vector.load %arg5[%c2_104, %c0_105, %c0_106] : memref<9x16x32xbf16, #tpu.memory_space<vmem>>, vector<1x16x32xbf16>
    %106 = vector.shape_cast %105 : vector<1x16x32xbf16> to vector<16x32xbf16>
    %cst_107 = arith.constant dense<0.000000e+00> : vector<128x32xf32>
    %107 = tpu.matmul %104, %106, %cst_107 {dimension_numbers = #tpu.dot_dimension_numbers<[1], [0], [0], [1], [0, 0, 1, 1], [], []>} : vector<128x16xbf16>, vector<16x32xbf16>, vector<128x32xf32> -> vector<128x32xf32>
    %108 = arith.addf %102, %107 : vector<128x32xf32>
    %c1_108 = arith.constant 1 : index
    %c0_109 = arith.constant 0 : index
    %c0_110 = arith.constant 0 : index
    %109 = vector.load %arg8[%c1_108, %c0_109, %c0_110] : memref<10x18x16xbf16, #tpu.memory_space<vmem>>, vector<8x16x16xbf16>
    %110 = vector.shape_cast %109 : vector<8x16x16xbf16> to vector<128x16xbf16>
    %c3_111 = arith.constant 3 : index
    %c0_112 = arith.constant 0 : index
    %c0_113 = arith.constant 0 : index
    %111 = vector.load %arg5[%c3_111, %c0_112, %c0_113] : memref<9x16x32xbf16, #tpu.memory_space<vmem>>, vector<1x16x32xbf16>
    %112 = vector.shape_cast %111 : vector<1x16x32xbf16> to vector<16x32xbf16>
    %cst_114 = arith.constant dense<0.000000e+00> : vector<128x32xf32>
    %113 = tpu.matmul %110, %112, %cst_114 {dimension_numbers = #tpu.dot_dimension_numbers<[1], [0], [0], [1], [0, 0, 1, 1], [], []>} : vector<128x16xbf16>, vector<16x32xbf16>, vector<128x32xf32> -> vector<128x32xf32>
    %114 = arith.addf %108, %113 : vector<128x32xf32>
    %c1_115 = arith.constant 1 : index
    %c1_116 = arith.constant 1 : index
    %c0_117 = arith.constant 0 : index
    %115 = vector.load %arg8[%c1_115, %c1_116, %c0_117] : memref<10x18x16xbf16, #tpu.memory_space<vmem>>, vector<8x16x16xbf16>
    %116 = vector.shape_cast %115 : vector<8x16x16xbf16> to vector<128x16xbf16>
    %c4_118 = arith.constant 4 : index
    %c0_119 = arith.constant 0 : index
    %c0_120 = arith.constant 0 : index
    %117 = vector.load %arg5[%c4_118, %c0_119, %c0_120] : memref<9x16x32xbf16, #tpu.memory_space<vmem>>, vector<1x16x32xbf16>
    %118 = vector.shape_cast %117 : vector<1x16x32xbf16> to vector<16x32xbf16>
    %cst_121 = arith.constant dense<0.000000e+00> : vector<128x32xf32>
    %119 = tpu.matmul %116, %118, %cst_121 {dimension_numbers = #tpu.dot_dimension_numbers<[1], [0], [0], [1], [0, 0, 1, 1], [], []>} : vector<128x16xbf16>, vector<16x32xbf16>, vector<128x32xf32> -> vector<128x32xf32>
    %120 = arith.addf %114, %119 : vector<128x32xf32>
    %c1_122 = arith.constant 1 : index
    %c2_123 = arith.constant 2 : index
    %c0_124 = arith.constant 0 : index
    %121 = vector.load %arg8[%c1_122, %c2_123, %c0_124] : memref<10x18x16xbf16, #tpu.memory_space<vmem>>, vector<8x16x16xbf16>
    %122 = vector.shape_cast %121 : vector<8x16x16xbf16> to vector<128x16xbf16>
    %c5_125 = arith.constant 5 : index
    %c0_126 = arith.constant 0 : index
    %c0_127 = arith.constant 0 : index
    %123 = vector.load %arg5[%c5_125, %c0_126, %c0_127] : memref<9x16x32xbf16, #tpu.memory_space<vmem>>, vector<1x16x32xbf16>
    %124 = vector.shape_cast %123 : vector<1x16x32xbf16> to vector<16x32xbf16>
    %cst_128 = arith.constant dense<0.000000e+00> : vector<128x32xf32>
    %125 = tpu.matmul %122, %124, %cst_128 {dimension_numbers = #tpu.dot_dimension_numbers<[1], [0], [0], [1], [0, 0, 1, 1], [], []>} : vector<128x16xbf16>, vector<16x32xbf16>, vector<128x32xf32> -> vector<128x32xf32>
    %126 = arith.addf %120, %125 : vector<128x32xf32>
    %c2_129 = arith.constant 2 : index
    %c0_130 = arith.constant 0 : index
    %c0_131 = arith.constant 0 : index
    %127 = vector.load %arg8[%c2_129, %c0_130, %c0_131] : memref<10x18x16xbf16, #tpu.memory_space<vmem>>, vector<8x16x16xbf16>
    %128 = vector.shape_cast %127 : vector<8x16x16xbf16> to vector<128x16xbf16>
    %c6_132 = arith.constant 6 : index
    %c0_133 = arith.constant 0 : index
    %c0_134 = arith.constant 0 : index
    %129 = vector.load %arg5[%c6_132, %c0_133, %c0_134] : memref<9x16x32xbf16, #tpu.memory_space<vmem>>, vector<1x16x32xbf16>
    %130 = vector.shape_cast %129 : vector<1x16x32xbf16> to vector<16x32xbf16>
    %cst_135 = arith.constant dense<0.000000e+00> : vector<128x32xf32>
    %131 = tpu.matmul %128, %130, %cst_135 {dimension_numbers = #tpu.dot_dimension_numbers<[1], [0], [0], [1], [0, 0, 1, 1], [], []>} : vector<128x16xbf16>, vector<16x32xbf16>, vector<128x32xf32> -> vector<128x32xf32>
    %132 = arith.addf %126, %131 : vector<128x32xf32>
    %c2_136 = arith.constant 2 : index
    %c1_137 = arith.constant 1 : index
    %c0_138 = arith.constant 0 : index
    %133 = vector.load %arg8[%c2_136, %c1_137, %c0_138] : memref<10x18x16xbf16, #tpu.memory_space<vmem>>, vector<8x16x16xbf16>
    %134 = vector.shape_cast %133 : vector<8x16x16xbf16> to vector<128x16xbf16>
    %c7_139 = arith.constant 7 : index
    %c0_140 = arith.constant 0 : index
    %c0_141 = arith.constant 0 : index
    %135 = vector.load %arg5[%c7_139, %c0_140, %c0_141] : memref<9x16x32xbf16, #tpu.memory_space<vmem>>, vector<1x16x32xbf16>
    %136 = vector.shape_cast %135 : vector<1x16x32xbf16> to vector<16x32xbf16>
    %cst_142 = arith.constant dense<0.000000e+00> : vector<128x32xf32>
    %137 = tpu.matmul %134, %136, %cst_142 {dimension_numbers = #tpu.dot_dimension_numbers<[1], [0], [0], [1], [0, 0, 1, 1], [], []>} : vector<128x16xbf16>, vector<16x32xbf16>, vector<128x32xf32> -> vector<128x32xf32>
    %138 = arith.addf %132, %137 : vector<128x32xf32>
    %c2_143 = arith.constant 2 : index
    %c2_144 = arith.constant 2 : index
    %c0_145 = arith.constant 0 : index
    %139 = vector.load %arg8[%c2_143, %c2_144, %c0_145] : memref<10x18x16xbf16, #tpu.memory_space<vmem>>, vector<8x16x16xbf16>
    %140 = vector.shape_cast %139 : vector<8x16x16xbf16> to vector<128x16xbf16>
    %c8_146 = arith.constant 8 : index
    %c0_147 = arith.constant 0 : index
    %c0_148 = arith.constant 0 : index
    %141 = vector.load %arg5[%c8_146, %c0_147, %c0_148] : memref<9x16x32xbf16, #tpu.memory_space<vmem>>, vector<1x16x32xbf16>
    %142 = vector.shape_cast %141 : vector<1x16x32xbf16> to vector<16x32xbf16>
    %cst_149 = arith.constant dense<0.000000e+00> : vector<128x32xf32>
    %143 = tpu.matmul %140, %142, %cst_149 {dimension_numbers = #tpu.dot_dimension_numbers<[1], [0], [0], [1], [0, 0, 1, 1], [], []>} : vector<128x16xbf16>, vector<16x32xbf16>, vector<128x32xf32> -> vector<128x32xf32>
    %144 = arith.addf %138, %143 : vector<128x32xf32>
    %c0_150 = arith.constant 0 : index
    %c0_151 = arith.constant 0 : index
    %145 = vector.load %arg6[%c0_150, %c0_151] : memref<1x32xf32, #tpu.memory_space<vmem>>, vector<1x32xf32>
    %146 = vector.broadcast %145 : vector<1x32xf32> to vector<128x32xf32>
    %147 = arith.addf %144, %146 : vector<128x32xf32>
    %cst_152 = arith.constant 0.000000e+00 : f32
    %148 = vector.broadcast %cst_152 : f32 to vector<128x32xf32>
    %149 = arith.maximumf %147, %148 : vector<128x32xf32>
    %150 = vector.shape_cast %149 : vector<128x32xf32> to vector<8x16x32xf32>
    %c0_153 = arith.constant 0 : index
    %c0_154 = arith.constant 0 : index
    %c0_155 = arith.constant 0 : index
    %c0_156 = arith.constant 0 : index
    %151 = vector.load %arg7[%c0_153, %c0_154, %c0_155, %c0_156] : memref<1x8x16x32xf32, #tpu.memory_space<vmem>>, vector<1x8x16x32xf32>
    %152 = vector.shape_cast %151 : vector<1x8x16x32xf32> to vector<8x16x32xf32>
    %153 = vector.shape_cast %150 : vector<8x16x32xf32> to vector<1x8x16x32xf32>
    tpu.vector_store %arg7[%c0_153, %c0_154, %c0_155, %c0_156], %153 {strides = array<i32>} : memref<1x8x16x32xf32, #tpu.memory_space<vmem>>, vector<1x8x16x32xf32>,
    return
  }
  func.func @transform_0(%arg0: i32, %arg1: i32) -> (i32, i32, i32, i32, i32) {
    %c0_i32 = arith.constant 0 : i32
    %c0_i32_0 = arith.constant 0 : i32
    %c0_i32_1 = arith.constant 0 : i32
    %c0_i32_2 = arith.constant 0 : i32
    return %arg0, %arg1, %c0_i32, %c0_i32_0, %c0_i32_1 : i32, i32, i32, i32, i32
  }
  func.func @transform_1(%arg0: i32, %arg1: i32) -> (i32, i32, i32) {
    %c0_i32 = arith.constant 0 : i32
    %c0_i32_0 = arith.constant 0 : i32
    %c0_i32_1 = arith.constant 0 : i32
    %c0_i32_2 = arith.constant 0 : i32
    return %c0_i32, %c0_i32_0, %c0_i32_1 : i32, i32, i32
  }
  func.func @transform_2(%arg0: i32, %arg1: i32) -> (i32, i32) {
    %c0_i32 = arith.constant 0 : i32
    %c0_i32_0 = arith.constant 0 : i32
    %c0_i32_1 = arith.constant 0 : i32
    return %c0_i32, %c0_i32_0 : i32, i32
  }
  func.func @transform_3(%arg0: i32, %arg1: i32) -> (i32, i32, i32) {
    %c0_i32 = arith.constant 0 : i32
    %c0_i32_0 = arith.constant 0 : i32
    %c0_i32_1 = arith.constant 0 : i32
    %c0_i32_2 = arith.constant 0 : i32
    return %c0_i32, %c0_i32_0, %c0_i32_1 : i32, i32, i32
  }
  func.func @transform_4(%arg0: i32, %arg1: i32) -> (i32, i32) {
    %c0_i32 = arith.constant 0 : i32
    %c0_i32_0 = arith.constant 0 : i32
    %c0_i32_1 = arith.constant 0 : i32
    return %c0_i32, %c0_i32_0 : i32, i32
  }
  func.func @transform_5(%arg0: i32, %arg1: i32) -> (i32, i32, i32, i32) {
    %c0_i32 = arith.constant 0 : i32
    %c0_i32_0 = arith.constant 0 : i32
    %c0_i32_1 = arith.constant 0 : i32
    return %arg0, %arg1, %c0_i32, %c0_i32_0 : i32, i32, i32, i32
  }
}

</mosaic_0001>

<llo_original>
// kernel: unet_basic_block.1
$region0: #{unet_basic_block.1}
  #allocation0 [shape = 'u32[]', space=smem, size = 0x4, offset = 0x4, fixed_abs, tag = 'smem constant byte address 0x4 - core index']
  #allocation1 [shape = 'u32[144,128]{1,0:T(1,128)}', space=vmem, size = 0x12000, scoped, tag = 'internal scratch']
  #allocation2 [shape = 'bf16[10,18,16]{2,1,0:T(8,128)(2,1)}', space=vmem, size = 0xf000, scoped, tag = 'scratch operand']
  %s0 = inlined_call_operand.vmem [shape: bf16[2,2,12,18,4], index: 0, kind: input, shape index: {}]
  %s1 = inlined_call_operand.vmem [shape: bf16[9,4,16], index: 1, kind: input, shape index: {}]
  %s2 = inlined_call_operand.vmem [shape: f32[1,16], index: 2, kind: input, shape index: {}]
  %s3 = inlined_call_operand.vmem [shape: bf16[9,16,32], index: 3, kind: input, shape index: {}]
  %s4 = inlined_call_operand.vmem [shape: f32[1,32], index: 4, kind: input, shape index: {}]
  %s5 = inlined_call_operand.hbm [shape: f32[2,16,16,32], index: 5, kind: output, shape index: {}]
  %s6 = sld [smem:[#allocation0]]
  $region53: #{unet_basic_block.1} parent=0
    _
  %s8 = ssub.s32 1, %s6
  %s9 = scalar_select 0, %s8, %s6
  $region1: #{unet_basic_block.1} parent=0
    #allocation3 [shape = 'u8[131072]{0}', space=vmem, size = 0x20000, scoped, tag = 'output window, operand 0']
    #allocation4 [shape = 's32[2]{0}', space=sflag, size = 0x8, scoped, tag = 'scoped memory for unet_basic_block.1']
    %10 = vsyncpa [#allocation4], 0
    %s11 = scalar_lea.sflag [#allocation4], 1
    %12 = vsyncpa %s11, 0
    loop: start=0, step=1, limit=6
    $region2: #{unet_basic_block.1} parent=1 // loop_pre_header
      _
    $region3: #{unet_basic_block.1} parent=1 // loop_header
      %s14 = sphi 0, %s18
      %p15 = scmp.ge.s32.totalorder %s14, 6
      %s21 = sphi 0, %s33
      %s22 = sphi 0, %s29
      %s23 = sphi 0, %s21
      %s24 = sphi 0, %s22
      %s25 = sphi 0, %s23
      %s26 = sphi 0, %s24
      %s38 = sphi 0, %s40
      %s41 = sphi 0, %s38
      %s42 = sphi 0, %s41
      %s58 = sphi 0, %s42
      %s62 = sphi 0, %s62
      %s64 = sphi 0, %s62
      %s65 = sphi 0, %s64
      %s79 = sphi 0, %s65
      %s83 = sphi 0, %s83
      %s85 = sphi 0, %s83
      %s86 = sphi 0, %s85
      %s100 = sphi 0, %s86
      %s104 = sphi 0, %s104
      %s106 = sphi 0, %s104
      %s107 = sphi 0, %s106
      %s121 = sphi 0, %s107
      %s125 = sphi 0, %s125
      %s127 = sphi 0, %s125
      %s128 = sphi 0, %s127
      %s142 = sphi 0, %s128
      %s150 = sphi 0, %s152
      %s153 = sphi 0, %s150
      %s154 = sphi 0, %s153
      %s170 = sphi 0, %s154
    $region4: #{unet_basic_block.1} parent=1 // loop_header_branch
      %17 = sbr.rel (%p15) target = $region8
    $region5: #{unet_basic_block.1} parent=1 // loop_body
      %s19 = ssub.s32 %s14, 1
      %s20 = ssub.s32 %s14, 2
      %s27 = sadd.s32 1, %s22
      %p28 = scmp.ge.s32.totalorder %s27, 2
      %s29 = scalar_select %p28, 0, %s27
      %s30 = sadd.s32 1, %s21
      %s31 = scalar_select %p28, %s30, %s21
      %p32 = scmp.ge.s32.totalorder %s31, 2
      %s33 = scalar_select %p32, 0, %s31
      %s34 = ssub.s32 %s21, %s33
      %s35 = ssub.s32 %s22, %s29
      %s36 = sor.u32 %s34, %s35
      %p37 = scmp.eq.s32.totalorder %s36, 0
      %s39 = sadd.s32 %s38, 1
      %s40 = scalar_select %p37, %s38, %s39
      %p43 = pneg %p37
      %p44 = scmp.eq.s32.totalorder %s14, 3
      %p45 = por %p43, %p44
      %p46 = scmp.ne.s32.totalorder %s38, %s41
      %p47 = scmp.eq.s32.totalorder %s14, 0
      %p48 = por %p46, %p47
      %p49 = scmp.ne.s32.totalorder %s38, %s41
      %p50 = scmp.eq.s32.totalorder %s19, 3
      %p51 = por %p49, %p50
      %p52 = scmp.ne.s32.totalorder %s41, %s42
      %p53 = scmp.eq.s32.totalorder %s19, 0
      %p54 = por %p52, %p53
      %p55 = scmp.ne.s32.totalorder %s41, %s42
      %p56 = scmp.eq.s32.totalorder %s20, 3
      %p57 = por %p55, %p56
      %p59 = scmp.ne.s32.totalorder %s42, %s58
      %p60 = scmp.eq.s32.totalorder %s20, 0
      %p61 = por %p59, %p60
      %s63 = sadd.s32 %s62, 1
      %p66 = scmp.eq.s32.totalorder %s14, 3
      %p67 = scmp.ne.s32.totalorder %s62, %s64
      %p68 = scmp.eq.s32.totalorder %s14, 0
      %p69 = por %p67, %p68
      %p70 = scmp.ne.s32.totalorder %s62, %s64
      %p71 = scmp.eq.s32.totalorder %s19, 3
      %p72 = por %p70, %p71
      %p73 = scmp.ne.s32.totalorder %s64, %s65
      %p74 = scmp.eq.s32.totalorder %s19, 0
      %p75 = por %p73, %p74
      %p76 = scmp.ne.s32.totalorder %s64, %s65
      %p77 = scmp.eq.s32.totalorder %s20, 3
      %p78 = por %p76, %p77
      %p80 = scmp.ne.s32.totalorder %s65, %s79
      %p81 = scmp.eq.s32.totalorder %s20, 0
      %p82 = por %p80, %p81
      %s84 = sadd.s32 %s83, 1
      %p87 = scmp.eq.s32.totalorder %s14, 3
      %p88 = scmp.ne.s32.totalorder %s83, %s85
      %p89 = scmp.eq.s32.totalorder %s14, 0
      %p90 = por %p88, %p89
      %p91 = scmp.ne.s32.totalorder %s83, %s85
      %p92 = scmp.eq.s32.totalorder %s19, 3
      %p93 = por %p91, %p92
      %p94 = scmp.ne.s32.totalorder %s85, %s86
      %p95 = scmp.eq.s32.totalorder %s19, 0
      %p96 = por %p94, %p95
      %p97 = scmp.ne.s32.totalorder %s85, %s86
      %p98 = scmp.eq.s32.totalorder %s20, 3
      %p99 = por %p97, %p98
      %p101 = scmp.ne.s32.totalorder %s86, %s100
      %p102 = scmp.eq.s32.totalorder %s20, 0
      %p103 = por %p101, %p102
      %s105 = sadd.s32 %s104, 1
      %p108 = scmp.eq.s32.totalorder %s14, 3
      %p109 = scmp.ne.s32.totalorder %s104, %s106
      %p110 = scmp.eq.s32.totalorder %s14, 0
      %p111 = por %p109, %p110
      %p112 = scmp.ne.s32.totalorder %s104, %s106
      %p113 = scmp.eq.s32.totalorder %s19, 3
      %p114 = por %p112, %p113
      %p115 = scmp.ne.s32.totalorder %s106, %s107
      %p116 = scmp.eq.s32.totalorder %s19, 0
      %p117 = por %p115, %p116
      %p118 = scmp.ne.s32.totalorder %s106, %s107
      %p119 = scmp.eq.s32.totalorder %s20, 3
      %p120 = por %p118, %p119
      %p122 = scmp.ne.s32.totalorder %s107, %s121
      %p123 = scmp.eq.s32.totalorder %s20, 0
      %p124 = por %p122, %p123
      %s126 = sadd.s32 %s125, 1
      %p129 = scmp.eq.s32.totalorder %s14, 3
      %p130 = scmp.ne.s32.totalorder %s125, %s127
      %p131 = scmp.eq.s32.totalorder %s14, 0
      %p132 = por %p130, %p131
      %p133 = scmp.ne.s32.totalorder %s125, %s127
      %p134 = scmp.eq.s32.totalorder %s19, 3
      %p135 = por %p133, %p134
      %p136 = scmp.ne.s32.totalorder %s127, %s128
      %p137 = scmp.eq.s32.totalorder %s19, 0
      %p138 = por %p136, %p137
      %p139 = scmp.ne.s32.totalorder %s127, %s128
      %p140 = scmp.eq.s32.totalorder %s20, 3
      %p141 = por %p139, %p140
      %p143 = scmp.ne.s32.totalorder %s128, %s142
      %p144 = scmp.eq.s32.totalorder %s20, 0
      %p145 = por %p143, %p144
      %s146 = ssub.s32 %s21, %s33
      %s147 = ssub.s32 %s22, %s29
      %s148 = sor.u32 %s146, %s147
      %p149 = scmp.eq.s32.totalorder %s148, 0
      %s151 = sadd.s32 %s150, 1
      %s152 = scalar_select %p149, %s150, %s151
      %p155 = pneg %p149
      %p156 = scmp.eq.s32.totalorder %s14, 3
      %p157 = por %p155, %p156
      %p158 = scmp.ne.s32.totalorder %s150, %s153
      %p159 = scmp.eq.s32.totalorder %s14, 0
      %p160 = por %p158, %p159
      %p161 = scmp.ne.s32.totalorder %s150, %s153
      %p162 = scmp.eq.s32.totalorder %s19, 3
      %p163 = por %p161, %p162
      %p164 = scmp.ne.s32.totalorder %s153, %s154
      %p165 = scmp.eq.s32.totalorder %s19, 0
      %p166 = por %p164, %p165
      %p167 = scmp.ne.s32.totalorder %s153, %s154
      %p168 = scmp.eq.s32.totalorder %s20, 3
      %p169 = por %p167, %p168
      %p171 = scmp.ne.s32.totalorder %s154, %s170
      %p172 = scmp.eq.s32.totalorder %s20, 0
      %p173 = por %p171, %p172
      %p174 = scmp.le.s32.totalorder 1, %s14
      %p175 = scmp.lt.s32.totalorder %s14, 5
      %p176 = pnand %p174, %p175
      %p177 = pneg %p176
      // Predicated region
      $region9: #{unet_basic_block.1} parent=5 // pred_check
        _
      $region10: #{unet_basic_block.1} parent=5 // pred_check_branch
        %179 = sbr.rel (%p176) target = $region12
      $region11: #{unet_basic_block.1} parent=5 // pred_region
        %s180 = ssub.s32 %s14, 1
        // Predicated region
        $region13: #{unet_basic_block.1} parent=11 // pred_check
          %p181 = pneg %p75
        $region14: #{unet_basic_block.1} parent=11 // pred_check_branch
          %183 = sbr.rel (%p181) target = $region16
        $region15: #{unet_basic_block.1} parent=11 // pred_region
          _
        $region16: #{unet_basic_block.1} parent=11 // pred_fallthru
          _
        // Predicated region
        $region17: #{unet_basic_block.1} parent=11 // pred_check
          %p184 = pneg %p96
        $region18: #{unet_basic_block.1} parent=11 // pred_check_branch
          %186 = sbr.rel (%p184) target = $region20
        $region19: #{unet_basic_block.1} parent=11 // pred_region
          _
        $region20: #{unet_basic_block.1} parent=11 // pred_fallthru
          _
        // Predicated region
        $region21: #{unet_basic_block.1} parent=11 // pred_check
          %p187 = pneg %p117
        $region22: #{unet_basic_block.1} parent=11 // pred_check_branch
          %189 = sbr.rel (%p187) target = $region24
        $region23: #{unet_basic_block.1} parent=11 // pred_region
          _
        $region24: #{unet_basic_block.1} parent=11 // pred_fallthru
          _
        // Predicated region
        $region25: #{unet_basic_block.1} parent=11 // pred_check
          %p190 = pneg %p138
        $region26: #{unet_basic_block.1} parent=11 // pred_check_branch
          %192 = sbr.rel (%p190) target = $region28
        $region27: #{unet_basic_block.1} parent=11 // pred_region
          _
        $region28: #{unet_basic_block.1} parent=11 // pred_fallthru
          _
      $region12: #{unet_basic_block.1} parent=5 // pred_fallthru
        _
      %p193 = scmp.lt.s32.totalorder %s14, 4
      // Predicated region
      $region29: #{unet_basic_block.1} parent=5 // pred_check
        %p194 = pneg %p193
      $region30: #{unet_basic_block.1} parent=5 // pred_check_branch
        %196 = sbr.rel (%p194) target = $region32
      $region31: #{unet_basic_block.1} parent=5 // pred_region
        // Predicated region
        $region33: #{unet_basic_block.1} parent=31 // pred_check
          %p197 = pneg %p48
        $region34: #{unet_basic_block.1} parent=31 // pred_check_branch
          %199 = sbr.rel (%p197) target = $region36
        $region35: #{unet_basic_block.1} parent=31 // pred_region
          %p200 = scmp.lt.s32.totalorder %s21, 1
          %s201 = scalar_select %p200, %s21, 1
          %p202 = scmp.lt.s32.totalorder %s22, 1
          %s203 = scalar_select %p202, %s22, 1
          %s204 = smul.addr %s203, 36
          %s205 = smul.addr %s201, 72
          %s206 = sadd.s32 %s204, %s205
          %s207 = smul.addr %s206, 4
          %s208 = scalar_lea.vmem %s0, %s207
        $region36: #{unet_basic_block.1} parent=31 // pred_fallthru
          _
      $region32: #{unet_basic_block.1} parent=5 // pred_fallthru
        _
      %p209 = scmp.le.s32.totalorder 1, %s14
      %p210 = scmp.lt.s32.totalorder %s14, 5
      %p211 = pnand %p209, %p210
      %p212 = pneg %p211
      // Predicated region
      $region37: #{unet_basic_block.1} parent=5 // pred_check
        _
      $region38: #{unet_basic_block.1} parent=5 // pred_check_branch
        %214 = sbr.rel (%p211) target = $region40
      $region39: #{unet_basic_block.1} parent=5 // pred_region
        %s215 = ssub.s32 %s14, 1
        %p216 = scmp.lt.s32.totalorder %s23, 1
        %s217 = scalar_select %p216, %s23, 1
        %p218 = scmp.lt.s32.totalorder %s24, 1
        %s219 = scalar_select %p218, %s24, 1
        %s220 = smul.addr %s219, 36
        %s221 = smul.addr %s217, 72
        %s222 = sadd.s32 %s220, %s221
        %s223 = smul.addr %s222, 4
        %s224 = scalar_lea.vmem %s0, %s223
        %p225 = pneg %p54
        %p226 = pneg %p51
        %p227 = pneg %p75
        %p228 = pneg %p72
        %p229 = pneg %p96
        %p230 = pneg %p93
        %p231 = pneg %p117
        %p232 = pneg %p114
        %p233 = pneg %p138
        %p234 = pneg %p135
        %p235 = pneg %p166
        %p236 = pneg %p163
        %s237 = sand.u32 %s153, 1
        %s238 = scalar_lea.sflag [#allocation4], %s237
        %s239 = sand.u32 %s153, 1
        %s240 = smul.addr %s239, 128
        %s241 = scalar_lea.vmem [#allocation3], %s240
        %p242 = scmp.lt.s32.totalorder %s23, 1
        %s243 = scalar_select %p242, %s23, 1
        %p244 = scmp.lt.s32.totalorder %s24, 1
        %s245 = scalar_select %p244, %s24, 1
        %s246 = smul.addr %s245, 36
        %s247 = smul.addr %s243, 72
        %s248 = sadd.s32 %s246, %s247
        %s249 = smul.addr %s248, 4
        %s250 = scalar_lea.vmem %s0, %s249
        %s251 = smul.u32 8, %s24
        %v253 = vld [vmem:[%s250] sm:$0xf]
        %v254 = vld [vmem:[%s250 + $0x4] sm:$0xf]
        %v255 = vld [vmem:[%s250 + $0xc] sm:$0xf]
        %v256 = vld [vmem:[%s250 + $0x10] sm:$0xf]
        %v257 = vld [vmem:[%s250 + $0x18] sm:$0xf]
        %v258 = vld [vmem:[%s250 + $0x1c] sm:$0xf]
        %v259 = vld [vmem:[%s250 + $0x24] sm:$0xf]
        %v260 = vld [vmem:[%s250 + $0x28] sm:$0xf]
        %v261 = vld [vmem:[%s250 + $0x30] sm:$0xf]
        %v262 = vld [vmem:[%s250 + $0x34] sm:$0xf]
        %v263 = vld [vmem:[%s250 + $0x3c] sm:$0xf]
        %v264 = vld [vmem:[%s250 + $0x40] sm:$0xf]
        %v265 = vld [vmem:[%s250 + $0x48] sm:$0xf]
        %v266 = vld [vmem:[%s250 + $0x4c] sm:$0xf]
        %v267 = vld [vmem:[%s250 + $0x54] sm:$0xf]
        %v268 = vld [vmem:[%s250 + $0x58] sm:$0xf]
        %v269 = vld [vmem:[%s250 + $0x60] sm:$0xf]
        %v270 = vld [vmem:[%s250 + $0x64] sm:$0xf]
        %v271 = vld [vmem:[%s250 + $0x6c] sm:$0xf]
        %v272 = vld [vmem:[%s250 + $0x70] sm:$0xf]
        %v273 = vld [vmem:[%s1] sm:$0x3]
        %v274 = vld [vmem:[%s250 + $0x8] sm:$0x1]
        %v275 = vld [vmem:[%s250 + $0x14] sm:$0x1]
        %v276 = vld [vmem:[%s250 + $0x20] sm:$0x1]
        %v277 = vld [vmem:[%s250 + $0x2c] sm:$0x1]
        %v278 = vld [vmem:[%s250 + $0x38] sm:$0x1]
        %v279 = vld [vmem:[%s250 + $0x44] sm:$0x1]
        %v280 = vld [vmem:[%s250 + $0x50] sm:$0x1]
        %v281 = vld [vmem:[%s250 + $0x5c] sm:$0x1]
        %v282 = vld [vmem:[%s250 + $0x68] sm:$0x1]
        %v283 = vld [vmem:[%s250 + $0x74] sm:$0x1]
        %vm284 = vsmask.f32 3328
        %vm285 = vsmask.f32 7440
        %vm286 = vmor %vm284, %vm285
        %v288 = vshrl.u32 %v253, 16
        %v290 = vrot.slane %v288, 4
        %v291 = vshll.u32 %v253, 16
        %v293 = vrot.slane %v291, 5
        %v294 = vor.u32 %v290, %v293
        %v295 = vrot.slane %v294, 4
        %v297 = vshll.u32 %v254, 16
        %v299 = vrot.slane %v297, 5
        %v300 = vsel %vm286, %v295, %v299
        %v301 = vshrl.u32 %v254, 16
        %v303 = vrot.slane %v301, 4
        %v304 = vor.u32 %v303, %v299
        %v305 = vrot.slane %v304, 4
        %v307 = vshll.u32 %v274, 16
        %v309 = vrot.slane %v307, 5
        %v310 = vsel %vm286, %v305, %v309
        %v312 = vshrl.u32 %v255, 16
        %v314 = vrot.slane %v312, 4
        %v315 = vshll.u32 %v255, 16
        %v317 = vrot.slane %v315, 5
        %v318 = vor.u32 %v314, %v317
        %v319 = vrot.slane %v318, 4
        %v321 = vshll.u32 %v256, 16
        %v323 = vrot.slane %v321, 5
        %v324 = vsel %vm286, %v319, %v323
        %v325 = vshrl.u32 %v256, 16
        %v327 = vrot.slane %v325, 4
        %v328 = vor.u32 %v327, %v323
        %v329 = vrot.slane %v328, 4
        %v331 = vshll.u32 %v275, 16
        %v333 = vrot.slane %v331, 5
        %v334 = vsel %vm286, %v329, %v333
        %v336 = vshrl.u32 %v257, 16
        %v338 = vrot.slane %v336, 4
        %v339 = vshll.u32 %v257, 16
        %v341 = vrot.slane %v339, 5
        %v342 = vor.u32 %v338, %v341
        %v343 = vrot.slane %v342, 4
        %v345 = vshll.u32 %v258, 16
        %v347 = vrot.slane %v345, 5
        %v348 = vsel %vm286, %v343, %v347
        %v349 = vshrl.u32 %v258, 16
        %v351 = vrot.slane %v349, 4
        %v352 = vor.u32 %v351, %v347
        %v353 = vrot.slane %v352, 4
        %v355 = vshll.u32 %v276, 16
        %v357 = vrot.slane %v355, 5
        %v358 = vsel %vm286, %v353, %v357
        %v360 = vshrl.u32 %v259, 16
        %v362 = vrot.slane %v360, 4
        %v363 = vshll.u32 %v259, 16
        %v365 = vrot.slane %v363, 5
        %v366 = vor.u32 %v362, %v365
        %v367 = vrot.slane %v366, 4
        %v369 = vshll.u32 %v260, 16
        %v371 = vrot.slane %v369, 5
        %v372 = vsel %vm286, %v367, %v371
        %v373 = vshrl.u32 %v260, 16
        %v375 = vrot.slane %v373, 4
        %v376 = vor.u32 %v375, %v371
        %v377 = vrot.slane %v376, 4
        %v379 = vshll.u32 %v277, 16
        %v381 = vrot.slane %v379, 5
        %v382 = vsel %vm286, %v377, %v381
        %v384 = vshrl.u32 %v261, 16
        %v386 = vrot.slane %v384, 4
        %v387 = vshll.u32 %v261, 16
        %v389 = vrot.slane %v387, 5
        %v390 = vor.u32 %v386, %v389
        %v391 = vrot.slane %v390, 4
        %v393 = vshll.u32 %v262, 16
        %v395 = vrot.slane %v393, 5
        %v396 = vsel %vm286, %v391, %v395
        %v397 = vshrl.u32 %v262, 16
        %v399 = vrot.slane %v397, 4
        %v400 = vor.u32 %v399, %v395
        %v401 = vrot.slane %v400, 4
        %v403 = vshll.u32 %v278, 16
        %v405 = vrot.slane %v403, 5
        %v406 = vsel %vm286, %v401, %v405
        %v408 = vshrl.u32 %v263, 16
        %v410 = vrot.slane %v408, 4
        %v411 = vshll.u32 %v263, 16
        %v413 = vrot.slane %v411, 5
        %v414 = vor.u32 %v410, %v413
        %v415 = vrot.slane %v414, 4
        %v417 = vshll.u32 %v264, 16
        %v419 = vrot.slane %v417, 5
        %v420 = vsel %vm286, %v415, %v419
        %v421 = vshrl.u32 %v264, 16
        %v423 = vrot.slane %v421, 4
        %v424 = vor.u32 %v423, %v419
        %v425 = vrot.slane %v424, 4
        %v427 = vshll.u32 %v279, 16
        %v429 = vrot.slane %v427, 5
        %v430 = vsel %vm286, %v425, %v429
        %v432 = vshrl.u32 %v265, 16
        %v434 = vrot.slane %v432, 4
        %v435 = vshll.u32 %v265, 16
        %v437 = vrot.slane %v435, 5
        %v438 = vor.u32 %v434, %v437
        %v439 = vrot.slane %v438, 4
        %v441 = vshll.u32 %v266, 16
        %v443 = vrot.slane %v441, 5
        %v444 = vsel %vm286, %v439, %v443
        %v445 = vshrl.u32 %v266, 16
        %v447 = vrot.slane %v445, 4
        %v448 = vor.u32 %v447, %v443
        %v449 = vrot.slane %v448, 4
        %v451 = vshll.u32 %v280, 16
        %v453 = vrot.slane %v451, 5
        %v454 = vsel %vm286, %v449, %v453
        %v456 = vshrl.u32 %v267, 16
        %v458 = vrot.slane %v456, 4
        %v459 = vshll.u32 %v267, 16
        %v461 = vrot.slane %v459, 5
        %v462 = vor.u32 %v458, %v461
        %v463 = vrot.slane %v462, 4
        %v465 = vshll.u32 %v268, 16
        %v467 = vrot.slane %v465, 5
        %v468 = vsel %vm286, %v463, %v467
        %v469 = vshrl.u32 %v268, 16
        %v471 = vrot.slane %v469, 4
        %v472 = vor.u32 %v471, %v467
        %v473 = vrot.slane %v472, 4
        %v475 = vshll.u32 %v281, 16
        %v477 = vrot.slane %v475, 5
        %v478 = vsel %vm286, %v473, %v477
        %v480 = vshrl.u32 %v269, 16
        %v482 = vrot.slane %v480, 4
        %v483 = vshll.u32 %v269, 16
        %v485 = vrot.slane %v483, 5
        %v486 = vor.u32 %v482, %v485
        %v487 = vrot.slane %v486, 4
        %v489 = vshll.u32 %v270, 16
        %v491 = vrot.slane %v489, 5
        %v492 = vsel %vm286, %v487, %v491
        %v493 = vshrl.u32 %v270, 16
        %v495 = vrot.slane %v493, 4
        %v496 = vor.u32 %v495, %v491
        %v497 = vrot.slane %v496, 4
        %v499 = vshll.u32 %v282, 16
        %v501 = vrot.slane %v499, 5
        %v502 = vsel %vm286, %v497, %v501
        %v504 = vshrl.u32 %v271, 16
        %v506 = vrot.slane %v504, 4
        %v507 = vshll.u32 %v271, 16
        %v509 = vrot.slane %v507, 5
        %v510 = vor.u32 %v506, %v509
        %v511 = vrot.slane %v510, 4
        %v513 = vshll.u32 %v272, 16
        %v515 = vrot.slane %v513, 5
        %v516 = vsel %vm286, %v511, %v515
        %v517 = vshrl.u32 %v272, 16
        %v519 = vrot.slane %v517, 4
        %v520 = vor.u32 %v519, %v515
        %v521 = vrot.slane %v520, 4
        %v523 = vshll.u32 %v283, 16
        %v525 = vrot.slane %v523, 5
        %v526 = vsel %vm286, %v521, %v525
        %s527 = scalar_lea.vmem %s1, 2
        %v528 = vld [vmem:[%s527] sm:$0x3]
        %v529 = vunpack.c.l.b16 %v300
        %v530 = vunpack.c.l.b16 %v310
        %v531 = vunpack.c.l.b16 %v324
        %v532 = vunpack.c.l.b16 %v334
        %v533 = vunpack.c.l.b16 %v348
        %v534 = vunpack.c.l.b16 %v358
        %v535 = vunpack.c.l.b16 %v372
        %v536 = vunpack.c.l.b16 %v382
        %v537 = vunpack.c.l.b16 %v396
        %v538 = vunpack.c.l.b16 %v406
        %v539 = vunpack.c.l.b16 %v420
        %v540 = vunpack.c.l.b16 %v430
        %v541 = vunpack.c.l.b16 %v444
        %v542 = vunpack.c.l.b16 %v454
        %v543 = vunpack.c.l.b16 %v468
        %v544 = vunpack.c.l.b16 %v478
        %v545 = vunpack.c.l.b16 %v492
        %v546 = vunpack.c.l.b16 %v502
        %v547 = vunpack.c.l.b16 %v516
        %v548 = vunpack.c.l.b16 %v526
        %v549 = vpack.c.b16 %v530, %v529
        %v550 = vpack.c.b16 %v532, %v531
        %v551 = vpack.c.b16 %v534, %v533
        %v552 = vpack.c.b16 %v536, %v535
        %v553 = vpack.c.b16 %v538, %v537
        %v554 = vpack.c.b16 %v540, %v539
        %v555 = vpack.c.b16 %v542, %v541
        %v556 = vpack.c.b16 %v544, %v543
        %v557 = vpack.c.b16 %v546, %v545
        %v558 = vpack.c.b16 %v548, %v547
        %vm559 = vcmask 31744
        %v561 = vsel %vm559, %v549, 0
        %v564 = vsel %vm559, %v550, 0
        %v567 = vsel %vm559, %v551, 0
        %v570 = vsel %vm559, %v552, 0
        %v573 = vsel %vm559, %v553, 0
        %v576 = vsel %vm559, %v554, 0
        %v579 = vsel %vm559, %v555, 0
        %v582 = vsel %vm559, %v556, 0
        %v585 = vsel %vm559, %v557, 0
        %v588 = vsel %vm559, %v558, 0
        %vm590 = vcmask 1041408
        %v592 = vsel %vm590, %v528, 0
        %594 = vmatprep.subr.bf16.mxu0 0
        %595 = vmatpush1.bf16.msra.mxu0 %v592
        %596 = vmatprep.subr.bf16.mxu0 0
        %597 = vmatpush1.bf16.msra.mxu0 0
        %598 = vmatprep.subr.bf16.mxu0 0
        %599 = vmatpush1.bf16.msra.mxu0 0
        %600 = vmatprep.subr.bf16.mxu0 0
        %601 = vmatpush1.bf16.msra.mxu0 0
        %602 = vmatprep.subr.bf16.mxu0 0
        %603 = vmatpush1.bf16.msra.mxu0 0
        %604 = vmatprep.subr.bf16.mxu0 0
        %605 = vmatpush1.bf16.msra.mxu0 0
        %606 = vmatprep.subr.bf16.mxu0 0
        %607 = vmatpush1.bf16.msra.mxu0 0
        %608 = vmatprep.subr.bf16.mxu0 0
        %609 = vmatpush1.bf16.msra.mxu0 0
        %610 = vmatprep.subr.bf16.mxu0 0
        %611 = vmatpush1.bf16.msra.mxu0 0
        %612 = vmatprep.subr.bf16.mxu0 0
        %613 = vmatpush1.bf16.msra.mxu0 0
        %614 = vmatprep.subr.bf16.mxu0 0
        %615 = vmatpush1.bf16.msra.mxu0 0
        %616 = vmatprep.subr.bf16.mxu0 0
        %617 = vmatpush1.bf16.msra.mxu0 0
        %618 = vmatprep.subr.bf16.mxu0 0
        %619 = vmatpush1.bf16.msra.mxu0 0
        %620 = vmatprep.subr.bf16.mxu0 0
        %621 = vmatpush1.bf16.msra.mxu0 0
        %622 = vmatprep.subr.bf16.mxu0 0
        %623 = vmatpush1.bf16.msra.mxu0 0
        %624 = vmatprep.subr.bf16.mxu0 0
        %625 = vmatpush1.bf16.msra.mxu0 0
        %626 = vmatprep.mubr.bf16.mxu0 0
        %627 = vmatmul.mubr.bf16.gmra.mrb[0].mxu0 %v561
        %v628 = vpop.f32.mrb[0].mxu0
        %v629 = vadd.f32 0.0, %v628
        %v630 = vpop.f32.mrb[0].mxu0
        %v631 = vpop.f32.mrb[0].mxu0
        %v632 = vadd.f32 0.0, %v631
        %v633 = vpop.f32.mrb[0].mxu0
        %634 = vmatprep.mubr.bf16.mxu0 0
        %635 = vmatmul.mubr.bf16.gmra.mrb[0].mxu0 %v564
        %v636 = vpop.f32.mrb[0].mxu0
        %v637 = vadd.f32 0.0, %v636
        %v638 = vpop.f32.mrb[0].mxu0
        %v639 = vpop.f32.mrb[0].mxu0
        %v640 = vadd.f32 0.0, %v639
        %v641 = vpop.f32.mrb[0].mxu0
        %642 = vmatprep.mubr.bf16.mxu0 0
        %643 = vmatmul.mubr.bf16.gmra.mrb[0].mxu0 %v567
        %v644 = vpop.f32.mrb[0].mxu0
        %v645 = vadd.f32 0.0, %v644
        %v646 = vpop.f32.mrb[0].mxu0
        %v647 = vpop.f32.mrb[0].mxu0
        %v648 = vadd.f32 0.0, %v647
        %v649 = vpop.f32.mrb[0].mxu0
        %650 = vmatprep.mubr.bf16.mxu0 0
        %651 = vmatmul.mubr.bf16.gmra.mrb[0].mxu0 %v570
        %v652 = vpop.f32.mrb[0].mxu0
        %v653 = vadd.f32 0.0, %v652
        %v654 = vpop.f32.mrb[0].mxu0
        %v655 = vpop.f32.mrb[0].mxu0
        %v656 = vadd.f32 0.0, %v655
        %v657 = vpop.f32.mrb[0].mxu0
        %658 = vmatprep.mubr.bf16.mxu0 0
        %659 = vmatmul.mubr.bf16.gmra.mrb[0].mxu0 %v573
        %v660 = vpop.f32.mrb[0].mxu0
        %v661 = vadd.f32 0.0, %v660
        %v662 = vpop.f32.mrb[0].mxu0
        %v663 = vpop.f32.mrb[0].mxu0
        %v664 = vadd.f32 0.0, %v663
        %v665 = vpop.f32.mrb[0].mxu0
        %666 = vmatprep.mubr.bf16.mxu0 0
        %667 = vmatmul.mubr.bf16.gmra.mrb[0].mxu0 %v576
        %v668 = vpop.f32.mrb[0].mxu0
        %v669 = vadd.f32 0.0, %v668
        %v670 = vpop.f32.mrb[0].mxu0
        %v671 = vpop.f32.mrb[0].mxu0
        %v672 = vadd.f32 0.0, %v671
        %v673 = vpop.f32.mrb[0].mxu0
        %674 = vmatprep.mubr.bf16.mxu0 0
        %675 = vmatmul.mubr.bf16.gmra.mrb[0].mxu0 %v579
        %v676 = vpop.f32.mrb[0].mxu0
        %v677 = vadd.f32 0.0, %v676
        %v678 = vpop.f32.mrb[0].mxu0
        %v679 = vpop.f32.mrb[0].mxu0
        %v680 = vadd.f32 0.0, %v679
        %v681 = vpop.f32.mrb[0].mxu0
        %682 = vmatprep.mubr.bf16.mxu0 0
        %683 = vmatmul.mubr.bf16.gmra.mrb[0].mxu0 %v582
        %v684 = vpop.f32.mrb[0].mxu0
        %v685 = vadd.f32 0.0, %v684
        %v686 = vpop.f32.mrb[0].mxu0
        %v687 = vpop.f32.mrb[0].mxu0
        %v688 = vadd.f32 0.0, %v687
        %v689 = vpop.f32.mrb[0].mxu0
        %690 = vmatprep.mubr.bf16.mxu0 0
        %691 = vmatmul.mubr.bf16.gmra.mrb[0].mxu0 %v585
        %v692 = vpop.f32.mrb[0].mxu0
        %v693 = vadd.f32 0.0, %v692
        %v694 = vpop.f32.mrb[0].mxu0
        %v695 = vpop.f32.mrb[0].mxu0
        %v696 = vadd.f32 0.0, %v695
        %v697 = vpop.f32.mrb[0].mxu0
        %698 = vmatprep.mubr.bf16.mxu0 0
        %699 = vmatmul.mubr.bf16.gmra.mrb[0].mxu0 %v588
        %v700 = vpop.f32.mrb[0].mxu0
        %v701 = vadd.f32 0.0, %v700
        %v702 = vpop.f32.mrb[0].mxu0
        %v703 = vpop.f32.mrb[0].mxu0
        %v704 = vadd.f32 0.0, %v703
        %v705 = vpop.f32.mrb[0].mxu0
        %706 = vdwg.mxu0
        %v727 = vunpack.c.l.b16 %v253
        %v728 = vunpack.c.l.b16 %v254
        %v729 = vunpack.c.l.b16 %v255
        %v730 = vunpack.c.l.b16 %v256
        %v731 = vunpack.c.l.b16 %v257
        %v732 = vunpack.c.l.b16 %v258
        %v733 = vunpack.c.l.b16 %v259
        %v734 = vunpack.c.l.b16 %v260
        %v735 = vunpack.c.l.b16 %v261
        %v736 = vunpack.c.l.b16 %v262
        %v737 = vunpack.c.l.b16 %v263
        %v738 = vunpack.c.l.b16 %v264
        %v739 = vunpack.c.l.b16 %v265
        %v740 = vunpack.c.l.b16 %v266
        %v741 = vunpack.c.l.b16 %v267
        %v742 = vunpack.c.l.b16 %v268
        %v743 = vunpack.c.l.b16 %v269
        %v744 = vunpack.c.l.b16 %v270
        %v745 = vunpack.c.l.b16 %v271
        %v746 = vunpack.c.l.b16 %v272
        %v747 = vpack.c.b16 %v728, %v727
        %v748 = vpack.c.b16 %v730, %v729
        %v749 = vpack.c.b16 %v732, %v731
        %v750 = vpack.c.b16 %v734, %v733
        %v751 = vpack.c.b16 %v736, %v735
        %v752 = vpack.c.b16 %v738, %v737
        %v753 = vpack.c.b16 %v740, %v739
        %v754 = vpack.c.b16 %v742, %v741
        %v755 = vpack.c.b16 %v744, %v743
        %v756 = vpack.c.b16 %v746, %v745
        %v758 = vsel %vm559, %v747, 0
        %v761 = vsel %vm559, %v748, 0
        %v764 = vsel %vm559, %v749, 0
        %v767 = vsel %vm559, %v750, 0
        %v770 = vsel %vm559, %v751, 0
        %v773 = vsel %vm559, %v752, 0
        %v776 = vsel %vm559, %v753, 0
        %v779 = vsel %vm559, %v754, 0
        %v782 = vsel %vm559, %v755, 0
        %v785 = vsel %vm559, %v756, 0
        %v788 = vsel %vm590, %v273, 0
        %790 = vmatprep.subr.bf16.mxu0 0
        %791 = vmatpush1.bf16.msra.mxu0 %v788
        %792 = vmatprep.subr.bf16.mxu0 0
        %793 = vmatpush1.bf16.msra.mxu0 0
        %794 = vmatprep.subr.bf16.mxu0 0
        %795 = vmatpush1.bf16.msra.mxu0 0
        %796 = vmatprep.subr.bf16.mxu0 0
        %797 = vmatpush1.bf16.msra.mxu0 0
        %798 = vmatprep.subr.bf16.mxu0 0
        %799 = vmatpush1.bf16.msra.mxu0 0
        %800 = vmatprep.subr.bf16.mxu0 0
        %801 = vmatpush1.bf16.msra.mxu0 0
        %802 = vmatprep.subr.bf16.mxu0 0
        %803 = vmatpush1.bf16.msra.mxu0 0
        %804 = vmatprep.subr.bf16.mxu0 0
        %805 = vmatpush1.bf16.msra.mxu0 0
        %806 = vmatprep.subr.bf16.mxu0 0
        %807 = vmatpush1.bf16.msra.mxu0 0
        %808 = vmatprep.subr.bf16.mxu0 0
        %809 = vmatpush1.bf16.msra.mxu0 0
        %810 = vmatprep.subr.bf16.mxu0 0
        %811 = vmatpush1.bf16.msra.mxu0 0
        %812 = vmatprep.subr.bf16.mxu0 0
        %813 = vmatpush1.bf16.msra.mxu0 0
        %814 = vmatprep.subr.bf16.mxu0 0
        %815 = vmatpush1.bf16.msra.mxu0 0
        %816 = vmatprep.subr.bf16.mxu0 0
        %817 = vmatpush1.bf16.msra.mxu0 0
        %818 = vmatprep.subr.bf16.mxu0 0
        %819 = vmatpush1.bf16.msra.mxu0 0
        %820 = vmatprep.subr.bf16.mxu0 0
        %821 = vmatpush1.bf16.msra.mxu0 0
        %822 = vmatprep.mubr.bf16.mxu0 0
        %823 = vmatmul.mubr.bf16.gmra.mrb[0].mxu0 %v758
        %v824 = vpop.f32.mrb[0].mxu0
        %v825 = vadd.f32 %v629, %v824
        %v826 = vpop.f32.mrb[0].mxu0
        %v827 = vpop.f32.mrb[0].mxu0
        %v828 = vadd.f32 %v632, %v827
        %v829 = vpop.f32.mrb[0].mxu0
        %830 = vmatprep.mubr.bf16.mxu0 0
        %831 = vmatmul.mubr.bf16.gmra.mrb[0].mxu0 %v761
        %v832 = vpop.f32.mrb[0].mxu0
        %v833 = vadd.f32 %v637, %v832
        %v834 = vpop.f32.mrb[0].mxu0
        %v835 = vpop.f32.mrb[0].mxu0
        %v836 = vadd.f32 %v640, %v835
        %v837 = vpop.f32.mrb[0].mxu0
        %838 = vmatprep.mubr.bf16.mxu0 0
        %839 = vmatmul.mubr.bf16.gmra.mrb[0].mxu0 %v764
        %v840 = vpop.f32.mrb[0].mxu0
        %v841 = vadd.f32 %v645, %v840
        %v842 = vpop.f32.mrb[0].mxu0
        %v843 = vpop.f32.mrb[0].mxu0
        %v844 = vadd.f32 %v648, %v843
        %v845 = vpop.f32.mrb[0].mxu0
        %846 = vmatprep.mubr.bf16.mxu0 0
        %847 = vmatmul.mubr.bf16.gmra.mrb[0].mxu0 %v767
        %v848 = vpop.f32.mrb[0].mxu0
        %v849 = vadd.f32 %v653, %v848
        %v850 = vpop.f32.mrb[0].mxu0
        %v851 = vpop.f32.mrb[0].mxu0
        %v852 = vadd.f32 %v656, %v851
        %v853 = vpop.f32.mrb[0].mxu0
        %854 = vmatprep.mubr.bf16.mxu0 0
        %855 = vmatmul.mubr.bf16.gmra.mrb[0].mxu0 %v770
        %v856 = vpop.f32.mrb[0].mxu0
        %v857 = vadd.f32 %v661, %v856
        %v858 = vpop.f32.mrb[0].mxu0
        %v859 = vpop.f32.mrb[0].mxu0
        %v860 = vadd.f32 %v664, %v859
        %v861 = vpop.f32.mrb[0].mxu0
        %862 = vmatprep.mubr.bf16.mxu0 0
        %863 = vmatmul.mubr.bf16.gmra.mrb[0].mxu0 %v773
        %v864 = vpop.f32.mrb[0].mxu0
        %v865 = vadd.f32 %v669, %v864
        %v866 = vpop.f32.mrb[0].mxu0
        %v867 = vpop.f32.mrb[0].mxu0
        %v868 = vadd.f32 %v672, %v867
        %v869 = vpop.f32.mrb[0].mxu0
        %870 = vmatprep.mubr.bf16.mxu0 0
        %871 = vmatmul.mubr.bf16.gmra.mrb[0].mxu0 %v776
        %v872 = vpop.f32.mrb[0].mxu0
        %v873 = vadd.f32 %v677, %v872
        %v874 = vpop.f32.mrb[0].mxu0
        %v875 = vpop.f32.mrb[0].mxu0
        %v876 = vadd.f32 %v680, %v875
        %v877 = vpop.f32.mrb[0].mxu0
        %878 = vmatprep.mubr.bf16.mxu0 0
        %879 = vmatmul.mubr.bf16.gmra.mrb[0].mxu0 %v779
        %v880 = vpop.f32.mrb[0].mxu0
        %v881 = vadd.f32 %v685, %v880
        %v882 = vpop.f32.mrb[0].mxu0
        %v883 = vpop.f32.mrb[0].mxu0
        %v884 = vadd.f32 %v688, %v883
        %v885 = vpop.f32.mrb[0].mxu0
        %886 = vmatprep.mubr.bf16.mxu0 0
        %887 = vmatmul.mubr.bf16.gmra.mrb[0].mxu0 %v782
        %v888 = vpop.f32.mrb[0].mxu0
        %v889 = vadd.f32 %v693, %v888
        %v890 = vpop.f32.mrb[0].mxu0
        %v891 = vpop.f32.mrb[0].mxu0
        %v892 = vadd.f32 %v696, %v891
        %v893 = vpop.f32.mrb[0].mxu0
        %894 = vmatprep.mubr.bf16.mxu0 0
        %895 = vmatmul.mubr.bf16.gmra.mrb[0].mxu0 %v785
        %v896 = vpop.f32.mrb[0].mxu0
        %v897 = vadd.f32 %v701, %v896
        %v898 = vpop.f32.mrb[0].mxu0
        %v899 = vpop.f32.mrb[0].mxu0
        %v900 = vadd.f32 %v704, %v899
        %v901 = vpop.f32.mrb[0].mxu0
        %902 = vdwg.mxu0
        %v903 = vld [vmem:[%s250] sm:$0xe]
        %v904 = vld [vmem:[%s250 + $0xc] sm:$0xe]
        %v905 = vld [vmem:[%s250 + $0x18] sm:$0xe]
        %v906 = vld [vmem:[%s250 + $0x24] sm:$0xe]
        %v907 = vld [vmem:[%s250 + $0x30] sm:$0xe]
        %v908 = vld [vmem:[%s250 + $0x3c] sm:$0xe]
        %v909 = vld [vmem:[%s250 + $0x48] sm:$0xe]
        %v910 = vld [vmem:[%s250 + $0x54] sm:$0xe]
        %v911 = vld [vmem:[%s250 + $0x60] sm:$0xe]
        %v912 = vld [vmem:[%s250 + $0x6c] sm:$0xe]
        %vm933 = vcmask 1042432
        %vm934 = vcmask 1046532
        %vm935 = vmor %vm933, %vm934
        %v936 = vrot.slane %v903, 5
        %v937 = vrot.slane %v936, 4
        %v938 = vrot.slane %v254, 5
        %v939 = vsel %vm935, %v937, %v938
        %v940 = vrot.slane %v938, 4
        %v941 = vrot.slane %v274, 5
        %v942 = vsel %vm935, %v940, %v941
        %v943 = vrot.slane %v904, 5
        %v944 = vrot.slane %v943, 4
        %v945 = vrot.slane %v256, 5
        %v946 = vsel %vm935, %v944, %v945
        %v947 = vrot.slane %v945, 4
        %v948 = vrot.slane %v275, 5
        %v949 = vsel %vm935, %v947, %v948
        %v950 = vrot.slane %v905, 5
        %v951 = vrot.slane %v950, 4
        %v952 = vrot.slane %v258, 5
        %v953 = vsel %vm935, %v951, %v952
        %v954 = vrot.slane %v952, 4
        %v955 = vrot.slane %v276, 5
        %v956 = vsel %vm935, %v954, %v955
        %v957 = vrot.slane %v906, 5
        %v958 = vrot.slane %v957, 4
        %v959 = vrot.slane %v260, 5
        %v960 = vsel %vm935, %v958, %v959
        %v961 = vrot.slane %v959, 4
        %v962 = vrot.slane %v277, 5
        %v963 = vsel %vm935, %v961, %v962
        %v964 = vrot.slane %v907, 5
        %v965 = vrot.slane %v964, 4
        %v966 = vrot.slane %v262, 5
        %v967 = vsel %vm935, %v965, %v966
        %v968 = vrot.slane %v966, 4
        %v969 = vrot.slane %v278, 5
        %v970 = vsel %vm935, %v968, %v969
        %v971 = vrot.slane %v908, 5
        %v972 = vrot.slane %v971, 4
        %v973 = vrot.slane %v264, 5
        %v974 = vsel %vm935, %v972, %v973
        %v975 = vrot.slane %v973, 4
        %v976 = vrot.slane %v279, 5
        %v977 = vsel %vm935, %v975, %v976
        %v978 = vrot.slane %v909, 5
        %v979 = vrot.slane %v978, 4
        %v980 = vrot.slane %v266, 5
        %v981 = vsel %vm935, %v979, %v980
        %v982 = vrot.slane %v980, 4
        %v983 = vrot.slane %v280, 5
        %v984 = vsel %vm935, %v982, %v983
        %v985 = vrot.slane %v910, 5
        %v986 = vrot.slane %v985, 4
        %v987 = vrot.slane %v268, 5
        %v988 = vsel %vm935, %v986, %v987
        %v989 = vrot.slane %v987, 4
        %v990 = vrot.slane %v281, 5
        %v991 = vsel %vm935, %v989, %v990
        %v992 = vrot.slane %v911, 5
        %v993 = vrot.slane %v992, 4
        %v994 = vrot.slane %v270, 5
        %v995 = vsel %vm935, %v993, %v994
        %v996 = vrot.slane %v994, 4
        %v997 = vrot.slane %v282, 5
        %v998 = vsel %vm935, %v996, %v997
        %v999 = vrot.slane %v912, 5
        %v1000 = vrot.slane %v999, 4
        %v1001 = vrot.slane %v272, 5
        %v1002 = vsel %vm935, %v1000, %v1001
        %v1003 = vrot.slane %v1001, 4
        %v1004 = vrot.slane %v283, 5
        %v1005 = vsel %vm935, %v1003, %v1004
        %s1006 = scalar_lea.vmem %s1, 4
        %v1007 = vld [vmem:[%s1006] sm:$0x3]
        %v1008 = vunpack.c.l.b16 %v939
        %v1009 = vunpack.c.l.b16 %v942
        %v1010 = vunpack.c.l.b16 %v946
        %v1011 = vunpack.c.l.b16 %v949
        %v1012 = vunpack.c.l.b16 %v953
        %v1013 = vunpack.c.l.b16 %v956
        %v1014 = vunpack.c.l.b16 %v960
        %v1015 = vunpack.c.l.b16 %v963
        %v1016 = vunpack.c.l.b16 %v967
        %v1017 = vunpack.c.l.b16 %v970
        %v1018 = vunpack.c.l.b16 %v974
        %v1019 = vunpack.c.l.b16 %v977
        %v1020 = vunpack.c.l.b16 %v981
        %v1021 = vunpack.c.l.b16 %v984
        %v1022 = vunpack.c.l.b16 %v988
        %v1023 = vunpack.c.l.b16 %v991
        %v1024 = vunpack.c.l.b16 %v995
        %v1025 = vunpack.c.l.b16 %v998
        %v1026 = vunpack.c.l.b16 %v1002
        %v1027 = vunpack.c.l.b16 %v1005
        %v1028 = vpack.c.b16 %v1009, %v1008
        %v1029 = vpack.c.b16 %v1011, %v1010
        %v1030 = vpack.c.b16 %v1013, %v1012
        %v1031 = vpack.c.b16 %v1015, %v1014
        %v1032 = vpack.c.b16 %v1017, %v1016
        %v1033 = vpack.c.b16 %v1019, %v1018
        %v1034 = vpack.c.b16 %v1021, %v1020
        %v1035 = vpack.c.b16 %v1023, %v1022
        %v1036 = vpack.c.b16 %v1025, %v1024
        %v1037 = vpack.c.b16 %v1027, %v1026
        %v1039 = vsel %vm559, %v1028, 0
        %v1042 = vsel %vm559, %v1029, 0
        %v1045 = vsel %vm559, %v1030, 0
        %v1048 = vsel %vm559, %v1031, 0
        %v1051 = vsel %vm559, %v1032, 0
        %v1054 = vsel %vm559, %v1033, 0
        %v1057 = vsel %vm559, %v1034, 0
        %v1060 = vsel %vm559, %v1035, 0
        %v1063 = vsel %vm559, %v1036, 0
        %v1066 = vsel %vm559, %v1037, 0
        %v1069 = vsel %vm590, %v1007, 0
        %1071 = vmatprep.subr.bf16.mxu0 0
        %1072 = vmatpush1.bf16.msra.mxu0 %v1069
        %1073 = vmatprep.subr.bf16.mxu0 0
        %1074 = vmatpush1.bf16.msra.mxu0 0
        %1075 = vmatprep.subr.bf16.mxu0 0
        %1076 = vmatpush1.bf16.msra.mxu0 0
        %1077 = vmatprep.subr.bf16.mxu0 0
        %1078 = vmatpush1.bf16.msra.mxu0 0
        %1079 = vmatprep.subr.bf16.mxu0 0
        %1080 = vmatpush1.bf16.msra.mxu0 0
        %1081 = vmatprep.subr.bf16.mxu0 0
        %1082 = vmatpush1.bf16.msra.mxu0 0
        %1083 = vmatprep.subr.bf16.mxu0 0
        %1084 = vmatpush1.bf16.msra.mxu0 0
        %1085 = vmatprep.subr.bf16.mxu0 0
        %1086 = vmatpush1.bf16.msra.mxu0 0
        %1087 = vmatprep.subr.bf16.mxu0 0
        %1088 = vmatpush1.bf16.msra.mxu0 0
        %1089 = vmatprep.subr.bf16.mxu0 0
        %1090 = vmatpush1.bf16.msra.mxu0 0
        %1091 = vmatprep.subr.bf16.mxu0 0
        %1092 = vmatpush1.bf16.msra.mxu0 0
        %1093 = vmatprep.subr.bf16.mxu0 0
        %1094 = vmatpush1.bf16.msra.mxu0 0
        %1095 = vmatprep.subr.bf16.mxu0 0
        %1096 = vmatpush1.bf16.msra.mxu0 0
        %1097 = vmatprep.subr.bf16.mxu0 0
        %1098 = vmatpush1.bf16.msra.mxu0 0
        %1099 = vmatprep.subr.bf16.mxu0 0
        %1100 = vmatpush1.bf16.msra.mxu0 0
        %1101 = vmatprep.subr.bf16.mxu0 0
        %1102 = vmatpush1.bf16.msra.mxu0 0
        %1103 = vmatprep.mubr.bf16.mxu0 0
        %1104 = vmatmul.mubr.bf16.gmra.mrb[0].mxu0 %v1039
        %v1105 = vpop.f32.mrb[0].mxu0
        %v1106 = vadd.f32 0.0, %v1105
        %v1107 = vpop.f32.mrb[0].mxu0
        %v1108 = vpop.f32.mrb[0].mxu0
        %v1109 = vadd.f32 0.0, %v1108
        %v1110 = vpop.f32.mrb[0].mxu0
        %1111 = vmatprep.mubr.bf16.mxu0 0
        %1112 = vmatmul.mubr.bf16.gmra.mrb[0].mxu0 %v1042
        %v1113 = vpop.f32.mrb[0].mxu0
        %v1114 = vadd.f32 0.0, %v1113
        %v1115 = vpop.f32.mrb[0].mxu0
        %v1116 = vpop.f32.mrb[0].mxu0
        %v1117 = vadd.f32 0.0, %v1116
        %v1118 = vpop.f32.mrb[0].mxu0
        %1119 = vmatprep.mubr.bf16.mxu0 0
        %1120 = vmatmul.mubr.bf16.gmra.mrb[0].mxu0 %v1045
        %v1121 = vpop.f32.mrb[0].mxu0
        %v1122 = vadd.f32 0.0, %v1121
        %v1123 = vpop.f32.mrb[0].mxu0
        %v1124 = vpop.f32.mrb[0].mxu0
        %v1125 = vadd.f32 0.0, %v1124
        %v1126 = vpop.f32.mrb[0].mxu0
        %1127 = vmatprep.mubr.bf16.mxu0 0
        %1128 = vmatmul.mubr.bf16.gmra.mrb[0].mxu0 %v1048
        %v1129 = vpop.f32.mrb[0].mxu0
        %v1130 = vadd.f32 0.0, %v1129
        %v1131 = vpop.f32.mrb[0].mxu0
        %v1132 = vpop.f32.mrb[0].mxu0
        %v1133 = vadd.f32 0.0, %v1132
        %v1134 = vpop.f32.mrb[0].mxu0
        %1135 = vmatprep.mubr.bf16.mxu0 0
        %1136 = vmatmul.mubr.bf16.gmra.mrb[0].mxu0 %v1051
        %v1137 = vpop.f32.mrb[0].mxu0
        %v1138 = vadd.f32 0.0, %v1137
        %v1139 = vpop.f32.mrb[0].mxu0
        %v1140 = vpop.f32.mrb[0].mxu0
        %v1141 = vadd.f32 0.0, %v1140
        %v1142 = vpop.f32.mrb[0].mxu0
        %1143 = vmatprep.mubr.bf16.mxu0 0
        %1144 = vmatmul.mubr.bf16.gmra.mrb[0].mxu0 %v1054
        %v1145 = vpop.f32.mrb[0].mxu0
        %v1146 = vadd.f32 0.0, %v1145
        %v1147 = vpop.f32.mrb[0].mxu0
        %v1148 = vpop.f32.mrb[0].mxu0
        %v1149 = vadd.f32 0.0, %v1148
        %v1150 = vpop.f32.mrb[0].mxu0
        %1151 = vmatprep.mubr.bf16.mxu0 0
        %1152 = vmatmul.mubr.bf16.gmra.mrb[0].mxu0 %v1057
        %v1153 = vpop.f32.mrb[0].mxu0
        %v1154 = vadd.f32 0.0, %v1153
        %v1155 = vpop.f32.mrb[0].mxu0
        %v1156 = vpop.f32.mrb[0].mxu0
        %v1157 = vadd.f32 0.0, %v1156
        %v1158 = vpop.f32.mrb[0].mxu0
        %1159 = vmatprep.mubr.bf16.mxu0 0
        %1160 = vmatmul.mubr.bf16.gmra.mrb[0].mxu0 %v1060
        %v1161 = vpop.f32.mrb[0].mxu0
        %v1162 = vadd.f32 0.0, %v1161
        %v1163 = vpop.f32.mrb[0].mxu0
        %v1164 = vpop.f32.mrb[0].mxu0
        %v1165 = vadd.f32 0.0, %v1164
        %v1166 = vpop.f32.mrb[0].mxu0
        %1167 = vmatprep.mubr.bf16.mxu0 0
        %1168 = vmatmul.mubr.bf16.gmra.mrb[0].mxu0 %v1063
        %v1169 = vpop.f32.mrb[0].mxu0
        %v1170 = vadd.f32 0.0, %v1169
        %v1171 = vpop.f32.mrb[0].mxu0
        %v1172 = vpop.f32.mrb[0].mxu0
        %v1173 = vadd.f32 0.0, %v1172
        %v1174 = vpop.f32.mrb[0].mxu0
        %1175 = vmatprep.mubr.bf16.mxu0 0
        %1176 = vmatmul.mubr.bf16.gmra.mrb[0].mxu0 %v1066
        %v1177 = vpop.f32.mrb[0].mxu0
        %v1178 = vadd.f32 0.0, %v1177
        %v1179 = vpop.f32.mrb[0].mxu0
        %v1180 = vpop.f32.mrb[0].mxu0
        %v1181 = vadd.f32 0.0, %v1180
        %v1182 = vpop.f32.mrb[0].mxu0
        %1183 = vdwg.mxu0
        %v1184 = vadd.f32 %v825, %v1106
        %v1185 = vadd.f32 %v828, %v1109
        %v1186 = vadd.f32 %v833, %v1114
        %v1187 = vadd.f32 %v836, %v1117
        %v1188 = vadd.f32 %v841, %v1122
        %v1189 = vadd.f32 %v844, %v1125
        %v1190 = vadd.f32 %v849, %v1130
        %v1191 = vadd.f32 %v852, %v1133
        %v1192 = vadd.f32 %v857, %v1138
        %v1193 = vadd.f32 %v860, %v1141
        %v1194 = vadd.f32 %v865, %v1146
        %v1195 = vadd.f32 %v868, %v1149
        %v1196 = vadd.f32 %v873, %v1154
        %v1197 = vadd.f32 %v876, %v1157
        %v1198 = vadd.f32 %v881, %v1162
        %v1199 = vadd.f32 %v884, %v1165
        %v1200 = vadd.f32 %v889, %v1170
        %v1201 = vadd.f32 %v892, %v1173
        %v1202 = vadd.f32 %v897, %v1178
        %v1203 = vadd.f32 %v900, %v1181
        %s1204 = scalar_lea.vmem %s250, 12
        %v1205 = vld [vmem:[%s1204] sm:$0xf]
        %v1206 = vld [vmem:[%s1204 + $0x4] sm:$0xf]
        %v1207 = vld [vmem:[%s1204 + $0xc] sm:$0xf]
        %v1208 = vld [vmem:[%s1204 + $0x10] sm:$0xf]
        %v1209 = vld [vmem:[%s1204 + $0x18] sm:$0xf]
        %v1210 = vld [vmem:[%s1204 + $0x1c] sm:$0xf]
        %v1211 = vld [vmem:[%s1204 + $0x24] sm:$0xf]
        %v1212 = vld [vmem:[%s1204 + $0x28] sm:$0xf]
        %v1213 = vld [vmem:[%s1204 + $0x30] sm:$0xf]
        %v1214 = vld [vmem:[%s1204 + $0x34] sm:$0xf]
        %v1215 = vld [vmem:[%s1204 + $0x3c] sm:$0xf]
        %v1216 = vld [vmem:[%s1204 + $0x40] sm:$0xf]
        %v1217 = vld [vmem:[%s1204 + $0x48] sm:$0xf]
        %v1218 = vld [vmem:[%s1204 + $0x4c] sm:$0xf]
        %v1219 = vld [vmem:[%s1204 + $0x54] sm:$0xf]
        %v1220 = vld [vmem:[%s1204 + $0x58] sm:$0xf]
        %v1221 = vld [vmem:[%s1204 + $0x60] sm:$0xf]
        %v1222 = vld [vmem:[%s1204 + $0x64] sm:$0xf]
        %v1223 = vld [vmem:[%s1204 + $0x6c] sm:$0xf]
        %v1224 = vld [vmem:[%s1204 + $0x70] sm:$0xf]
        %s1225 = scalar_lea.vmem %s1, 6
        %v1226 = vld [vmem:[%s1225] sm:$0x3]
        %v1247 = vunpack.c.l.b16 %v1205
        %v1248 = vunpack.c.l.b16 %v1206
        %v1249 = vunpack.c.l.b16 %v1207
        %v1250 = vunpack.c.l.b16 %v1208
        %v1251 = vunpack.c.l.b16 %v1209
        %v1252 = vunpack.c.l.b16 %v1210
        %v1253 = vunpack.c.l.b16 %v1211
        %v1254 = vunpack.c.l.b16 %v1212
        %v1255 = vunpack.c.l.b16 %v1213
        %v1256 = vunpack.c.l.b16 %v1214
        %v1257 = vunpack.c.l.b16 %v1215
        %v1258 = vunpack.c.l.b16 %v1216
        %v1259 = vunpack.c.l.b16 %v1217
        %v1260 = vunpack.c.l.b16 %v1218
        %v1261 = vunpack.c.l.b16 %v1219
        %v1262 = vunpack.c.l.b16 %v1220
        %v1263 = vunpack.c.l.b16 %v1221
        %v1264 = vunpack.c.l.b16 %v1222
        %v1265 = vunpack.c.l.b16 %v1223
        %v1266 = vunpack.c.l.b16 %v1224
        %v1267 = vpack.c.b16 %v1248, %v1247
        %v1268 = vpack.c.b16 %v1250, %v1249
        %v1269 = vpack.c.b16 %v1252, %v1251
        %v1270 = vpack.c.b16 %v1254, %v1253
        %v1271 = vpack.c.b16 %v1256, %v1255
        %v1272 = vpack.c.b16 %v1258, %v1257
        %v1273 = vpack.c.b16 %v1260, %v1259
        %v1274 = vpack.c.b16 %v1262, %v1261
        %v1275 = vpack.c.b16 %v1264, %v1263
        %v1276 = vpack.c.b16 %v1266, %v1265
        %v1278 = vsel %vm559, %v1267, 0
        %v1281 = vsel %vm559, %v1268, 0
        %v1284 = vsel %vm559, %v1269, 0
        %v1287 = vsel %vm559, %v1270, 0
        %v1290 = vsel %vm559, %v1271, 0
        %v1293 = vsel %vm559, %v1272, 0
        %v1296 = vsel %vm559, %v1273, 0
        %v1299 = vsel %vm559, %v1274, 0
        %v1302 = vsel %vm559, %v1275, 0
        %v1305 = vsel %vm559, %v1276, 0
        %v1308 = vsel %vm590, %v1226, 0
        %1310 = vmatprep.subr.bf16.mxu0 0
        %1311 = vmatpush1.bf16.msra.mxu0 %v1308
        %1312 = vmatprep.subr.bf16.mxu0 0
        %1313 = vmatpush1.bf16.msra.mxu0 0
        %1314 = vmatprep.subr.bf16.mxu0 0
        %1315 = vmatpush1.bf16.msra.mxu0 0
        %1316 = vmatprep.subr.bf16.mxu0 0
        %1317 = vmatpush1.bf16.msra.mxu0 0
        %1318 = vmatprep.subr.bf16.mxu0 0
        %1319 = vmatpush1.bf16.msra.mxu0 0
        %1320 = vmatprep.subr.bf16.mxu0 0
        %1321 = vmatpush1.bf16.msra.mxu0 0
        %1322 = vmatprep.subr.bf16.mxu0 0
        %1323 = vmatpush1.bf16.msra.mxu0 0
        %1324 = vmatprep.subr.bf16.mxu0 0
        %1325 = vmatpush1.bf16.msra.mxu0 0
        %1326 = vmatprep.subr.bf16.mxu0 0
        %1327 = vmatpush1.bf16.msra.mxu0 0
        %1328 = vmatprep.subr.bf16.mxu0 0
        %1329 = vmatpush1.bf16.msra.mxu0 0
        %1330 = vmatprep.subr.bf16.mxu0 0
        %1331 = vmatpush1.bf16.msra.mxu0 0
        %1332 = vmatprep.subr.bf16.mxu0 0
        %1333 = vmatpush1.bf16.msra.mxu0 0
        %1334 = vmatprep.subr.bf16.mxu0 0
        %1335 = vmatpush1.bf16.msra.mxu0 0
        %1336 = vmatprep.subr.bf16.mxu0 0
        %1337 = vmatpush1.bf16.msra.mxu0 0
        %1338 = vmatprep.subr.bf16.mxu0 0
        %1339 = vmatpush1.bf16.msra.mxu0 0
        %1340 = vmatprep.subr.bf16.mxu0 0
        %1341 = vmatpush1.bf16.msra.mxu0 0
        %1342 = vmatprep.mubr.bf16.mxu0 0
        %1343 = vmatmul.mubr.bf16.gmra.mrb[0].mxu0 %v1278
        %v1344 = vpop.f32.mrb[0].mxu0
        %v1345 = vadd.f32 0.0, %v1344
        %v1346 = vpop.f32.mrb[0].mxu0
        %v1347 = vpop.f32.mrb[0].mxu0
        %v1348 = vadd.f32 0.0, %v1347
        %v1349 = vpop.f32.mrb[0].mxu0
        %1350 = vmatprep.mubr.bf16.mxu0 0
        %1351 = vmatmul.mubr.bf16.gmra.mrb[0].mxu0 %v1281
        %v1352 = vpop.f32.mrb[0].mxu0
        %v1353 = vadd.f32 0.0, %v1352
        %v1354 = vpop.f32.mrb[0].mxu0
        %v1355 = vpop.f32.mrb[0].mxu0
        %v1356 = vadd.f32 0.0, %v1355
        %v1357 = vpop.f32.mrb[0].mxu0
        %1358 = vmatprep.mubr.bf16.mxu0 0
        %1359 = vmatmul.mubr.bf16.gmra.mrb[0].mxu0 %v1284
        %v1360 = vpop.f32.mrb[0].mxu0
        %v1361 = vadd.f32 0.0, %v1360
        %v1362 = vpop.f32.mrb[0].mxu0
        %v1363 = vpop.f32.mrb[0].mxu0
        %v1364 = vadd.f32 0.0, %v1363
        %v1365 = vpop.f32.mrb[0].mxu0
        %1366 = vmatprep.mubr.bf16.mxu0 0
        %1367 = vmatmul.mubr.bf16.gmra.mrb[0].mxu0 %v1287
        %v1368 = vpop.f32.mrb[0].mxu0
        %v1369 = vadd.f32 0.0, %v1368
        %v1370 = vpop.f32.mrb[0].mxu0
        %v1371 = vpop.f32.mrb[0].mxu0
        %v1372 = vadd.f32 0.0, %v1371
        %v1373 = vpop.f32.mrb[0].mxu0
        %1374 = vmatprep.mubr.bf16.mxu0 0
        %1375 = vmatmul.mubr.bf16.gmra.mrb[0].mxu0 %v1290
        %v1376 = vpop.f32.mrb[0].mxu0
        %v1377 = vadd.f32 0.0, %v1376
        %v1378 = vpop.f32.mrb[0].mxu0
        %v1379 = vpop.f32.mrb[0].mxu0
        %v1380 = vadd.f32 0.0, %v1379
        %v1381 = vpop.f32.mrb[0].mxu0
        %1382 = vmatprep.mubr.bf16.mxu0 0
        %1383 = vmatmul.mubr.bf16.gmra.mrb[0].mxu0 %v1293
        %v1384 = vpop.f32.mrb[0].mxu0
        %v1385 = vadd.f32 0.0, %v1384
        %v1386 = vpop.f32.mrb[0].mxu0
        %v1387 = vpop.f32.mrb[0].mxu0
        %v1388 = vadd.f32 0.0, %v1387
        %v1389 = vpop.f32.mrb[0].mxu0
        %1390 = vmatprep.mubr.bf16.mxu0 0
        %1391 = vmatmul.mubr.bf16.gmra.mrb[0].mxu0 %v1296
        %v1392 = vpop.f32.mrb[0].mxu0
        %v1393 = vadd.f32 0.0, %v1392
        %v1394 = vpop.f32.mrb[0].mxu0
        %v1395 = vpop.f32.mrb[0].mxu0
        %v1396 = vadd.f32 0.0, %v1395
        %v1397 = vpop.f32.mrb[0].mxu0
        %1398 = vmatprep.mubr.bf16.mxu0 0
        %1399 = vmatmul.mubr.bf16.gmra.mrb[0].mxu0 %v1299
        %v1400 = vpop.f32.mrb[0].mxu0
        %v1401 = vadd.f32 0.0, %v1400
        %v1402 = vpop.f32.mrb[0].mxu0
        %v1403 = vpop.f32.mrb[0].mxu0
        %v1404 = vadd.f32 0.0, %v1403
        %v1405 = vpop.f32.mrb[0].mxu0
        %1406 = vmatprep.mubr.bf16.mxu0 0
        %1407 = vmatmul.mubr.bf16.gmra.mrb[0].mxu0 %v1302
        %v1408 = vpop.f32.mrb[0].mxu0
        %v1409 = vadd.f32 0.0, %v1408
        %v1410 = vpop.f32.mrb[0].mxu0
        %v1411 = vpop.f32.mrb[0].mxu0
        %v1412 = vadd.f32 0.0, %v1411
        %v1413 = vpop.f32.mrb[0].mxu0
        %1414 = vmatprep.mubr.bf16.mxu0 0
        %1415 = vmatmul.mubr.bf16.gmra.mrb[0].mxu0 %v1305
        %v1416 = vpop.f32.mrb[0].mxu0
        %v1417 = vadd.f32 0.0, %v1416
        %v1418 = vpop.f32.mrb[0].mxu0
        %v1419 = vpop.f32.mrb[0].mxu0
        %v1420 = vadd.f32 0.0, %v1419
        %v1421 = vpop.f32.mrb[0].mxu0
        %1422 = vdwg.mxu0
        %v1423 = vadd.f32 %v1184, %v1345
        %v1424 = vadd.f32 %v1185, %v1348
        %v1425 = vadd.f32 %v1186, %v1353
        %v1426 = vadd.f32 %v1187, %v1356
        %v1427 = vadd.f32 %v1188, %v1361
        %v1428 = vadd.f32 %v1189, %v1364
        %v1429 = vadd.f32 %v1190, %v1369
        %v1430 = vadd.f32 %v1191, %v1372
        %v1431 = vadd.f32 %v1192, %v1377
        %v1432 = vadd.f32 %v1193, %v1380
        %v1433 = vadd.f32 %v1194, %v1385
        %v1434 = vadd.f32 %v1195, %v1388
        %v1435 = vadd.f32 %v1196, %v1393
        %v1436 = vadd.f32 %v1197, %v1396
        %v1437 = vadd.f32 %v1198, %v1401
        %v1438 = vadd.f32 %v1199, %v1404
        %v1439 = vadd.f32 %v1200, %v1409
        %v1440 = vadd.f32 %v1201, %v1412
        %v1441 = vadd.f32 %v1202, %v1417
        %v1442 = vadd.f32 %v1203, %v1420
        %v1443 = vld [vmem:[%s1204] sm:$0xf]
        %v1444 = vld [vmem:[%s1204 + $0x4] sm:$0xf]
        %v1445 = vld [vmem:[%s1204 + $0x8] sm:$0x1]
        %v1446 = vld [vmem:[%s1204 + $0xc] sm:$0xf]
        %v1447 = vld [vmem:[%s1204 + $0x10] sm:$0xf]
        %v1448 = vld [vmem:[%s1204 + $0x14] sm:$0x1]
        %v1449 = vld [vmem:[%s1204 + $0x18] sm:$0xf]
        %v1450 = vld [vmem:[%s1204 + $0x1c] sm:$0xf]
        %v1451 = vld [vmem:[%s1204 + $0x20] sm:$0x1]
        %v1452 = vld [vmem:[%s1204 + $0x24] sm:$0xf]
        %v1453 = vld [vmem:[%s1204 + $0x28] sm:$0xf]
        %v1454 = vld [vmem:[%s1204 + $0x2c] sm:$0x1]
        %v1455 = vld [vmem:[%s1204 + $0x30] sm:$0xf]
        %v1456 = vld [vmem:[%s1204 + $0x34] sm:$0xf]
        %v1457 = vld [vmem:[%s1204 + $0x38] sm:$0x1]
        %v1458 = vld [vmem:[%s1204 + $0x3c] sm:$0xf]
        %v1459 = vld [vmem:[%s1204 + $0x40] sm:$0xf]
        %v1460 = vld [vmem:[%s1204 + $0x44] sm:$0x1]
        %v1461 = vld [vmem:[%s1204 + $0x48] sm:$0xf]
        %v1462 = vld [vmem:[%s1204 + $0x4c] sm:$0xf]
        %v1463 = vld [vmem:[%s1204 + $0x50] sm:$0x1]
        %v1464 = vld [vmem:[%s1204 + $0x54] sm:$0xf]
        %v1465 = vld [vmem:[%s1204 + $0x58] sm:$0xf]
        %v1466 = vld [vmem:[%s1204 + $0x5c] sm:$0x1]
        %v1467 = vld [vmem:[%s1204 + $0x60] sm:$0xf]
        %v1468 = vld [vmem:[%s1204 + $0x64] sm:$0xf]
        %v1469 = vld [vmem:[%s1204 + $0x68] sm:$0x1]
        %v1470 = vld [vmem:[%s1204 + $0x6c] sm:$0xf]
        %v1471 = vld [vmem:[%s1204 + $0x70] sm:$0xf]
        %v1472 = vld [vmem:[%s1204 + $0x74] sm:$0x1]
        %v1474 = vshrl.u32 %v1443, 16
        %v1476 = vrot.slane %v1474, 4
        %v1477 = vshll.u32 %v1443, 16
        %v1479 = vrot.slane %v1477, 5
        %v1480 = vor.u32 %v1476, %v1479
        %v1481 = vrot.slane %v1480, 4
        %v1483 = vshll.u32 %v1444, 16
        %v1485 = vrot.slane %v1483, 5
        %v1486 = vsel %vm286, %v1481, %v1485
        %v1487 = vshrl.u32 %v1444, 16
        %v1489 = vrot.slane %v1487, 4
        %v1490 = vor.u32 %v1489, %v1485
        %v1491 = vrot.slane %v1490, 4
        %v1493 = vshll.u32 %v1445, 16
        %v1495 = vrot.slane %v1493, 5
        %v1496 = vsel %vm286, %v1491, %v1495
        %v1498 = vshrl.u32 %v1446, 16
        %v1500 = vrot.slane %v1498, 4
        %v1501 = vshll.u32 %v1446, 16
        %v1503 = vrot.slane %v1501, 5
        %v1504 = vor.u32 %v1500, %v1503
        %v1505 = vrot.slane %v1504, 4
        %v1507 = vshll.u32 %v1447, 16
        %v1509 = vrot.slane %v1507, 5
        %v1510 = vsel %vm286, %v1505, %v1509
        %v1511 = vshrl.u32 %v1447, 16
        %v1513 = vrot.slane %v1511, 4
        %v1514 = vor.u32 %v1513, %v1509
        %v1515 = vrot.slane %v1514, 4
        %v1517 = vshll.u32 %v1448, 16
        %v1519 = vrot.slane %v1517, 5
        %v1520 = vsel %vm286, %v1515, %v1519
        %v1522 = vshrl.u32 %v1449, 16
        %v1524 = vrot.slane %v1522, 4
        %v1525 = vshll.u32 %v1449, 16
        %v1527 = vrot.slane %v1525, 5
        %v1528 = vor.u32 %v1524, %v1527
        %v1529 = vrot.slane %v1528, 4
        %v1531 = vshll.u32 %v1450, 16
        %v1533 = vrot.slane %v1531, 5
        %v1534 = vsel %vm286, %v1529, %v1533
        %v1535 = vshrl.u32 %v1450, 16
        %v1537 = vrot.slane %v1535, 4
        %v1538 = vor.u32 %v1537, %v1533
        %v1539 = vrot.slane %v1538, 4
        %v1541 = vshll.u32 %v1451, 16
        %v1543 = vrot.slane %v1541, 5
        %v1544 = vsel %vm286, %v1539, %v1543
        %v1546 = vshrl.u32 %v1452, 16
        %v1548 = vrot.slane %v1546, 4
        %v1549 = vshll.u32 %v1452, 16
        %v1551 = vrot.slane %v1549, 5
        %v1552 = vor.u32 %v1548, %v1551
        %v1553 = vrot.slane %v1552, 4
        %v1555 = vshll.u32 %v1453, 16
        %v1557 = vrot.slane %v1555, 5
        %v1558 = vsel %vm286, %v1553, %v1557
        %v1559 = vshrl.u32 %v1453, 16
        %v1561 = vrot.slane %v1559, 4
        %v1562 = vor.u32 %v1561, %v1557
        %v1563 = vrot.slane %v1562, 4
        %v1565 = vshll.u32 %v1454, 16
        %v1567 = vrot.slane %v1565, 5
        %v1568 = vsel %vm286, %v1563, %v1567
        %v1570 = vshrl.u32 %v1455, 16
        %v1572 = vrot.slane %v1570, 4
        %v1573 = vshll.u32 %v1455, 16
        %v1575 = vrot.slane %v1573, 5
        %v1576 = vor.u32 %v1572, %v1575
        %v1577 = vrot.slane %v1576, 4
        %v1579 = vshll.u32 %v1456, 16
        %v1581 = vrot.slane %v1579, 5
        %v1582 = vsel %vm286, %v1577, %v1581
        %v1583 = vshrl.u32 %v1456, 16
        %v1585 = vrot.slane %v1583, 4
        %v1586 = vor.u32 %v1585, %v1581
        %v1587 = vrot.slane %v1586, 4
        %v1589 = vshll.u32 %v1457, 16
        %v1591 = vrot.slane %v1589, 5
        %v1592 = vsel %vm286, %v1587, %v1591
        %v1594 = vshrl.u32 %v1458, 16
        %v1596 = vrot.slane %v1594, 4
        %v1597 = vshll.u32 %v1458, 16
        %v1599 = vrot.slane %v1597, 5
        %v1600 = vor.u32 %v1596, %v1599
        %v1601 = vrot.slane %v1600, 4
        %v1603 = vshll.u32 %v1459, 16
        %v1605 = vrot.slane %v1603, 5
        %v1606 = vsel %vm286, %v1601, %v1605
        %v1607 = vshrl.u32 %v1459, 16
        %v1609 = vrot.slane %v1607, 4
        %v1610 = vor.u32 %v1609, %v1605
        %v1611 = vrot.slane %v1610, 4
        %v1613 = vshll.u32 %v1460, 16
        %v1615 = vrot.slane %v1613, 5
        %v1616 = vsel %vm286, %v1611, %v1615
        %v1618 = vshrl.u32 %v1461, 16
        %v1620 = vrot.slane %v1618, 4
        %v1621 = vshll.u32 %v1461, 16
        %v1623 = vrot.slane %v1621, 5
        %v1624 = vor.u32 %v1620, %v1623
        %v1625 = vrot.slane %v1624, 4
        %v1627 = vshll.u32 %v1462, 16
        %v1629 = vrot.slane %v1627, 5
        %v1630 = vsel %vm286, %v1625, %v1629
        %v1631 = vshrl.u32 %v1462, 16
        %v1633 = vrot.slane %v1631, 4
        %v1634 = vor.u32 %v1633, %v1629
        %v1635 = vrot.slane %v1634, 4
        %v1637 = vshll.u32 %v1463, 16
        %v1639 = vrot.slane %v1637, 5
        %v1640 = vsel %vm286, %v1635, %v1639
        %v1642 = vshrl.u32 %v1464, 16
        %v1644 = vrot.slane %v1642, 4
        %v1645 = vshll.u32 %v1464, 16
        %v1647 = vrot.slane %v1645, 5
        %v1648 = vor.u32 %v1644, %v1647
        %v1649 = vrot.slane %v1648, 4
        %v1651 = vshll.u32 %v1465, 16
        %v1653 = vrot.slane %v1651, 5
        %v1654 = vsel %vm286, %v1649, %v1653
        %v1655 = vshrl.u32 %v1465, 16
        %v1657 = vrot.slane %v1655, 4
        %v1658 = vor.u32 %v1657, %v1653
        %v1659 = vrot.slane %v1658, 4
        %v1661 = vshll.u32 %v1466, 16
        %v1663 = vrot.slane %v1661, 5
        %v1664 = vsel %vm286, %v1659, %v1663
        %v1666 = vshrl.u32 %v1467, 16
        %v1668 = vrot.slane %v1666, 4
        %v1669 = vshll.u32 %v1467, 16
        %v1671 = vrot.slane %v1669, 5
        %v1672 = vor.u32 %v1668, %v1671
        %v1673 = vrot.slane %v1672, 4
        %v1675 = vshll.u32 %v1468, 16
        %v1677 = vrot.slane %v1675, 5
        %v1678 = vsel %vm286, %v1673, %v1677
        %v1679 = vshrl.u32 %v1468, 16
        %v1681 = vrot.slane %v1679, 4
        %v1682 = vor.u32 %v1681, %v1677
        %v1683 = vrot.slane %v1682, 4
        %v1685 = vshll.u32 %v1469, 16
        %v1687 = vrot.slane %v1685, 5
        %v1688 = vsel %vm286, %v1683, %v1687
        %v1690 = vshrl.u32 %v1470, 16
        %v1692 = vrot.slane %v1690, 4
        %v1693 = vshll.u32 %v1470, 16
        %v1695 = vrot.slane %v1693, 5
        %v1696 = vor.u32 %v1692, %v1695
        %v1697 = vrot.slane %v1696, 4
        %v1699 = vshll.u32 %v1471, 16
        %v1701 = vrot.slane %v1699, 5
        %v1702 = vsel %vm286, %v1697, %v1701
        %v1703 = vshrl.u32 %v1471, 16
        %v1705 = vrot.slane %v1703, 4
        %v1706 = vor.u32 %v1705, %v1701
        %v1707 = vrot.slane %v1706, 4
        %v1709 = vshll.u32 %v1472, 16
        %v1711 = vrot.slane %v1709, 5
        %v1712 = vsel %vm286, %v1707, %v1711
        %s1713 = scalar_lea.vmem %s1, 8
        %v1714 = vld [vmem:[%s1713] sm:$0x3]
        %v1715 = vunpack.c.l.b16 %v1486
        %v1716 = vunpack.c.l.b16 %v1496
        %v1717 = vunpack.c.l.b16 %v1510
        %v1718 = vunpack.c.l.b16 %v1520
        %v1719 = vunpack.c.l.b16 %v1534
        %v1720 = vunpack.c.l.b16 %v1544
        %v1721 = vunpack.c.l.b16 %v1558
        %v1722 = vunpack.c.l.b16 %v1568
        %v1723 = vunpack.c.l.b16 %v1582
        %v1724 = vunpack.c.l.b16 %v1592
        %v1725 = vunpack.c.l.b16 %v1606
        %v1726 = vunpack.c.l.b16 %v1616
        %v1727 = vunpack.c.l.b16 %v1630
        %v1728 = vunpack.c.l.b16 %v1640
        %v1729 = vunpack.c.l.b16 %v1654
        %v1730 = vunpack.c.l.b16 %v1664
        %v1731 = vunpack.c.l.b16 %v1678
        %v1732 = vunpack.c.l.b16 %v1688
        %v1733 = vunpack.c.l.b16 %v1702
        %v1734 = vunpack.c.l.b16 %v1712
        %v1735 = vpack.c.b16 %v1716, %v1715
        %v1736 = vpack.c.b16 %v1718, %v1717
        %v1737 = vpack.c.b16 %v1720, %v1719
        %v1738 = vpack.c.b16 %v1722, %v1721
        %v1739 = vpack.c.b16 %v1724, %v1723
        %v1740 = vpack.c.b16 %v1726, %v1725
        %v1741 = vpack.c.b16 %v1728, %v1727
        %v1742 = vpack.c.b16 %v1730, %v1729
        %v1743 = vpack.c.b16 %v1732, %v1731
        %v1744 = vpack.c.b16 %v1734, %v1733
        %v1746 = vsel %vm559, %v1735, 0
        %v1749 = vsel %vm559, %v1736, 0
        %v1752 = vsel %vm559, %v1737, 0
        %v1755 = vsel %vm559, %v1738, 0
        %v1758 = vsel %vm559, %v1739, 0
        %v1761 = vsel %vm559, %v1740, 0
        %v1764 = vsel %vm559, %v1741, 0
        %v1767 = vsel %vm559, %v1742, 0
        %v1770 = vsel %vm559, %v1743, 0
        %v1773 = vsel %vm559, %v1744, 0
        %v1776 = vsel %vm590, %v1714, 0
        %1778 = vmatprep.subr.bf16.mxu0 0
        %1779 = vmatpush1.bf16.msra.mxu0 %v1776
        %1780 = vmatprep.subr.bf16.mxu0 0
        %1781 = vmatpush1.bf16.msra.mxu0 0
        %1782 = vmatprep.subr.bf16.mxu0 0
        %1783 = vmatpush1.bf16.msra.mxu0 0
        %1784 = vmatprep.subr.bf16.mxu0 0
        %1785 = vmatpush1.bf16.msra.mxu0 0
        %1786 = vmatprep.subr.bf16.mxu0 0
        %1787 = vmatpush1.bf16.msra.mxu0 0
        %1788 = vmatprep.subr.bf16.mxu0 0
        %1789 = vmatpush1.bf16.msra.mxu0 0
        %1790 = vmatprep.subr.bf16.mxu0 0
        %1791 = vmatpush1.bf16.msra.mxu0 0
        %1792 = vmatprep.subr.bf16.mxu0 0
        %1793 = vmatpush1.bf16.msra.mxu0 0
        %1794 = vmatprep.subr.bf16.mxu0 0
        %1795 = vmatpush1.bf16.msra.mxu0 0
        %1796 = vmatprep.subr.bf16.mxu0 0
        %1797 = vmatpush1.bf16.msra.mxu0 0
        %1798 = vmatprep.subr.bf16.mxu0 0
        %1799 = vmatpush1.bf16.msra.mxu0 0
        %1800 = vmatprep.subr.bf16.mxu0 0
        %1801 = vmatpush1.bf16.msra.mxu0 0
        %1802 = vmatprep.subr.bf16.mxu0 0
        %1803 = vmatpush1.bf16.msra.mxu0 0
        %1804 = vmatprep.subr.bf16.mxu0 0
        %1805 = vmatpush1.bf16.msra.mxu0 0
        %1806 = vmatprep.subr.bf16.mxu0 0
        %1807 = vmatpush1.bf16.msra.mxu0 0
        %1808 = vmatprep.subr.bf16.mxu0 0
        %1809 = vmatpush1.bf16.msra.mxu0 0
        %1810 = vmatprep.mubr.bf16.mxu0 0
        %1811 = vmatmul.mubr.bf16.gmra.mrb[0].mxu0 %v1746
        %v1812 = vpop.f32.mrb[0].mxu0
        %v1813 = vadd.f32 0.0, %v1812
        %v1814 = vpop.f32.mrb[0].mxu0
        %v1815 = vpop.f32.mrb[0].mxu0
        %v1816 = vadd.f32 0.0, %v1815
        %v1817 = vpop.f32.mrb[0].mxu0
        %1818 = vmatprep.mubr.bf16.mxu0 0
        %1819 = vmatmul.mubr.bf16.gmra.mrb[0].mxu0 %v1749
        %v1820 = vpop.f32.mrb[0].mxu0
        %v1821 = vadd.f32 0.0, %v1820
        %v1822 = vpop.f32.mrb[0].mxu0
        %v1823 = vpop.f32.mrb[0].mxu0
        %v1824 = vadd.f32 0.0, %v1823
        %v1825 = vpop.f32.mrb[0].mxu0
        %1826 = vmatprep.mubr.bf16.mxu0 0
        %1827 = vmatmul.mubr.bf16.gmra.mrb[0].mxu0 %v1752
        %v1828 = vpop.f32.mrb[0].mxu0
        %v1829 = vadd.f32 0.0, %v1828
        %v1830 = vpop.f32.mrb[0].mxu0
        %v1831 = vpop.f32.mrb[0].mxu0
        %v1832 = vadd.f32 0.0, %v1831
        %v1833 = vpop.f32.mrb[0].mxu0
        %1834 = vmatprep.mubr.bf16.mxu0 0
        %1835 = vmatmul.mubr.bf16.gmra.mrb[0].mxu0 %v1755
        %v1836 = vpop.f32.mrb[0].mxu0
        %v1837 = vadd.f32 0.0, %v1836
        %v1838 = vpop.f32.mrb[0].mxu0
        %v1839 = vpop.f32.mrb[0].mxu0
        %v1840 = vadd.f32 0.0, %v1839
        %v1841 = vpop.f32.mrb[0].mxu0
        %1842 = vmatprep.mubr.bf16.mxu0 0
        %1843 = vmatmul.mubr.bf16.gmra.mrb[0].mxu0 %v1758
        %v1844 = vpop.f32.mrb[0].mxu0
        %v1845 = vadd.f32 0.0, %v1844
        %v1846 = vpop.f32.mrb[0].mxu0
        %v1847 = vpop.f32.mrb[0].mxu0
        %v1848 = vadd.f32 0.0, %v1847
        %v1849 = vpop.f32.mrb[0].mxu0
        %1850 = vmatprep.mubr.bf16.mxu0 0
        %1851 = vmatmul.mubr.bf16.gmra.mrb[0].mxu0 %v1761
        %v1852 = vpop.f32.mrb[0].mxu0
        %v1853 = vadd.f32 0.0, %v1852
        %v1854 = vpop.f32.mrb[0].mxu0
        %v1855 = vpop.f32.mrb[0].mxu0
        %v1856 = vadd.f32 0.0, %v1855
        %v1857 = vpop.f32.mrb[0].mxu0
        %1858 = vmatprep.mubr.bf16.mxu0 0
        %1859 = vmatmul.mubr.bf16.gmra.mrb[0].mxu0 %v1764
        %v1860 = vpop.f32.mrb[0].mxu0
        %v1861 = vadd.f32 0.0, %v1860
        %v1862 = vpop.f32.mrb[0].mxu0
        %v1863 = vpop.f32.mrb[0].mxu0
        %v1864 = vadd.f32 0.0, %v1863
        %v1865 = vpop.f32.mrb[0].mxu0
        %1866 = vmatprep.mubr.bf16.mxu0 0
        %1867 = vmatmul.mubr.bf16.gmra.mrb[0].mxu0 %v1767
        %v1868 = vpop.f32.mrb[0].mxu0
        %v1869 = vadd.f32 0.0, %v1868
        %v1870 = vpop.f32.mrb[0].mxu0
        %v1871 = vpop.f32.mrb[0].mxu0
        %v1872 = vadd.f32 0.0, %v1871
        %v1873 = vpop.f32.mrb[0].mxu0
        %1874 = vmatprep.mubr.bf16.mxu0 0
        %1875 = vmatmul.mubr.bf16.gmra.mrb[0].mxu0 %v1770
        %v1876 = vpop.f32.mrb[0].mxu0
        %v1877 = vadd.f32 0.0, %v1876
        %v1878 = vpop.f32.mrb[0].mxu0
        %v1879 = vpop.f32.mrb[0].mxu0
        %v1880 = vadd.f32 0.0, %v1879
        %v1881 = vpop.f32.mrb[0].mxu0
        %1882 = vmatprep.mubr.bf16.mxu0 0
        %1883 = vmatmul.mubr.bf16.gmra.mrb[0].mxu0 %v1773
        %v1884 = vpop.f32.mrb[0].mxu0
        %v1885 = vadd.f32 0.0, %v1884
        %v1886 = vpop.f32.mrb[0].mxu0
        %v1887 = vpop.f32.mrb[0].mxu0
        %v1888 = vadd.f32 0.0, %v1887
        %v1889 = vpop.f32.mrb[0].mxu0
        %1890 = vdwg.mxu0
        %v1891 = vadd.f32 %v1423, %v1813
        %v1892 = vadd.f32 %v1424, %v1816
        %v1893 = vadd.f32 %v1425, %v1821
        %v1894 = vadd.f32 %v1426, %v1824
        %v1895 = vadd.f32 %v1427, %v1829
        %v1896 = vadd.f32 %v1428, %v1832
        %v1897 = vadd.f32 %v1429, %v1837
        %v1898 = vadd.f32 %v1430, %v1840
        %v1899 = vadd.f32 %v1431, %v1845
        %v1900 = vadd.f32 %v1432, %v1848
        %v1901 = vadd.f32 %v1433, %v1853
        %v1902 = vadd.f32 %v1434, %v1856
        %v1903 = vadd.f32 %v1435, %v1861
        %v1904 = vadd.f32 %v1436, %v1864
        %v1905 = vadd.f32 %v1437, %v1869
        %v1906 = vadd.f32 %v1438, %v1872
        %v1907 = vadd.f32 %v1439, %v1877
        %v1908 = vadd.f32 %v1440, %v1880
        %v1909 = vadd.f32 %v1441, %v1885
        %v1910 = vadd.f32 %v1442, %v1888
        %v1911 = vld [vmem:[%s1204] sm:$0xe]
        %v1912 = vld [vmem:[%s1204 + $0xc] sm:$0xe]
        %v1913 = vld [vmem:[%s1204 + $0x18] sm:$0xe]
        %v1914 = vld [vmem:[%s1204 + $0x24] sm:$0xe]
        %v1915 = vld [vmem:[%s1204 + $0x30] sm:$0xe]
        %v1916 = vld [vmem:[%s1204 + $0x3c] sm:$0xe]
        %v1917 = vld [vmem:[%s1204 + $0x48] sm:$0xe]
        %v1918 = vld [vmem:[%s1204 + $0x54] sm:$0xe]
        %v1919 = vld [vmem:[%s1204 + $0x60] sm:$0xe]
        %v1920 = vld [vmem:[%s1204 + $0x6c] sm:$0xe]
        %v1951 = vrot.slane %v1911, 5
        %v1952 = vrot.slane %v1951, 4
        %v1953 = vrot.slane %v1444, 5
        %v1954 = vsel %vm935, %v1952, %v1953
        %v1955 = vrot.slane %v1953, 4
        %v1956 = vrot.slane %v1445, 5
        %v1957 = vsel %vm935, %v1955, %v1956
        %v1958 = vrot.slane %v1912, 5
        %v1959 = vrot.slane %v1958, 4
        %v1960 = vrot.slane %v1447, 5
        %v1961 = vsel %vm935, %v1959, %v1960
        %v1962 = vrot.slane %v1960, 4
        %v1963 = vrot.slane %v1448, 5
        %v1964 = vsel %vm935, %v1962, %v1963
        %v1965 = vrot.slane %v1913, 5
        %v1966 = vrot.slane %v1965, 4
        %v1967 = vrot.slane %v1450, 5
        %v1968 = vsel %vm935, %v1966, %v1967
        %v1969 = vrot.slane %v1967, 4
        %v1970 = vrot.slane %v1451, 5
        %v1971 = vsel %vm935, %v1969, %v1970
        %v1972 = vrot.slane %v1914, 5
        %v1973 = vrot.slane %v1972, 4
        %v1974 = vrot.slane %v1453, 5
        %v1975 = vsel %vm935, %v1973, %v1974
        %v1976 = vrot.slane %v1974, 4
        %v1977 = vrot.slane %v1454, 5
        %v1978 = vsel %vm935, %v1976, %v1977
        %v1979 = vrot.slane %v1915, 5
        %v1980 = vrot.slane %v1979, 4
        %v1981 = vrot.slane %v1456, 5
        %v1982 = vsel %vm935, %v1980, %v1981
        %v1983 = vrot.slane %v1981, 4
        %v1984 = vrot.slane %v1457, 5
        %v1985 = vsel %vm935, %v1983, %v1984
        %v1986 = vrot.slane %v1916, 5
        %v1987 = vrot.slane %v1986, 4
        %v1988 = vrot.slane %v1459, 5
        %v1989 = vsel %vm935, %v1987, %v1988
        %v1990 = vrot.slane %v1988, 4
        %v1991 = vrot.slane %v1460, 5
        %v1992 = vsel %vm935, %v1990, %v1991
        %v1993 = vrot.slane %v1917, 5
        %v1994 = vrot.slane %v1993, 4
        %v1995 = vrot.slane %v1462, 5
        %v1996 = vsel %vm935, %v1994, %v1995
        %v1997 = vrot.slane %v1995, 4
        %v1998 = vrot.slane %v1463, 5
        %v1999 = vsel %vm935, %v1997, %v1998
        %v2000 = vrot.slane %v1918, 5
        %v2001 = vrot.slane %v2000, 4
        %v2002 = vrot.slane %v1465, 5
        %v2003 = vsel %vm935, %v2001, %v2002
        %v2004 = vrot.slane %v2002, 4
        %v2005 = vrot.slane %v1466, 5
        %v2006 = vsel %vm935, %v2004, %v2005
        %v2007 = vrot.slane %v1919, 5
        %v2008 = vrot.slane %v2007, 4
        %v2009 = vrot.slane %v1468, 5
        %v2010 = vsel %vm935, %v2008, %v2009
        %v2011 = vrot.slane %v2009, 4
        %v2012 = vrot.slane %v1469, 5
        %v2013 = vsel %vm935, %v2011, %v2012
        %v2014 = vrot.slane %v1920, 5
        %v2015 = vrot.slane %v2014, 4
        %v2016 = vrot.slane %v1471, 5
        %v2017 = vsel %vm935, %v2015, %v2016
        %v2018 = vrot.slane %v2016, 4
        %v2019 = vrot.slane %v1472, 5
        %v2020 = vsel %vm935, %v2018, %v2019
        %s2021 = scalar_lea.vmem %s1, 10
        %v2022 = vld [vmem:[%s2021] sm:$0x3]
        %v2023 = vunpack.c.l.b16 %v1954
        %v2024 = vunpack.c.l.b16 %v1957
        %v2025 = vunpack.c.l.b16 %v1961
        %v2026 = vunpack.c.l.b16 %v1964
        %v2027 = vunpack.c.l.b16 %v1968
        %v2028 = vunpack.c.l.b16 %v1971
        %v2029 = vunpack.c.l.b16 %v1975
        %v2030 = vunpack.c.l.b16 %v1978
        %v2031 = vunpack.c.l.b16 %v1982
        %v2032 = vunpack.c.l.b16 %v1985
        %v2033 = vunpack.c.l.b16 %v1989
        %v2034 = vunpack.c.l.b16 %v1992
        %v2035 = vunpack.c.l.b16 %v1996
        %v2036 = vunpack.c.l.b16 %v1999
        %v2037 = vunpack.c.l.b16 %v2003
        %v2038 = vunpack.c.l.b16 %v2006
        %v2039 = vunpack.c.l.b16 %v2010
        %v2040 = vunpack.c.l.b16 %v2013
        %v2041 = vunpack.c.l.b16 %v2017
        %v2042 = vunpack.c.l.b16 %v2020
        %v2043 = vpack.c.b16 %v2024, %v2023
        %v2044 = vpack.c.b16 %v2026, %v2025
        %v2045 = vpack.c.b16 %v2028, %v2027
        %v2046 = vpack.c.b16 %v2030, %v2029
        %v2047 = vpack.c.b16 %v2032, %v2031
        %v2048 = vpack.c.b16 %v2034, %v2033
        %v2049 = vpack.c.b16 %v2036, %v2035
        %v2050 = vpack.c.b16 %v2038, %v2037
        %v2051 = vpack.c.b16 %v2040, %v2039
        %v2052 = vpack.c.b16 %v2042, %v2041
        %v2054 = vsel %vm559, %v2043, 0
        %v2057 = vsel %vm559, %v2044, 0
        %v2060 = vsel %vm559, %v2045, 0
        %v2063 = vsel %vm559, %v2046, 0
        %v2066 = vsel %vm559, %v2047, 0
        %v2069 = vsel %vm559, %v2048, 0
        %v2072 = vsel %vm559, %v2049, 0
        %v2075 = vsel %vm559, %v2050, 0
        %v2078 = vsel %vm559, %v2051, 0
        %v2081 = vsel %vm559, %v2052, 0
        %v2084 = vsel %vm590, %v2022, 0
        %2086 = vmatprep.subr.bf16.mxu0 0
        %2087 = vmatpush1.bf16.msra.mxu0 %v2084
        %2088 = vmatprep.subr.bf16.mxu0 0
        %2089 = vmatpush1.bf16.msra.mxu0 0
        %2090 = vmatprep.subr.bf16.mxu0 0
        %2091 = vmatpush1.bf16.msra.mxu0 0
        %2092 = vmatprep.subr.bf16.mxu0 0
        %2093 = vmatpush1.bf16.msra.mxu0 0
        %2094 = vmatprep.subr.bf16.mxu0 0
        %2095 = vmatpush1.bf16.msra.mxu0 0
        %2096 = vmatprep.subr.bf16.mxu0 0
        %2097 = vmatpush1.bf16.msra.mxu0 0
        %2098 = vmatprep.subr.bf16.mxu0 0
        %2099 = vmatpush1.bf16.msra.mxu0 0
        %2100 = vmatprep.subr.bf16.mxu0 0
        %2101 = vmatpush1.bf16.msra.mxu0 0
        %2102 = vmatprep.subr.bf16.mxu0 0
        %2103 = vmatpush1.bf16.msra.mxu0 0
        %2104 = vmatprep.subr.bf16.mxu0 0
        %2105 = vmatpush1.bf16.msra.mxu0 0
        %2106 = vmatprep.subr.bf16.mxu0 0
        %2107 = vmatpush1.bf16.msra.mxu0 0
        %2108 = vmatprep.subr.bf16.mxu0 0
        %2109 = vmatpush1.bf16.msra.mxu0 0
        %2110 = vmatprep.subr.bf16.mxu0 0
        %2111 = vmatpush1.bf16.msra.mxu0 0
        %2112 = vmatprep.subr.bf16.mxu0 0
        %2113 = vmatpush1.bf16.msra.mxu0 0
        %2114 = vmatprep.subr.bf16.mxu0 0
        %2115 = vmatpush1.bf16.msra.mxu0 0
        %2116 = vmatprep.subr.bf16.mxu0 0
        %2117 = vmatpush1.bf16.msra.mxu0 0
        %2118 = vmatprep.mubr.bf16.mxu0 0
        %2119 = vmatmul.mubr.bf16.gmra.mrb[0].mxu0 %v2054
        %v2120 = vpop.f32.mrb[0].mxu0
        %v2121 = vadd.f32 0.0, %v2120
        %v2122 = vpop.f32.mrb[0].mxu0
        %v2123 = vpop.f32.mrb[0].mxu0
        %v2124 = vadd.f32 0.0, %v2123
        %v2125 = vpop.f32.mrb[0].mxu0
        %2126 = vmatprep.mubr.bf16.mxu0 0
        %2127 = vmatmul.mubr.bf16.gmra.mrb[0].mxu0 %v2057
        %v2128 = vpop.f32.mrb[0].mxu0
        %v2129 = vadd.f32 0.0, %v2128
        %v2130 = vpop.f32.mrb[0].mxu0
        %v2131 = vpop.f32.mrb[0].mxu0
        %v2132 = vadd.f32 0.0, %v2131
        %v2133 = vpop.f32.mrb[0].mxu0
        %2134 = vmatprep.mubr.bf16.mxu0 0
        %2135 = vmatmul.mubr.bf16.gmra.mrb[0].mxu0 %v2060
        %v2136 = vpop.f32.mrb[0].mxu0
        %v2137 = vadd.f32 0.0, %v2136
        %v2138 = vpop.f32.mrb[0].mxu0
        %v2139 = vpop.f32.mrb[0].mxu0
        %v2140 = vadd.f32 0.0, %v2139
        %v2141 = vpop.f32.mrb[0].mxu0
        %2142 = vmatprep.mubr.bf16.mxu0 0
        %2143 = vmatmul.mubr.bf16.gmra.mrb[0].mxu0 %v2063
        %v2144 = vpop.f32.mrb[0].mxu0
        %v2145 = vadd.f32 0.0, %v2144
        %v2146 = vpop.f32.mrb[0].mxu0
        %v2147 = vpop.f32.mrb[0].mxu0
        %v2148 = vadd.f32 0.0, %v2147
        %v2149 = vpop.f32.mrb[0].mxu0
        %2150 = vmatprep.mubr.bf16.mxu0 0
        %2151 = vmatmul.mubr.bf16.gmra.mrb[0].mxu0 %v2066
        %v2152 = vpop.f32.mrb[0].mxu0
        %v2153 = vadd.f32 0.0, %v2152
        %v2154 = vpop.f32.mrb[0].mxu0
        %v2155 = vpop.f32.mrb[0].mxu0
        %v2156 = vadd.f32 0.0, %v2155
        %v2157 = vpop.f32.mrb[0].mxu0
        %2158 = vmatprep.mubr.bf16.mxu0 0
        %2159 = vmatmul.mubr.bf16.gmra.mrb[0].mxu0 %v2069
        %v2160 = vpop.f32.mrb[0].mxu0
        %v2161 = vadd.f32 0.0, %v2160
        %v2162 = vpop.f32.mrb[0].mxu0
        %v2163 = vpop.f32.mrb[0].mxu0
        %v2164 = vadd.f32 0.0, %v2163
        %v2165 = vpop.f32.mrb[0].mxu0
        %2166 = vmatprep.mubr.bf16.mxu0 0
        %2167 = vmatmul.mubr.bf16.gmra.mrb[0].mxu0 %v2072
        %v2168 = vpop.f32.mrb[0].mxu0
        %v2169 = vadd.f32 0.0, %v2168
        %v2170 = vpop.f32.mrb[0].mxu0
        %v2171 = vpop.f32.mrb[0].mxu0
        %v2172 = vadd.f32 0.0, %v2171
        %v2173 = vpop.f32.mrb[0].mxu0
        %2174 = vmatprep.mubr.bf16.mxu0 0
        %2175 = vmatmul.mubr.bf16.gmra.mrb[0].mxu0 %v2075
        %v2176 = vpop.f32.mrb[0].mxu0
        %v2177 = vadd.f32 0.0, %v2176
        %v2178 = vpop.f32.mrb[0].mxu0
        %v2179 = vpop.f32.mrb[0].mxu0
        %v2180 = vadd.f32 0.0, %v2179
        %v2181 = vpop.f32.mrb[0].mxu0
        %2182 = vmatprep.mubr.bf16.mxu0 0
        %2183 = vmatmul.mubr.bf16.gmra.mrb[0].mxu0 %v2078
        %v2184 = vpop.f32.mrb[0].mxu0
        %v2185 = vadd.f32 0.0, %v2184
        %v2186 = vpop.f32.mrb[0].mxu0
        %v2187 = vpop.f32.mrb[0].mxu0
        %v2188 = vadd.f32 0.0, %v2187
        %v2189 = vpop.f32.mrb[0].mxu0
        %2190 = vmatprep.mubr.bf16.mxu0 0
        %2191 = vmatmul.mubr.bf16.gmra.mrb[0].mxu0 %v2081
        %v2192 = vpop.f32.mrb[0].mxu0
        %v2193 = vadd.f32 0.0, %v2192
        %v2194 = vpop.f32.mrb[0].mxu0
        %v2195 = vpop.f32.mrb[0].mxu0
        %v2196 = vadd.f32 0.0, %v2195
        %v2197 = vpop.f32.mrb[0].mxu0
        %2198 = vdwg.mxu0
        %v2199 = vadd.f32 %v1891, %v2121
        %v2200 = vadd.f32 %v1892, %v2124
        %v2201 = vadd.f32 %v1893, %v2129
        %v2202 = vadd.f32 %v1894, %v2132
        %v2203 = vadd.f32 %v1895, %v2137
        %v2204 = vadd.f32 %v1896, %v2140
        %v2205 = vadd.f32 %v1897, %v2145
        %v2206 = vadd.f32 %v1898, %v2148
        %v2207 = vadd.f32 %v1899, %v2153
        %v2208 = vadd.f32 %v1900, %v2156
        %v2209 = vadd.f32 %v1901, %v2161
        %v2210 = vadd.f32 %v1902, %v2164
        %v2211 = vadd.f32 %v1903, %v2169
        %v2212 = vadd.f32 %v1904, %v2172
        %v2213 = vadd.f32 %v1905, %v2177
        %v2214 = vadd.f32 %v1906, %v2180
        %v2215 = vadd.f32 %v1907, %v2185
        %v2216 = vadd.f32 %v1908, %v2188
        %v2217 = vadd.f32 %v1909, %v2193
        %v2218 = vadd.f32 %v1910, %v2196
        %s2219 = scalar_lea.vmem %s250, 24
        %v2220 = vld [vmem:[%s2219] sm:$0xf]
        %v2221 = vld [vmem:[%s2219 + $0x4] sm:$0xf]
        %v2222 = vld [vmem:[%s2219 + $0xc] sm:$0xf]
        %v2223 = vld [vmem:[%s2219 + $0x10] sm:$0xf]
        %v2224 = vld [vmem:[%s2219 + $0x18] sm:$0xf]
        %v2225 = vld [vmem:[%s2219 + $0x1c] sm:$0xf]
        %v2226 = vld [vmem:[%s2219 + $0x24] sm:$0xf]
        %v2227 = vld [vmem:[%s2219 + $0x28] sm:$0xf]
        %v2228 = vld [vmem:[%s2219 + $0x30] sm:$0xf]
        %v2229 = vld [vmem:[%s2219 + $0x34] sm:$0xf]
        %v2230 = vld [vmem:[%s2219 + $0x3c] sm:$0xf]
        %v2231 = vld [vmem:[%s2219 + $0x40] sm:$0xf]
        %v2232 = vld [vmem:[%s2219 + $0x48] sm:$0xf]
        %v2233 = vld [vmem:[%s2219 + $0x4c] sm:$0xf]
        %v2234 = vld [vmem:[%s2219 + $0x54] sm:$0xf]
        %v2235 = vld [vmem:[%s2219 + $0x58] sm:$0xf]
        %v2236 = vld [vmem:[%s2219 + $0x60] sm:$0xf]
        %v2237 = vld [vmem:[%s2219 + $0x64] sm:$0xf]
        %v2238 = vld [vmem:[%s2219 + $0x6c] sm:$0xf]
        %v2239 = vld [vmem:[%s2219 + $0x70] sm:$0xf]
        %s2240 = scalar_lea.vmem %s1, 12
        %v2241 = vld [vmem:[%s2240] sm:$0x3]
        %v2262 = vunpack.c.l.b16 %v2220
        %v2263 = vunpack.c.l.b16 %v2221
        %v2264 = vunpack.c.l.b16 %v2222
        %v2265 = vunpack.c.l.b16 %v2223
        %v2266 = vunpack.c.l.b16 %v2224
        %v2267 = vunpack.c.l.b16 %v2225
        %v2268 = vunpack.c.l.b16 %v2226
        %v2269 = vunpack.c.l.b16 %v2227
        %v2270 = vunpack.c.l.b16 %v2228
        %v2271 = vunpack.c.l.b16 %v2229
        %v2272 = vunpack.c.l.b16 %v2230
        %v2273 = vunpack.c.l.b16 %v2231
        %v2274 = vunpack.c.l.b16 %v2232
        %v2275 = vunpack.c.l.b16 %v2233
        %v2276 = vunpack.c.l.b16 %v2234
        %v2277 = vunpack.c.l.b16 %v2235
        %v2278 = vunpack.c.l.b16 %v2236
        %v2279 = vunpack.c.l.b16 %v2237
        %v2280 = vunpack.c.l.b16 %v2238
        %v2281 = vunpack.c.l.b16 %v2239
        %v2282 = vpack.c.b16 %v2263, %v2262
        %v2283 = vpack.c.b16 %v2265, %v2264
        %v2284 = vpack.c.b16 %v2267, %v2266
        %v2285 = vpack.c.b16 %v2269, %v2268
        %v2286 = vpack.c.b16 %v2271, %v2270
        %v2287 = vpack.c.b16 %v2273, %v2272
        %v2288 = vpack.c.b16 %v2275, %v2274
        %v2289 = vpack.c.b16 %v2277, %v2276
        %v2290 = vpack.c.b16 %v2279, %v2278
        %v2291 = vpack.c.b16 %v2281, %v2280
        %v2293 = vsel %vm559, %v2282, 0
        %v2296 = vsel %vm559, %v2283, 0
        %v2299 = vsel %vm559, %v2284, 0
        %v2302 = vsel %vm559, %v2285, 0
        %v2305 = vsel %vm559, %v2286, 0
        %v2308 = vsel %vm559, %v2287, 0
        %v2311 = vsel %vm559, %v2288, 0
        %v2314 = vsel %vm559, %v2289, 0
        %v2317 = vsel %vm559, %v2290, 0
        %v2320 = vsel %vm559, %v2291, 0
        %v2323 = vsel %vm590, %v2241, 0
        %2325 = vmatprep.subr.bf16.mxu0 0
        %2326 = vmatpush1.bf16.msra.mxu0 %v2323
        %2327 = vmatprep.subr.bf16.mxu0 0
        %2328 = vmatpush1.bf16.msra.mxu0 0
        %2329 = vmatprep.subr.bf16.mxu0 0
        %2330 = vmatpush1.bf16.msra.mxu0 0
        %2331 = vmatprep.subr.bf16.mxu0 0
        %2332 = vmatpush1.bf16.msra.mxu0 0
        %2333 = vmatprep.subr.bf16.mxu0 0
        %2334 = vmatpush1.bf16.msra.mxu0 0
        %2335 = vmatprep.subr.bf16.mxu0 0
        %2336 = vmatpush1.bf16.msra.mxu0 0
        %2337 = vmatprep.subr.bf16.mxu0 0
        %2338 = vmatpush1.bf16.msra.mxu0 0
        %2339 = vmatprep.subr.bf16.mxu0 0
        %2340 = vmatpush1.bf16.msra.mxu0 0
        %2341 = vmatprep.subr.bf16.mxu0 0
        %2342 = vmatpush1.bf16.msra.mxu0 0
        %2343 = vmatprep.subr.bf16.mxu0 0
        %2344 = vmatpush1.bf16.msra.mxu0 0
        %2345 = vmatprep.subr.bf16.mxu0 0
        %2346 = vmatpush1.bf16.msra.mxu0 0
        %2347 = vmatprep.subr.bf16.mxu0 0
        %2348 = vmatpush1.bf16.msra.mxu0 0
        %2349 = vmatprep.subr.bf16.mxu0 0
        %2350 = vmatpush1.bf16.msra.mxu0 0
        %2351 = vmatprep.subr.bf16.mxu0 0
        %2352 = vmatpush1.bf16.msra.mxu0 0
        %2353 = vmatprep.subr.bf16.mxu0 0
        %2354 = vmatpush1.bf16.msra.mxu0 0
        %2355 = vmatprep.subr.bf16.mxu0 0
        %2356 = vmatpush1.bf16.msra.mxu0 0
        %2357 = vmatprep.mubr.bf16.mxu0 0
        %2358 = vmatmul.mubr.bf16.gmra.mrb[0].mxu0 %v2293
        %v2359 = vpop.f32.mrb[0].mxu0
        %v2360 = vadd.f32 0.0, %v2359
        %v2361 = vpop.f32.mrb[0].mxu0
        %v2362 = vpop.f32.mrb[0].mxu0
        %v2363 = vadd.f32 0.0, %v2362
        %v2364 = vpop.f32.mrb[0].mxu0
        %2365 = vmatprep.mubr.bf16.mxu0 0
        %2366 = vmatmul.mubr.bf16.gmra.mrb[0].mxu0 %v2296
        %v2367 = vpop.f32.mrb[0].mxu0
        %v2368 = vadd.f32 0.0, %v2367
        %v2369 = vpop.f32.mrb[0].mxu0
        %v2370 = vpop.f32.mrb[0].mxu0
        %v2371 = vadd.f32 0.0, %v2370
        %v2372 = vpop.f32.mrb[0].mxu0
        %2373 = vmatprep.mubr.bf16.mxu0 0
        %2374 = vmatmul.mubr.bf16.gmra.mrb[0].mxu0 %v2299
        %v2375 = vpop.f32.mrb[0].mxu0
        %v2376 = vadd.f32 0.0, %v2375
        %v2377 = vpop.f32.mrb[0].mxu0
        %v2378 = vpop.f32.mrb[0].mxu0
        %v2379 = vadd.f32 0.0, %v2378
        %v2380 = vpop.f32.mrb[0].mxu0
        %2381 = vmatprep.mubr.bf16.mxu0 0
        %2382 = vmatmul.mubr.bf16.gmra.mrb[0].mxu0 %v2302
        %v2383 = vpop.f32.mrb[0].mxu0
        %v2384 = vadd.f32 0.0, %v2383
        %v2385 = vpop.f32.mrb[0].mxu0
        %v2386 = vpop.f32.mrb[0].mxu0
        %v2387 = vadd.f32 0.0, %v2386
        %v2388 = vpop.f32.mrb[0].mxu0
        %2389 = vmatprep.mubr.bf16.mxu0 0
        %2390 = vmatmul.mubr.bf16.gmra.mrb[0].mxu0 %v2305
        %v2391 = vpop.f32.mrb[0].mxu0
        %v2392 = vadd.f32 0.0, %v2391
        %v2393 = vpop.f32.mrb[0].mxu0
        %v2394 = vpop.f32.mrb[0].mxu0
        %v2395 = vadd.f32 0.0, %v2394
        %v2396 = vpop.f32.mrb[0].mxu0
        %2397 = vmatprep.mubr.bf16.mxu0 0
        %2398 = vmatmul.mubr.bf16.gmra.mrb[0].mxu0 %v2308
        %v2399 = vpop.f32.mrb[0].mxu0
        %v2400 = vadd.f32 0.0, %v2399
        %v2401 = vpop.f32.mrb[0].mxu0
        %v2402 = vpop.f32.mrb[0].mxu0
        %v2403 = vadd.f32 0.0, %v2402
        %v2404 = vpop.f32.mrb[0].mxu0
        %2405 = vmatprep.mubr.bf16.mxu0 0
        %2406 = vmatmul.mubr.bf16.gmra.mrb[0].mxu0 %v2311
        %v2407 = vpop.f32.mrb[0].mxu0
        %v2408 = vadd.f32 0.0, %v2407
        %v2409 = vpop.f32.mrb[0].mxu0
        %v2410 = vpop.f32.mrb[0].mxu0
        %v2411 = vadd.f32 0.0, %v2410
        %v2412 = vpop.f32.mrb[0].mxu0
        %2413 = vmatprep.mubr.bf16.mxu0 0
        %2414 = vmatmul.mubr.bf16.gmra.mrb[0].mxu0 %v2314
        %v2415 = vpop.f32.mrb[0].mxu0
        %v2416 = vadd.f32 0.0, %v2415
        %v2417 = vpop.f32.mrb[0].mxu0
        %v2418 = vpop.f32.mrb[0].mxu0
        %v2419 = vadd.f32 0.0, %v2418
        %v2420 = vpop.f32.mrb[0].mxu0
        %2421 = vmatprep.mubr.bf16.mxu0 0
        %2422 = vmatmul.mubr.bf16.gmra.mrb[0].mxu0 %v2317
        %v2423 = vpop.f32.mrb[0].mxu0
        %v2424 = vadd.f32 0.0, %v2423
        %v2425 = vpop.f32.mrb[0].mxu0
        %v2426 = vpop.f32.mrb[0].mxu0
        %v2427 = vadd.f32 0.0, %v2426
        %v2428 = vpop.f32.mrb[0].mxu0
        %2429 = vmatprep.mubr.bf16.mxu0 0
        %2430 = vmatmul.mubr.bf16.gmra.mrb[0].mxu0 %v2320
        %v2431 = vpop.f32.mrb[0].mxu0
        %v2432 = vadd.f32 0.0, %v2431
        %v2433 = vpop.f32.mrb[0].mxu0
        %v2434 = vpop.f32.mrb[0].mxu0
        %v2435 = vadd.f32 0.0, %v2434
        %v2436 = vpop.f32.mrb[0].mxu0
        %2437 = vdwg.mxu0
        %v2438 = vadd.f32 %v2199, %v2360
        %v2439 = vadd.f32 %v2200, %v2363
        %v2440 = vadd.f32 %v2201, %v2368
        %v2441 = vadd.f32 %v2202, %v2371
        %v2442 = vadd.f32 %v2203, %v2376
        %v2443 = vadd.f32 %v2204, %v2379
        %v2444 = vadd.f32 %v2205, %v2384
        %v2445 = vadd.f32 %v2206, %v2387
        %v2446 = vadd.f32 %v2207, %v2392
        %v2447 = vadd.f32 %v2208, %v2395
        %v2448 = vadd.f32 %v2209, %v2400
        %v2449 = vadd.f32 %v2210, %v2403
        %v2450 = vadd.f32 %v2211, %v2408
        %v2451 = vadd.f32 %v2212, %v2411
        %v2452 = vadd.f32 %v2213, %v2416
        %v2453 = vadd.f32 %v2214, %v2419
        %v2454 = vadd.f32 %v2215, %v2424
        %v2455 = vadd.f32 %v2216, %v2427
        %v2456 = vadd.f32 %v2217, %v2432
        %v2457 = vadd.f32 %v2218, %v2435
        %v2458 = vld [vmem:[%s2219] sm:$0xf]
        %v2459 = vld [vmem:[%s2219 + $0x4] sm:$0xf]
        %v2460 = vld [vmem:[%s2219 + $0x8] sm:$0x1]
        %v2461 = vld [vmem:[%s2219 + $0xc] sm:$0xf]
        %v2462 = vld [vmem:[%s2219 + $0x10] sm:$0xf]
        %v2463 = vld [vmem:[%s2219 + $0x14] sm:$0x1]
        %v2464 = vld [vmem:[%s2219 + $0x18] sm:$0xf]
        %v2465 = vld [vmem:[%s2219 + $0x1c] sm:$0xf]
        %v2466 = vld [vmem:[%s2219 + $0x20] sm:$0x1]
        %v2467 = vld [vmem:[%s2219 + $0x24] sm:$0xf]
        %v2468 = vld [vmem:[%s2219 + $0x28] sm:$0xf]
        %v2469 = vld [vmem:[%s2219 + $0x2c] sm:$0x1]
        %v2470 = vld [vmem:[%s2219 + $0x30] sm:$0xf]
        %v2471 = vld [vmem:[%s2219 + $0x34] sm:$0xf]
        %v2472 = vld [vmem:[%s2219 + $0x38] sm:$0x1]
        %v2473 = vld [vmem:[%s2219 + $0x3c] sm:$0xf]
        %v2474 = vld [vmem:[%s2219 + $0x40] sm:$0xf]
        %v2475 = vld [vmem:[%s2219 + $0x44] sm:$0x1]
        %v2476 = vld [vmem:[%s2219 + $0x48] sm:$0xf]
        %v2477 = vld [vmem:[%s2219 + $0x4c] sm:$0xf]
        %v2478 = vld [vmem:[%s2219 + $0x50] sm:$0x1]
        %v2479 = vld [vmem:[%s2219 + $0x54] sm:$0xf]
        %v2480 = vld [vmem:[%s2219 + $0x58] sm:$0xf]
        %v2481 = vld [vmem:[%s2219 + $0x5c] sm:$0x1]
        %v2482 = vld [vmem:[%s2219 + $0x60] sm:$0xf]
        %v2483 = vld [vmem:[%s2219 + $0x64] sm:$0xf]
        %v2484 = vld [vmem:[%s2219 + $0x68] sm:$0x1]
        %v2485 = vld [vmem:[%s2219 + $0x6c] sm:$0xf]
        %v2486 = vld [vmem:[%s2219 + $0x70] sm:$0xf]
        %v2487 = vld [vmem:[%s2219 + $0x74] sm:$0x1]
        %v2489 = vshrl.u32 %v2458, 16
        %v2491 = vrot.slane %v2489, 4
        %v2492 = vshll.u32 %v2458, 16
        %v2494 = vrot.slane %v2492, 5
        %v2495 = vor.u32 %v2491, %v2494
        %v2496 = vrot.slane %v2495, 4
        %v2498 = vshll.u32 %v2459, 16
        %v2500 = vrot.slane %v2498, 5
        %v2501 = vsel %vm286, %v2496, %v2500
        %v2502 = vshrl.u32 %v2459, 16
        %v2504 = vrot.slane %v2502, 4
        %v2505 = vor.u32 %v2504, %v2500
        %v2506 = vrot.slane %v2505, 4
        %v2508 = vshll.u32 %v2460, 16
        %v2510 = vrot.slane %v2508, 5
        %v2511 = vsel %vm286, %v2506, %v2510
        %v2513 = vshrl.u32 %v2461, 16
        %v2515 = vrot.slane %v2513, 4
        %v2516 = vshll.u32 %v2461, 16
        %v2518 = vrot.slane %v2516, 5
        %v2519 = vor.u32 %v2515, %v2518
        %v2520 = vrot.slane %v2519, 4
        %v2522 = vshll.u32 %v2462, 16
        %v2524 = vrot.slane %v2522, 5
        %v2525 = vsel %vm286, %v2520, %v2524
        %v2526 = vshrl.u32 %v2462, 16
        %v2528 = vrot.slane %v2526, 4
        %v2529 = vor.u32 %v2528, %v2524
        %v2530 = vrot.slane %v2529, 4
        %v2532 = vshll.u32 %v2463, 16
        %v2534 = vrot.slane %v2532, 5
        %v2535 = vsel %vm286, %v2530, %v2534
        %v2537 = vshrl.u32 %v2464, 16
        %v2539 = vrot.slane %v2537, 4
        %v2540 = vshll.u32 %v2464, 16
        %v2542 = vrot.slane %v2540, 5
        %v2543 = vor.u32 %v2539, %v2542
        %v2544 = vrot.slane %v2543, 4
        %v2546 = vshll.u32 %v2465, 16
        %v2548 = vrot.slane %v2546, 5
        %v2549 = vsel %vm286, %v2544, %v2548
        %v2550 = vshrl.u32 %v2465, 16
        %v2552 = vrot.slane %v2550, 4
        %v2553 = vor.u32 %v2552, %v2548
        %v2554 = vrot.slane %v2553, 4
        %v2556 = vshll.u32 %v2466, 16
        %v2558 = vrot.slane %v2556, 5
        %v2559 = vsel %vm286, %v2554, %v2558
        %v2561 = vshrl.u32 %v2467, 16
        %v2563 = vrot.slane %v2561, 4
        %v2564 = vshll.u32 %v2467, 16
        %v2566 = vrot.slane %v2564, 5
        %v2567 = vor.u32 %v2563, %v2566
        %v2568 = vrot.slane %v2567, 4
        %v2570 = vshll.u32 %v2468, 16
        %v2572 = vrot.slane %v2570, 5
        %v2573 = vsel %vm286, %v2568, %v2572
        %v2574 = vshrl.u32 %v2468, 16
        %v2576 = vrot.slane %v2574, 4
        %v2577 = vor.u32 %v2576, %v2572
        %v2578 = vrot.slane %v2577, 4
        %v2580 = vshll.u32 %v2469, 16
        %v2582 = vrot.slane %v2580, 5
        %v2583 = vsel %vm286, %v2578, %v2582
        %v2585 = vshrl.u32 %v2470, 16
        %v2587 = vrot.slane %v2585, 4
        %v2588 = vshll.u32 %v2470, 16
        %v2590 = vrot.slane %v2588, 5
        %v2591 = vor.u32 %v2587, %v2590
        %v2592 = vrot.slane %v2591, 4
        %v2594 = vshll.u32 %v2471, 16
        %v2596 = vrot.slane %v2594, 5
        %v2597 = vsel %vm286, %v2592, %v2596
        %v2598 = vshrl.u32 %v2471, 16
        %v2600 = vrot.slane %v2598, 4
        %v2601 = vor.u32 %v2600, %v2596
        %v2602 = vrot.slane %v2601, 4
        %v2604 = vshll.u32 %v2472, 16
        %v2606 = vrot.slane %v2604, 5
        %v2607 = vsel %vm286, %v2602, %v2606
        %v2609 = vshrl.u32 %v2473, 16
        %v2611 = vrot.slane %v2609, 4
        %v2612 = vshll.u32 %v2473, 16
        %v2614 = vrot.slane %v2612, 5
        %v2615 = vor.u32 %v2611, %v2614
        %v2616 = vrot.slane %v2615, 4
        %v2618 = vshll.u32 %v2474, 16
        %v2620 = vrot.slane %v2618, 5
        %v2621 = vsel %vm286, %v2616, %v2620
        %v2622 = vshrl.u32 %v2474, 16
        %v2624 = vrot.slane %v2622, 4
        %v2625 = vor.u32 %v2624, %v2620
        %v2626 = vrot.slane %v2625, 4
        %v2628 = vshll.u32 %v2475, 16
        %v2630 = vrot.slane %v2628, 5
        %v2631 = vsel %vm286, %v2626, %v2630
        %v2633 = vshrl.u32 %v2476, 16
        %v2635 = vrot.slane %v2633, 4
        %v2636 = vshll.u32 %v2476, 16
        %v2638 = vrot.slane %v2636, 5
        %v2639 = vor.u32 %v2635, %v2638
        %v2640 = vrot.slane %v2639, 4
        %v2642 = vshll.u32 %v2477, 16
        %v2644 = vrot.slane %v2642, 5
        %v2645 = vsel %vm286, %v2640, %v2644
        %v2646 = vshrl.u32 %v2477, 16
        %v2648 = vrot.slane %v2646, 4
        %v2649 = vor.u32 %v2648, %v2644
        %v2650 = vrot.slane %v2649, 4
        %v2652 = vshll.u32 %v2478, 16
        %v2654 = vrot.slane %v2652, 5
        %v2655 = vsel %vm286, %v2650, %v2654
        %v2657 = vshrl.u32 %v2479, 16
        %v2659 = vrot.slane %v2657, 4
        %v2660 = vshll.u32 %v2479, 16
        %v2662 = vrot.slane %v2660, 5
        %v2663 = vor.u32 %v2659, %v2662
        %v2664 = vrot.slane %v2663, 4
        %v2666 = vshll.u32 %v2480, 16
        %v2668 = vrot.slane %v2666, 5
        %v2669 = vsel %vm286, %v2664, %v2668
        %v2670 = vshrl.u32 %v2480, 16
        %v2672 = vrot.slane %v2670, 4
        %v2673 = vor.u32 %v2672, %v2668
        %v2674 = vrot.slane %v2673, 4
        %v2676 = vshll.u32 %v2481, 16
        %v2678 = vrot.slane %v2676, 5
        %v2679 = vsel %vm286, %v2674, %v2678
        %v2681 = vshrl.u32 %v2482, 16
        %v2683 = vrot.slane %v2681, 4
        %v2684 = vshll.u32 %v2482, 16
        %v2686 = vrot.slane %v2684, 5
        %v2687 = vor.u32 %v2683, %v2686
        %v2688 = vrot.slane %v2687, 4
        %v2690 = vshll.u32 %v2483, 16
        %v2692 = vrot.slane %v2690, 5
        %v2693 = vsel %vm286, %v2688, %v2692
        %v2694 = vshrl.u32 %v2483, 16
        %v2696 = vrot.slane %v2694, 4
        %v2697 = vor.u32 %v2696, %v2692
        %v2698 = vrot.slane %v2697, 4
        %v2700 = vshll.u32 %v2484, 16
        %v2702 = vrot.slane %v2700, 5
        %v2703 = vsel %vm286, %v2698, %v2702
        %v2705 = vshrl.u32 %v2485, 16
        %v2707 = vrot.slane %v2705, 4
        %v2708 = vshll.u32 %v2485, 16
        %v2710 = vrot.slane %v2708, 5
        %v2711 = vor.u32 %v2707, %v2710
        %v2712 = vrot.slane %v2711, 4
        %v2714 = vshll.u32 %v2486, 16
        %v2716 = vrot.slane %v2714, 5
        %v2717 = vsel %vm286, %v2712, %v2716
        %v2718 = vshrl.u32 %v2486, 16
        %v2720 = vrot.slane %v2718, 4
        %v2721 = vor.u32 %v2720, %v2716
        %v2722 = vrot.slane %v2721, 4
        %v2724 = vshll.u32 %v2487, 16
        %v2726 = vrot.slane %v2724, 5
        %v2727 = vsel %vm286, %v2722, %v2726
        %s2728 = scalar_lea.vmem %s1, 14
        %v2729 = vld [vmem:[%s2728] sm:$0x3]
        %v2730 = vunpack.c.l.b16 %v2501
        %v2731 = vunpack.c.l.b16 %v2511
        %v2732 = vunpack.c.l.b16 %v2525
        %v2733 = vunpack.c.l.b16 %v2535
        %v2734 = vunpack.c.l.b16 %v2549
        %v2735 = vunpack.c.l.b16 %v2559
        %v2736 = vunpack.c.l.b16 %v2573
        %v2737 = vunpack.c.l.b16 %v2583
        %v2738 = vunpack.c.l.b16 %v2597
        %v2739 = vunpack.c.l.b16 %v2607
        %v2740 = vunpack.c.l.b16 %v2621
        %v2741 = vunpack.c.l.b16 %v2631
        %v2742 = vunpack.c.l.b16 %v2645
        %v2743 = vunpack.c.l.b16 %v2655
        %v2744 = vunpack.c.l.b16 %v2669
        %v2745 = vunpack.c.l.b16 %v2679
        %v2746 = vunpack.c.l.b16 %v2693
        %v2747 = vunpack.c.l.b16 %v2703
        %v2748 = vunpack.c.l.b16 %v2717
        %v2749 = vunpack.c.l.b16 %v2727
        %v2750 = vpack.c.b16 %v2731, %v2730
        %v2751 = vpack.c.b16 %v2733, %v2732
        %v2752 = vpack.c.b16 %v2735, %v2734
        %v2753 = vpack.c.b16 %v2737, %v2736
        %v2754 = vpack.c.b16 %v2739, %v2738
        %v2755 = vpack.c.b16 %v2741, %v2740
        %v2756 = vpack.c.b16 %v2743, %v2742
        %v2757 = vpack.c.b16 %v2745, %v2744
        %v2758 = vpack.c.b16 %v2747, %v2746
        %v2759 = vpack.c.b16 %v2749, %v2748
        %v2761 = vsel %vm559, %v2750, 0
        %v2764 = vsel %vm559, %v2751, 0
        %v2767 = vsel %vm559, %v2752, 0
        %v2770 = vsel %vm559, %v2753, 0
        %v2773 = vsel %vm559, %v2754, 0
        %v2776 = vsel %vm559, %v2755, 0
        %v2779 = vsel %vm559, %v2756, 0
        %v2782 = vsel %vm559, %v2757, 0
        %v2785 = vsel %vm559, %v2758, 0
        %v2788 = vsel %vm559, %v2759, 0
        %v2791 = vsel %vm590, %v2729, 0
        %2793 = vmatprep.subr.bf16.mxu0 0
        %2794 = vmatpush1.bf16.msra.mxu0 %v2791
        %2795 = vmatprep.subr.bf16.mxu0 0
        %2796 = vmatpush1.bf16.msra.mxu0 0
        %2797 = vmatprep.subr.bf16.mxu0 0
        %2798 = vmatpush1.bf16.msra.mxu0 0
        %2799 = vmatprep.subr.bf16.mxu0 0
        %2800 = vmatpush1.bf16.msra.mxu0 0
        %2801 = vmatprep.subr.bf16.mxu0 0
        %2802 = vmatpush1.bf16.msra.mxu0 0
        %2803 = vmatprep.subr.bf16.mxu0 0
        %2804 = vmatpush1.bf16.msra.mxu0 0
        %2805 = vmatprep.subr.bf16.mxu0 0
        %2806 = vmatpush1.bf16.msra.mxu0 0
        %2807 = vmatprep.subr.bf16.mxu0 0
        %2808 = vmatpush1.bf16.msra.mxu0 0
        %2809 = vmatprep.subr.bf16.mxu0 0
        %2810 = vmatpush1.bf16.msra.mxu0 0
        %2811 = vmatprep.subr.bf16.mxu0 0
        %2812 = vmatpush1.bf16.msra.mxu0 0
        %2813 = vmatprep.subr.bf16.mxu0 0
        %2814 = vmatpush1.bf16.msra.mxu0 0
        %2815 = vmatprep.subr.bf16.mxu0 0
        %2816 = vmatpush1.bf16.msra.mxu0 0
        %2817 = vmatprep.subr.bf16.mxu0 0
        %2818 = vmatpush1.bf16.msra.mxu0 0
        %2819 = vmatprep.subr.bf16.mxu0 0
        %2820 = vmatpush1.bf16.msra.mxu0 0
        %2821 = vmatprep.subr.bf16.mxu0 0
        %2822 = vmatpush1.bf16.msra.mxu0 0
        %2823 = vmatprep.subr.bf16.mxu0 0
        %2824 = vmatpush1.bf16.msra.mxu0 0
        %2825 = vmatprep.mubr.bf16.mxu0 0
        %2826 = vmatmul.mubr.bf16.gmra.mrb[0].mxu0 %v2761
        %v2827 = vpop.f32.mrb[0].mxu0
        %v2828 = vadd.f32 0.0, %v2827
        %v2829 = vpop.f32.mrb[0].mxu0
        %v2830 = vpop.f32.mrb[0].mxu0
        %v2831 = vadd.f32 0.0, %v2830
        %v2832 = vpop.f32.mrb[0].mxu0
        %2833 = vmatprep.mubr.bf16.mxu0 0
        %2834 = vmatmul.mubr.bf16.gmra.mrb[0].mxu0 %v2764
        %v2835 = vpop.f32.mrb[0].mxu0
        %v2836 = vadd.f32 0.0, %v2835
        %v2837 = vpop.f32.mrb[0].mxu0
        %v2838 = vpop.f32.mrb[0].mxu0
        %v2839 = vadd.f32 0.0, %v2838
        %v2840 = vpop.f32.mrb[0].mxu0
        %2841 = vmatprep.mubr.bf16.mxu0 0
        %2842 = vmatmul.mubr.bf16.gmra.mrb[0].mxu0 %v2767
        %v2843 = vpop.f32.mrb[0].mxu0
        %v2844 = vadd.f32 0.0, %v2843
        %v2845 = vpop.f32.mrb[0].mxu0
        %v2846 = vpop.f32.mrb[0].mxu0
        %v2847 = vadd.f32 0.0, %v2846
        %v2848 = vpop.f32.mrb[0].mxu0
        %2849 = vmatprep.mubr.bf16.mxu0 0
        %2850 = vmatmul.mubr.bf16.gmra.mrb[0].mxu0 %v2770
        %v2851 = vpop.f32.mrb[0].mxu0
        %v2852 = vadd.f32 0.0, %v2851
        %v2853 = vpop.f32.mrb[0].mxu0
        %v2854 = vpop.f32.mrb[0].mxu0
        %v2855 = vadd.f32 0.0, %v2854
        %v2856 = vpop.f32.mrb[0].mxu0
        %2857 = vmatprep.mubr.bf16.mxu0 0
        %2858 = vmatmul.mubr.bf16.gmra.mrb[0].mxu0 %v2773
        %v2859 = vpop.f32.mrb[0].mxu0
        %v2860 = vadd.f32 0.0, %v2859
        %v2861 = vpop.f32.mrb[0].mxu0
        %v2862 = vpop.f32.mrb[0].mxu0
        %v2863 = vadd.f32 0.0, %v2862
        %v2864 = vpop.f32.mrb[0].mxu0
        %2865 = vmatprep.mubr.bf16.mxu0 0
        %2866 = vmatmul.mubr.bf16.gmra.mrb[0].mxu0 %v2776
        %v2867 = vpop.f32.mrb[0].mxu0
        %v2868 = vadd.f32 0.0, %v2867
        %v2869 = vpop.f32.mrb[0].mxu0
        %v2870 = vpop.f32.mrb[0].mxu0
        %v2871 = vadd.f32 0.0, %v2870
        %v2872 = vpop.f32.mrb[0].mxu0
        %2873 = vmatprep.mubr.bf16.mxu0 0
        %2874 = vmatmul.mubr.bf16.gmra.mrb[0].mxu0 %v2779
        %v2875 = vpop.f32.mrb[0].mxu0
        %v2876 = vadd.f32 0.0, %v2875
        %v2877 = vpop.f32.mrb[0].mxu0
        %v2878 = vpop.f32.mrb[0].mxu0
        %v2879 = vadd.f32 0.0, %v2878
        %v2880 = vpop.f32.mrb[0].mxu0
        %2881 = vmatprep.mubr.bf16.mxu0 0
        %2882 = vmatmul.mubr.bf16.gmra.mrb[0].mxu0 %v2782
        %v2883 = vpop.f32.mrb[0].mxu0
        %v2884 = vadd.f32 0.0, %v2883
        %v2885 = vpop.f32.mrb[0].mxu0
        %v2886 = vpop.f32.mrb[0].mxu0
        %v2887 = vadd.f32 0.0, %v2886
        %v2888 = vpop.f32.mrb[0].mxu0
        %2889 = vmatprep.mubr.bf16.mxu0 0
        %2890 = vmatmul.mubr.bf16.gmra.mrb[0].mxu0 %v2785
        %v2891 = vpop.f32.mrb[0].mxu0
        %v2892 = vadd.f32 0.0, %v2891
        %v2893 = vpop.f32.mrb[0].mxu0
        %v2894 = vpop.f32.mrb[0].mxu0
        %v2895 = vadd.f32 0.0, %v2894
        %v2896 = vpop.f32.mrb[0].mxu0
        %2897 = vmatprep.mubr.bf16.mxu0 0
        %2898 = vmatmul.mubr.bf16.gmra.mrb[0].mxu0 %v2788
        %v2899 = vpop.f32.mrb[0].mxu0
        %v2900 = vadd.f32 0.0, %v2899
        %v2901 = vpop.f32.mrb[0].mxu0
        %v2902 = vpop.f32.mrb[0].mxu0
        %v2903 = vadd.f32 0.0, %v2902
        %v2904 = vpop.f32.mrb[0].mxu0
        %2905 = vdwg.mxu0
        %v2906 = vadd.f32 %v2438, %v2828
        %v2907 = vadd.f32 %v2439, %v2831
        %v2908 = vadd.f32 %v2440, %v2836
        %v2909 = vadd.f32 %v2441, %v2839
        %v2910 = vadd.f32 %v2442, %v2844
        %v2911 = vadd.f32 %v2443, %v2847
        %v2912 = vadd.f32 %v2444, %v2852
        %v2913 = vadd.f32 %v2445, %v2855
        %v2914 = vadd.f32 %v2446, %v2860
        %v2915 = vadd.f32 %v2447, %v2863
        %v2916 = vadd.f32 %v2448, %v2868
        %v2917 = vadd.f32 %v2449, %v2871
        %v2918 = vadd.f32 %v2450, %v2876
        %v2919 = vadd.f32 %v2451, %v2879
        %v2920 = vadd.f32 %v2452, %v2884
        %v2921 = vadd.f32 %v2453, %v2887
        %v2922 = vadd.f32 %v2454, %v2892
        %v2923 = vadd.f32 %v2455, %v2895
        %v2924 = vadd.f32 %v2456, %v2900
        %v2925 = vadd.f32 %v2457, %v2903
        %v2926 = vld [vmem:[%s2219] sm:$0xe]
        %v2927 = vld [vmem:[%s2219 + $0xc] sm:$0xe]
        %v2928 = vld [vmem:[%s2219 + $0x18] sm:$0xe]
        %v2929 = vld [vmem:[%s2219 + $0x24] sm:$0xe]
        %v2930 = vld [vmem:[%s2219 + $0x30] sm:$0xe]
        %v2931 = vld [vmem:[%s2219 + $0x3c] sm:$0xe]
        %v2932 = vld [vmem:[%s2219 + $0x48] sm:$0xe]
        %v2933 = vld [vmem:[%s2219 + $0x54] sm:$0xe]
        %v2934 = vld [vmem:[%s2219 + $0x60] sm:$0xe]
        %v2935 = vld [vmem:[%s2219 + $0x6c] sm:$0xe]
        %v2966 = vrot.slane %v2926, 5
        %v2967 = vrot.slane %v2966, 4
        %v2968 = vrot.slane %v2459, 5
        %v2969 = vsel %vm935, %v2967, %v2968
        %v2970 = vrot.slane %v2968, 4
        %v2971 = vrot.slane %v2460, 5
        %v2972 = vsel %vm935, %v2970, %v2971
        %v2973 = vrot.slane %v2927, 5
        %v2974 = vrot.slane %v2973, 4
        %v2975 = vrot.slane %v2462, 5
        %v2976 = vsel %vm935, %v2974, %v2975
        %v2977 = vrot.slane %v2975, 4
        %v2978 = vrot.slane %v2463, 5
        %v2979 = vsel %vm935, %v2977, %v2978
        %v2980 = vrot.slane %v2928, 5
        %v2981 = vrot.slane %v2980, 4
        %v2982 = vrot.slane %v2465, 5
        %v2983 = vsel %vm935, %v2981, %v2982
        %v2984 = vrot.slane %v2982, 4
        %v2985 = vrot.slane %v2466, 5
        %v2986 = vsel %vm935, %v2984, %v2985
        %v2987 = vrot.slane %v2929, 5
        %v2988 = vrot.slane %v2987, 4
        %v2989 = vrot.slane %v2468, 5
        %v2990 = vsel %vm935, %v2988, %v2989
        %v2991 = vrot.slane %v2989, 4
        %v2992 = vrot.slane %v2469, 5
        %v2993 = vsel %vm935, %v2991, %v2992
        %v2994 = vrot.slane %v2930, 5
        %v2995 = vrot.slane %v2994, 4
        %v2996 = vrot.slane %v2471, 5
        %v2997 = vsel %vm935, %v2995, %v2996
        %v2998 = vrot.slane %v2996, 4
        %v2999 = vrot.slane %v2472, 5
        %v3000 = vsel %vm935, %v2998, %v2999
        %v3001 = vrot.slane %v2931, 5
        %v3002 = vrot.slane %v3001, 4
        %v3003 = vrot.slane %v2474, 5
        %v3004 = vsel %vm935, %v3002, %v3003
        %v3005 = vrot.slane %v3003, 4
        %v3006 = vrot.slane %v2475, 5
        %v3007 = vsel %vm935, %v3005, %v3006
        %v3008 = vrot.slane %v2932, 5
        %v3009 = vrot.slane %v3008, 4
        %v3010 = vrot.slane %v2477, 5
        %v3011 = vsel %vm935, %v3009, %v3010
        %v3012 = vrot.slane %v3010, 4
        %v3013 = vrot.slane %v2478, 5
        %v3014 = vsel %vm935, %v3012, %v3013
        %v3015 = vrot.slane %v2933, 5
        %v3016 = vrot.slane %v3015, 4
        %v3017 = vrot.slane %v2480, 5
        %v3018 = vsel %vm935, %v3016, %v3017
        %v3019 = vrot.slane %v3017, 4
        %v3020 = vrot.slane %v2481, 5
        %v3021 = vsel %vm935, %v3019, %v3020
        %v3022 = vrot.slane %v2934, 5
        %v3023 = vrot.slane %v3022, 4
        %v3024 = vrot.slane %v2483, 5
        %v3025 = vsel %vm935, %v3023, %v3024
        %v3026 = vrot.slane %v3024, 4
        %v3027 = vrot.slane %v2484, 5
        %v3028 = vsel %vm935, %v3026, %v3027
        %v3029 = vrot.slane %v2935, 5
        %v3030 = vrot.slane %v3029, 4
        %v3031 = vrot.slane %v2486, 5
        %v3032 = vsel %vm935, %v3030, %v3031
        %v3033 = vrot.slane %v3031, 4
        %v3034 = vrot.slane %v2487, 5
        %v3035 = vsel %vm935, %v3033, %v3034
        %s3036 = scalar_lea.vmem %s1, 16
        %v3037 = vld [vmem:[%s3036] sm:$0x3]
        %v3038 = vunpack.c.l.b16 %v2969
        %v3039 = vunpack.c.l.b16 %v2972
        %v3040 = vunpack.c.l.b16 %v2976
        %v3041 = vunpack.c.l.b16 %v2979
        %v3042 = vunpack.c.l.b16 %v2983
        %v3043 = vunpack.c.l.b16 %v2986
        %v3044 = vunpack.c.l.b16 %v2990
        %v3045 = vunpack.c.l.b16 %v2993
        %v3046 = vunpack.c.l.b16 %v2997
        %v3047 = vunpack.c.l.b16 %v3000
        %v3048 = vunpack.c.l.b16 %v3004
        %v3049 = vunpack.c.l.b16 %v3007
        %v3050 = vunpack.c.l.b16 %v3011
        %v3051 = vunpack.c.l.b16 %v3014
        %v3052 = vunpack.c.l.b16 %v3018
        %v3053 = vunpack.c.l.b16 %v3021
        %v3054 = vunpack.c.l.b16 %v3025
        %v3055 = vunpack.c.l.b16 %v3028
        %v3056 = vunpack.c.l.b16 %v3032
        %v3057 = vunpack.c.l.b16 %v3035
        %v3058 = vpack.c.b16 %v3039, %v3038
        %v3059 = vpack.c.b16 %v3041, %v3040
        %v3060 = vpack.c.b16 %v3043, %v3042
        %v3061 = vpack.c.b16 %v3045, %v3044
        %v3062 = vpack.c.b16 %v3047, %v3046
        %v3063 = vpack.c.b16 %v3049, %v3048
        %v3064 = vpack.c.b16 %v3051, %v3050
        %v3065 = vpack.c.b16 %v3053, %v3052
        %v3066 = vpack.c.b16 %v3055, %v3054
        %v3067 = vpack.c.b16 %v3057, %v3056
        %v3069 = vsel %vm559, %v3058, 0
        %v3072 = vsel %vm559, %v3059, 0
        %v3075 = vsel %vm559, %v3060, 0
        %v3078 = vsel %vm559, %v3061, 0
        %v3081 = vsel %vm559, %v3062, 0
        %v3084 = vsel %vm559, %v3063, 0
        %v3087 = vsel %vm559, %v3064, 0
        %v3090 = vsel %vm559, %v3065, 0
        %v3093 = vsel %vm559, %v3066, 0
        %v3096 = vsel %vm559, %v3067, 0
        %v3099 = vsel %vm590, %v3037, 0
        %3101 = vmatprep.subr.bf16.mxu0 0
        %3102 = vmatpush1.bf16.msra.mxu0 %v3099
        %3103 = vmatprep.subr.bf16.mxu0 0
        %3104 = vmatpush1.bf16.msra.mxu0 0
        %3105 = vmatprep.subr.bf16.mxu0 0
        %3106 = vmatpush1.bf16.msra.mxu0 0
        %3107 = vmatprep.subr.bf16.mxu0 0
        %3108 = vmatpush1.bf16.msra.mxu0 0
        %3109 = vmatprep.subr.bf16.mxu0 0
        %3110 = vmatpush1.bf16.msra.mxu0 0
        %3111 = vmatprep.subr.bf16.mxu0 0
        %3112 = vmatpush1.bf16.msra.mxu0 0
        %3113 = vmatprep.subr.bf16.mxu0 0
        %3114 = vmatpush1.bf16.msra.mxu0 0
        %3115 = vmatprep.subr.bf16.mxu0 0
        %3116 = vmatpush1.bf16.msra.mxu0 0
        %3117 = vmatprep.subr.bf16.mxu0 0
        %3118 = vmatpush1.bf16.msra.mxu0 0
        %3119 = vmatprep.subr.bf16.mxu0 0
        %3120 = vmatpush1.bf16.msra.mxu0 0
        %3121 = vmatprep.subr.bf16.mxu0 0
        %3122 = vmatpush1.bf16.msra.mxu0 0
        %3123 = vmatprep.subr.bf16.mxu0 0
        %3124 = vmatpush1.bf16.msra.mxu0 0
        %3125 = vmatprep.subr.bf16.mxu0 0
        %3126 = vmatpush1.bf16.msra.mxu0 0
        %3127 = vmatprep.subr.bf16.mxu0 0
        %3128 = vmatpush1.bf16.msra.mxu0 0
        %3129 = vmatprep.subr.bf16.mxu0 0
        %3130 = vmatpush1.bf16.msra.mxu0 0
        %3131 = vmatprep.subr.bf16.mxu0 0
        %3132 = vmatpush1.bf16.msra.mxu0 0
        %3133 = vmatprep.mubr.bf16.mxu0 0
        %3134 = vmatmul.mubr.bf16.gmra.mrb[0].mxu0 %v3069
        %v3135 = vpop.f32.mrb[0].mxu0
        %v3136 = vadd.f32 0.0, %v3135
        %v3137 = vpop.f32.mrb[0].mxu0
        %v3138 = vpop.f32.mrb[0].mxu0
        %v3139 = vadd.f32 0.0, %v3138
        %v3140 = vpop.f32.mrb[0].mxu0
        %3141 = vmatprep.mubr.bf16.mxu0 0
        %3142 = vmatmul.mubr.bf16.gmra.mrb[0].mxu0 %v3072
        %v3143 = vpop.f32.mrb[0].mxu0
        %v3144 = vadd.f32 0.0, %v3143
        %v3145 = vpop.f32.mrb[0].mxu0
        %v3146 = vpop.f32.mrb[0].mxu0
        %v3147 = vadd.f32 0.0, %v3146
        %v3148 = vpop.f32.mrb[0].mxu0
        %3149 = vmatprep.mubr.bf16.mxu0 0
        %3150 = vmatmul.mubr.bf16.gmra.mrb[0].mxu0 %v3075
        %v3151 = vpop.f32.mrb[0].mxu0
        %v3152 = vadd.f32 0.0, %v3151
        %v3153 = vpop.f32.mrb[0].mxu0
        %v3154 = vpop.f32.mrb[0].mxu0
        %v3155 = vadd.f32 0.0, %v3154
        %v3156 = vpop.f32.mrb[0].mxu0
        %3157 = vmatprep.mubr.bf16.mxu0 0
        %3158 = vmatmul.mubr.bf16.gmra.mrb[0].mxu0 %v3078
        %v3159 = vpop.f32.mrb[0].mxu0
        %v3160 = vadd.f32 0.0, %v3159
        %v3161 = vpop.f32.mrb[0].mxu0
        %v3162 = vpop.f32.mrb[0].mxu0
        %v3163 = vadd.f32 0.0, %v3162
        %v3164 = vpop.f32.mrb[0].mxu0
        %3165 = vmatprep.mubr.bf16.mxu0 0
        %3166 = vmatmul.mubr.bf16.gmra.mrb[0].mxu0 %v3081
        %v3167 = vpop.f32.mrb[0].mxu0
        %v3168 = vadd.f32 0.0, %v3167
        %v3169 = vpop.f32.mrb[0].mxu0
        %v3170 = vpop.f32.mrb[0].mxu0
        %v3171 = vadd.f32 0.0, %v3170
        %v3172 = vpop.f32.mrb[0].mxu0
        %3173 = vmatprep.mubr.bf16.mxu0 0
        %3174 = vmatmul.mubr.bf16.gmra.mrb[0].mxu0 %v3084
        %v3175 = vpop.f32.mrb[0].mxu0
        %v3176 = vadd.f32 0.0, %v3175
        %v3177 = vpop.f32.mrb[0].mxu0
        %v3178 = vpop.f32.mrb[0].mxu0
        %v3179 = vadd.f32 0.0, %v3178
        %v3180 = vpop.f32.mrb[0].mxu0
        %3181 = vmatprep.mubr.bf16.mxu0 0
        %3182 = vmatmul.mubr.bf16.gmra.mrb[0].mxu0 %v3087
        %v3183 = vpop.f32.mrb[0].mxu0
        %v3184 = vadd.f32 0.0, %v3183
        %v3185 = vpop.f32.mrb[0].mxu0
        %v3186 = vpop.f32.mrb[0].mxu0
        %v3187 = vadd.f32 0.0, %v3186
        %v3188 = vpop.f32.mrb[0].mxu0
        %3189 = vmatprep.mubr.bf16.mxu0 0
        %3190 = vmatmul.mubr.bf16.gmra.mrb[0].mxu0 %v3090
        %v3191 = vpop.f32.mrb[0].mxu0
        %v3192 = vadd.f32 0.0, %v3191
        %v3193 = vpop.f32.mrb[0].mxu0
        %v3194 = vpop.f32.mrb[0].mxu0
        %v3195 = vadd.f32 0.0, %v3194
        %v3196 = vpop.f32.mrb[0].mxu0
        %3197 = vmatprep.mubr.bf16.mxu0 0
        %3198 = vmatmul.mubr.bf16.gmra.mrb[0].mxu0 %v3093
        %v3199 = vpop.f32.mrb[0].mxu0
        %v3200 = vadd.f32 0.0, %v3199
        %v3201 = vpop.f32.mrb[0].mxu0
        %v3202 = vpop.f32.mrb[0].mxu0
        %v3203 = vadd.f32 0.0, %v3202
        %v3204 = vpop.f32.mrb[0].mxu0
        %3205 = vmatprep.mubr.bf16.mxu0 0
        %3206 = vmatmul.mubr.bf16.gmra.mrb[0].mxu0 %v3096
        %v3207 = vpop.f32.mrb[0].mxu0
        %v3208 = vadd.f32 0.0, %v3207
        %v3209 = vpop.f32.mrb[0].mxu0
        %v3210 = vpop.f32.mrb[0].mxu0
        %v3211 = vadd.f32 0.0, %v3210
        %v3212 = vpop.f32.mrb[0].mxu0
        %3213 = vdwg.mxu0
        %v3214 = vadd.f32 %v2906, %v3136
        %v3215 = vadd.f32 %v2907, %v3139
        %v3216 = vadd.f32 %v2908, %v3144
        %v3217 = vadd.f32 %v2909, %v3147
        %v3218 = vadd.f32 %v2910, %v3152
        %v3219 = vadd.f32 %v2911, %v3155
        %v3220 = vadd.f32 %v2912, %v3160
        %v3221 = vadd.f32 %v2913, %v3163
        %v3222 = vadd.f32 %v2914, %v3168
        %v3223 = vadd.f32 %v2915, %v3171
        %v3224 = vadd.f32 %v2916, %v3176
        %v3225 = vadd.f32 %v2917, %v3179
        %v3226 = vadd.f32 %v2918, %v3184
        %v3227 = vadd.f32 %v2919, %v3187
        %v3228 = vadd.f32 %v2920, %v3192
        %v3229 = vadd.f32 %v2921, %v3195
        %v3230 = vadd.f32 %v2922, %v3200
        %v3231 = vadd.f32 %v2923, %v3203
        %v3232 = vadd.f32 %v2924, %v3208
        %v3233 = vadd.f32 %v2925, %v3211
        %v3234 = vld [vmem:[%s2] sm:$0x1]
        %v3236 = vlaneseq
        %v3237 = vshrl.u32 %v3236, 7
        %v3238 = vsub.s32 0, %v3237
        %v3239 = vrot.slane %v3234, %v3238
        %v3241 = vadd.f32 %v3214, %v3239
        %v3242 = vadd.f32 %v3215, %v3239
        %v3243 = vadd.f32 %v3216, %v3239
        %v3244 = vadd.f32 %v3217, %v3239
        %v3245 = vadd.f32 %v3218, %v3239
        %v3246 = vadd.f32 %v3219, %v3239
        %v3247 = vadd.f32 %v3220, %v3239
        %v3248 = vadd.f32 %v3221, %v3239
        %v3249 = vadd.f32 %v3222, %v3239
        %v3250 = vadd.f32 %v3223, %v3239
        %v3251 = vadd.f32 %v3224, %v3239
        %v3252 = vadd.f32 %v3225, %v3239
        %v3253 = vadd.f32 %v3226, %v3239
        %v3254 = vadd.f32 %v3227, %v3239
        %v3255 = vadd.f32 %v3228, %v3239
        %v3256 = vadd.f32 %v3229, %v3239
        %v3257 = vadd.f32 %v3230, %v3239
        %v3258 = vadd.f32 %v3231, %v3239
        %v3259 = vadd.f32 %v3232, %v3239
        %v3260 = vadd.f32 %v3233, %v3239
        %v3261 = vmax.f32 %v3241, 0.0
        %v3262 = vmax.f32 %v3242, 0.0
        %v3263 = vmax.f32 %v3243, 0.0
        %v3264 = vmax.f32 %v3244, 0.0
        %v3265 = vmax.f32 %v3245, 0.0
        %v3266 = vmax.f32 %v3246, 0.0
        %v3267 = vmax.f32 %v3247, 0.0
        %v3268 = vmax.f32 %v3248, 0.0
        %v3269 = vmax.f32 %v3249, 0.0
        %v3270 = vmax.f32 %v3250, 0.0
        %v3271 = vmax.f32 %v3251, 0.0
        %v3272 = vmax.f32 %v3252, 0.0
        %v3273 = vmax.f32 %v3253, 0.0
        %v3274 = vmax.f32 %v3254, 0.0
        %v3275 = vmax.f32 %v3255, 0.0
        %v3276 = vmax.f32 %v3256, 0.0
        %v3277 = vmax.f32 %v3257, 0.0
        %v3278 = vmax.f32 %v3258, 0.0
        %v3279 = vmax.f32 %v3259, 0.0
        %v3280 = vmax.f32 %v3260, 0.0
        %s3281 = smul.u32 %s24, 8
        %s3282 = ssub.s32 %s3281, 1
        %v3283 = vstv %s3282
        %v3284 = vadd.s32 %v3283, 1
        %v3285 = vadd.s32 %v3283, 2
        %v3286 = vadd.s32 %v3283, 3
        %v3287 = vadd.s32 %v3283, 4
        %v3288 = vadd.s32 %v3283, 5
        %v3289 = vadd.s32 %v3283, 6
        %v3290 = vadd.s32 %v3283, 7
        %v3291 = vadd.s32 %v3283, 8
        %v3292 = vadd.s32 %v3283, 9
        %vm3293 = vcmp.ge.s32.totalorder %v3283, 0
        %vm3294 = vcmp.ge.s32.totalorder %v3284, 0
        %vm3295 = vcmp.ge.s32.totalorder %v3285, 0
        %vm3296 = vcmp.ge.s32.totalorder %v3286, 0
        %vm3297 = vcmp.ge.s32.totalorder %v3287, 0
        %vm3298 = vcmp.ge.s32.totalorder %v3288, 0
        %vm3299 = vcmp.ge.s32.totalorder %v3289, 0
        %vm3300 = vcmp.ge.s32.totalorder %v3290, 0
        %vm3301 = vcmp.ge.s32.totalorder %v3291, 0
        %vm3302 = vcmp.ge.s32.totalorder %v3292, 0
        %vm3303 = vcmp.lt.s32.totalorder %v3283, 16
        %vm3304 = vcmp.lt.s32.totalorder %v3284, 16
        %vm3305 = vcmp.lt.s32.totalorder %v3285, 16
        %vm3306 = vcmp.lt.s32.totalorder %v3286, 16
        %vm3307 = vcmp.lt.s32.totalorder %v3287, 16
        %vm3308 = vcmp.lt.s32.totalorder %v3288, 16
        %vm3309 = vcmp.lt.s32.totalorder %v3289, 16
        %vm3310 = vcmp.lt.s32.totalorder %v3290, 16
        %vm3311 = vcmp.lt.s32.totalorder %v3291, 16
        %vm3312 = vcmp.lt.s32.totalorder %v3292, 16
        %vm3313 = vmand %vm3293, %vm3303
        %vm3314 = vmand %vm3294, %vm3304
        %vm3315 = vmand %vm3295, %vm3305
        %vm3316 = vmand %vm3296, %vm3306
        %vm3317 = vmand %vm3297, %vm3307
        %vm3318 = vmand %vm3298, %vm3308
        %vm3319 = vmand %vm3299, %vm3309
        %vm3320 = vmand %vm3300, %vm3310
        %vm3321 = vmand %vm3301, %vm3311
        %vm3322 = vmand %vm3302, %vm3312
        %v3323 = vsel %vm3313, 1, 0
        %v3324 = vsel %vm3314, 1, 0
        %v3325 = vsel %vm3315, 1, 0
        %v3326 = vsel %vm3316, 1, 0
        %v3327 = vsel %vm3317, 1, 0
        %v3328 = vsel %vm3318, 1, 0
        %v3329 = vsel %vm3319, 1, 0
        %v3330 = vsel %vm3320, 1, 0
        %v3331 = vsel %vm3321, 1, 0
        %v3332 = vsel %vm3322, 1, 0
        %vm3333 = vcmp.eq.s32.totalorder %v3323, 1
        %vm3334 = vcmp.eq.s32.totalorder %v3324, 1
        %vm3335 = vcmp.eq.s32.totalorder %v3325, 1
        %vm3336 = vcmp.eq.s32.totalorder %v3326, 1
        %vm3337 = vcmp.eq.s32.totalorder %v3327, 1
        %vm3338 = vcmp.eq.s32.totalorder %v3328, 1
        %vm3339 = vcmp.eq.s32.totalorder %v3329, 1
        %vm3340 = vcmp.eq.s32.totalorder %v3330, 1
        %vm3341 = vcmp.eq.s32.totalorder %v3331, 1
        %vm3342 = vcmp.eq.s32.totalorder %v3332, 1
        %v3343 = vsel %vm3333, %v3261, 0.0
        %v3344 = vsel %vm3333, %v3262, 0.0
        %v3345 = vsel %vm3334, %v3263, 0.0
        %v3346 = vsel %vm3334, %v3264, 0.0
        %v3347 = vsel %vm3335, %v3265, 0.0
        %v3348 = vsel %vm3335, %v3266, 0.0
        %v3349 = vsel %vm3336, %v3267, 0.0
        %v3350 = vsel %vm3336, %v3268, 0.0
        %v3351 = vsel %vm3337, %v3269, 0.0
        %v3352 = vsel %vm3337, %v3270, 0.0
        %v3353 = vsel %vm3338, %v3271, 0.0
        %v3354 = vsel %vm3338, %v3272, 0.0
        %v3355 = vsel %vm3339, %v3273, 0.0
        %v3356 = vsel %vm3339, %v3274, 0.0
        %v3357 = vsel %vm3340, %v3275, 0.0
        %v3358 = vsel %vm3340, %v3276, 0.0
        %v3359 = vsel %vm3341, %v3277, 0.0
        %v3360 = vsel %vm3341, %v3278, 0.0
        %v3361 = vsel %vm3342, %v3279, 0.0
        %v3362 = vsel %vm3342, %v3280, 0.0
        %vm3363 = vcmask 122880
        %vm3364 = vsmask.f32 256
        %vm3365 = vmand %vm3363, %vm3364
        %v3366 = vld [vmem:[#allocation2] sm:$0x1]
        %v3367 = vsel %vm3365, 0, %v3366
        %3368 = vst [vmem:[#allocation2] sm:$0x1] %v3367
        %v3369 = vld [vmem:[#allocation2 + $0xc] sm:$0x1]
        %v3370 = vsel %vm3365, 0, %v3369
        %3371 = vst [vmem:[#allocation2 + $0xc] sm:$0x1] %v3370
        %v3372 = vld [vmem:[#allocation2 + $0x18] sm:$0x1]
        %v3373 = vsel %vm3365, 0, %v3372
        %3374 = vst [vmem:[#allocation2 + $0x18] sm:$0x1] %v3373
        %v3375 = vld [vmem:[#allocation2 + $0x24] sm:$0x1]
        %v3376 = vsel %vm3365, 0, %v3375
        %3377 = vst [vmem:[#allocation2 + $0x24] sm:$0x1] %v3376
        %v3378 = vld [vmem:[#allocation2 + $0x30] sm:$0x1]
        %v3379 = vsel %vm3365, 0, %v3378
        %3380 = vst [vmem:[#allocation2 + $0x30] sm:$0x1] %v3379
        %v3381 = vld [vmem:[#allocation2 + $0x3c] sm:$0x1]
        %v3382 = vsel %vm3365, 0, %v3381
        %3383 = vst [vmem:[#allocation2 + $0x3c] sm:$0x1] %v3382
        %v3384 = vld [vmem:[#allocation2 + $0x48] sm:$0x1]
        %v3385 = vsel %vm3365, 0, %v3384
        %3386 = vst [vmem:[#allocation2 + $0x48] sm:$0x1] %v3385
        %v3387 = vld [vmem:[#allocation2 + $0x54] sm:$0x1]
        %v3388 = vsel %vm3365, 0, %v3387
        %3389 = vst [vmem:[#allocation2 + $0x54] sm:$0x1] %v3388
        %v3390 = vld [vmem:[#allocation2 + $0x60] sm:$0x1]
        %v3391 = vsel %vm3365, 0, %v3390
        %3392 = vst [vmem:[#allocation2 + $0x60] sm:$0x1] %v3391
        %v3393 = vld [vmem:[#allocation2 + $0x6c] sm:$0x1]
        %v3394 = vsel %vm3365, 0, %v3393
        %3395 = vst [vmem:[#allocation2 + $0x6c] sm:$0x1] %v3394
        %vm3396 = vsmask.f32 7938
        %vm3397 = vmand %vm3363, %vm3396
        %v3398 = vld [vmem:[#allocation2 + $0x8] sm:$0x1]
        %v3399 = vsel %vm3397, 0, %v3398
        %3400 = vst [vmem:[#allocation2 + $0x8] sm:$0x1] %v3399
        %v3401 = vld [vmem:[#allocation2 + $0x14] sm:$0x1]
        %v3402 = vsel %vm3397, 0, %v3401
        %3403 = vst [vmem:[#allocation2 + $0x14] sm:$0x1] %v3402
        %v3404 = vld [vmem:[#allocation2 + $0x20] sm:$0x1]
        %v3405 = vsel %vm3397, 0, %v3404
        %3406 = vst [vmem:[#allocation2 + $0x20] sm:$0x1] %v3405
        %v3407 = vld [vmem:[#allocation2 + $0x2c] sm:$0x1]
        %v3408 = vsel %vm3397, 0, %v3407
        %3409 = vst [vmem:[#allocation2 + $0x2c] sm:$0x1] %v3408
        %v3410 = vld [vmem:[#allocation2 + $0x38] sm:$0x1]
        %v3411 = vsel %vm3397, 0, %v3410
        %3412 = vst [vmem:[#allocation2 + $0x38] sm:$0x1] %v3411
        %v3413 = vld [vmem:[#allocation2 + $0x44] sm:$0x1]
        %v3414 = vsel %vm3397, 0, %v3413
        %3415 = vst [vmem:[#allocation2 + $0x44] sm:$0x1] %v3414
        %v3416 = vld [vmem:[#allocation2 + $0x50] sm:$0x1]
        %v3417 = vsel %vm3397, 0, %v3416
        %3418 = vst [vmem:[#allocation2 + $0x50] sm:$0x1] %v3417
        %v3419 = vld [vmem:[#allocation2 + $0x5c] sm:$0x1]
        %v3420 = vsel %vm3397, 0, %v3419
        %3421 = vst [vmem:[#allocation2 + $0x5c] sm:$0x1] %v3420
        %v3422 = vld [vmem:[#allocation2 + $0x68] sm:$0x1]
        %v3423 = vsel %vm3397, 0, %v3422
        %3424 = vst [vmem:[#allocation2 + $0x68] sm:$0x1] %v3423
        %v3425 = vld [vmem:[#allocation2 + $0x74] sm:$0x1]
        %v3426 = vsel %vm3397, 0, %v3425
        %3427 = vst [vmem:[#allocation2 + $0x74] sm:$0x1] %v3426
        %v3428 = vpack.c.bf16 %v3344, %v3343
        %v3429 = vpack.c.bf16 %v3346, %v3345
        %v3430 = vpack.c.bf16 %v3348, %v3347
        %v3431 = vpack.c.bf16 %v3350, %v3349
        %v3432 = vpack.c.bf16 %v3352, %v3351
        %v3433 = vpack.c.bf16 %v3354, %v3353
        %v3434 = vpack.c.bf16 %v3356, %v3355
        %v3435 = vpack.c.bf16 %v3358, %v3357
        %v3436 = vpack.c.bf16 %v3360, %v3359
        %v3437 = vpack.c.bf16 %v3362, %v3361
        %v3448 = vunpack.c.l.b16 %v3428
        %v3449 = vunpack.c.h.b16 %v3428
        %v3450 = vunpack.c.l.b16 %v3429
        %v3451 = vunpack.c.h.b16 %v3429
        %v3452 = vunpack.c.l.b16 %v3430
        %v3453 = vunpack.c.h.b16 %v3430
        %v3454 = vunpack.c.l.b16 %v3431
        %v3455 = vunpack.c.h.b16 %v3431
        %v3456 = vunpack.c.l.b16 %v3432
        %v3457 = vunpack.c.h.b16 %v3432
        %v3458 = vunpack.c.l.b16 %v3433
        %v3459 = vunpack.c.h.b16 %v3433
        %v3460 = vunpack.c.l.b16 %v3434
        %v3461 = vunpack.c.h.b16 %v3434
        %v3462 = vunpack.c.l.b16 %v3435
        %v3463 = vunpack.c.h.b16 %v3435
        %v3464 = vunpack.c.l.b16 %v3436
        %v3465 = vunpack.c.h.b16 %v3436
        %v3466 = vunpack.c.l.b16 %v3437
        %v3467 = vunpack.c.h.b16 %v3437
        %v3468 = vpack.c.b16 %v3448, %v3448
        %v3469 = vpack.c.b16 %v3449, %v3449
        %v3470 = vpack.c.b16 %v3450, %v3450
        %v3471 = vpack.c.b16 %v3451, %v3451
        %v3472 = vpack.c.b16 %v3452, %v3452
        %v3473 = vpack.c.b16 %v3453, %v3453
        %v3474 = vpack.c.b16 %v3454, %v3454
        %v3475 = vpack.c.b16 %v3455, %v3455
        %v3476 = vpack.c.b16 %v3456, %v3456
        %v3477 = vpack.c.b16 %v3457, %v3457
        %v3478 = vpack.c.b16 %v3458, %v3458
        %v3479 = vpack.c.b16 %v3459, %v3459
        %v3480 = vpack.c.b16 %v3460, %v3460
        %v3481 = vpack.c.b16 %v3461, %v3461
        %v3482 = vpack.c.b16 %v3462, %v3462
        %v3483 = vpack.c.b16 %v3463, %v3463
        %v3484 = vpack.c.b16 %v3464, %v3464
        %v3485 = vpack.c.b16 %v3465, %v3465
        %v3486 = vpack.c.b16 %v3466, %v3466
        %v3487 = vpack.c.b16 %v3467, %v3467
        %vm3488 = vsmask.f32 4368
        %vm3489 = vmor %vm3364, %vm3488
        %v3491 = vshrl.u32 %v3468, 16
        %v3493 = vrot.slane %v3491, 7
        %v3494 = vshll.u32 %v3468, 16
        %v3496 = vor.u32 %v3493, %v3494
        %v3497 = vrot.slane %v3493, 4
        %v3499 = vshrl.u32 %v3469, 16
        %v3501 = vrot.slane %v3499, 7
        %v3502 = vshll.u32 %v3469, 16
        %v3504 = vor.u32 %v3501, %v3502
        %v3505 = vsel %vm3489, %v3497, %v3504
        %v3506 = vrot.slane %v3501, 4
        %v3508 = vshrl.u32 %v3470, 16
        %v3510 = vrot.slane %v3508, 7
        %v3511 = vshll.u32 %v3470, 16
        %v3513 = vor.u32 %v3510, %v3511
        %v3514 = vrot.slane %v3510, 4
        %v3516 = vshrl.u32 %v3471, 16
        %v3518 = vrot.slane %v3516, 7
        %v3519 = vshll.u32 %v3471, 16
        %v3521 = vor.u32 %v3518, %v3519
        %v3522 = vsel %vm3489, %v3514, %v3521
        %v3523 = vrot.slane %v3518, 4
        %v3525 = vshrl.u32 %v3472, 16
        %v3527 = vrot.slane %v3525, 7
        %v3528 = vshll.u32 %v3472, 16
        %v3530 = vor.u32 %v3527, %v3528
        %v3531 = vrot.slane %v3527, 4
        %v3533 = vshrl.u32 %v3473, 16
        %v3535 = vrot.slane %v3533, 7
        %v3536 = vshll.u32 %v3473, 16
        %v3538 = vor.u32 %v3535, %v3536
        %v3539 = vsel %vm3489, %v3531, %v3538
        %v3540 = vrot.slane %v3535, 4
        %v3542 = vshrl.u32 %v3474, 16
        %v3544 = vrot.slane %v3542, 7
        %v3545 = vshll.u32 %v3474, 16
        %v3547 = vor.u32 %v3544, %v3545
        %v3548 = vrot.slane %v3544, 4
        %v3550 = vshrl.u32 %v3475, 16
        %v3552 = vrot.slane %v3550, 7
        %v3553 = vshll.u32 %v3475, 16
        %v3555 = vor.u32 %v3552, %v3553
        %v3556 = vsel %vm3489, %v3548, %v3555
        %v3557 = vrot.slane %v3552, 4
        %v3559 = vshrl.u32 %v3476, 16
        %v3561 = vrot.slane %v3559, 7
        %v3562 = vshll.u32 %v3476, 16
        %v3564 = vor.u32 %v3561, %v3562
        %v3565 = vrot.slane %v3561, 4
        %v3567 = vshrl.u32 %v3477, 16
        %v3569 = vrot.slane %v3567, 7
        %v3570 = vshll.u32 %v3477, 16
        %v3572 = vor.u32 %v3569, %v3570
        %v3573 = vsel %vm3489, %v3565, %v3572
        %v3574 = vrot.slane %v3569, 4
        %v3576 = vshrl.u32 %v3478, 16
        %v3578 = vrot.slane %v3576, 7
        %v3579 = vshll.u32 %v3478, 16
        %v3581 = vor.u32 %v3578, %v3579
        %v3582 = vrot.slane %v3578, 4
        %v3584 = vshrl.u32 %v3479, 16
        %v3586 = vrot.slane %v3584, 7
        %v3587 = vshll.u32 %v3479, 16
        %v3589 = vor.u32 %v3586, %v3587
        %v3590 = vsel %vm3489, %v3582, %v3589
        %v3591 = vrot.slane %v3586, 4
        %v3593 = vshrl.u32 %v3480, 16
        %v3595 = vrot.slane %v3593, 7
        %v3596 = vshll.u32 %v3480, 16
        %v3598 = vor.u32 %v3595, %v3596
        %v3599 = vrot.slane %v3595, 4
        %v3601 = vshrl.u32 %v3481, 16
        %v3603 = vrot.slane %v3601, 7
        %v3604 = vshll.u32 %v3481, 16
        %v3606 = vor.u32 %v3603, %v3604
        %v3607 = vsel %vm3489, %v3599, %v3606
        %v3608 = vrot.slane %v3603, 4
        %v3610 = vshrl.u32 %v3482, 16
        %v3612 = vrot.slane %v3610, 7
        %v3613 = vshll.u32 %v3482, 16
        %v3615 = vor.u32 %v3612, %v3613
        %v3616 = vrot.slane %v3612, 4
        %v3618 = vshrl.u32 %v3483, 16
        %v3620 = vrot.slane %v3618, 7
        %v3621 = vshll.u32 %v3483, 16
        %v3623 = vor.u32 %v3620, %v3621
        %v3624 = vsel %vm3489, %v3616, %v3623
        %v3625 = vrot.slane %v3620, 4
        %v3627 = vshrl.u32 %v3484, 16
        %v3629 = vrot.slane %v3627, 7
        %v3630 = vshll.u32 %v3484, 16
        %v3632 = vor.u32 %v3629, %v3630
        %v3633 = vrot.slane %v3629, 4
        %v3635 = vshrl.u32 %v3485, 16
        %v3637 = vrot.slane %v3635, 7
        %v3638 = vshll.u32 %v3485, 16
        %v3640 = vor.u32 %v3637, %v3638
        %v3641 = vsel %vm3489, %v3633, %v3640
        %v3642 = vrot.slane %v3637, 4
        %v3644 = vshrl.u32 %v3486, 16
        %v3646 = vrot.slane %v3644, 7
        %v3647 = vshll.u32 %v3486, 16
        %v3649 = vor.u32 %v3646, %v3647
        %v3650 = vrot.slane %v3646, 4
        %v3652 = vshrl.u32 %v3487, 16
        %v3654 = vrot.slane %v3652, 7
        %v3655 = vshll.u32 %v3487, 16
        %v3657 = vor.u32 %v3654, %v3655
        %v3658 = vsel %vm3489, %v3650, %v3657
        %v3659 = vrot.slane %v3654, 4
        %vm3690 = vcmask 125952
        %vm3691 = vmand %vm3690, %vm3396
        %v3692 = vld [vmem:[#allocation2] sm:$0xf]
        %v3693 = vsel %vm3691, %v3496, %v3692
        %3694 = vst [vmem:[#allocation2] sm:$0xf] %v3693
        %vm3695 = vcmask 125952
        %3696 = vst.msk [vmem:[#allocation2 + $0x4] sm:$0xf] %vm3695, %v3505
        %v3697 = vld [vmem:[#allocation2 + $0x8] sm:$0x1]
        %v3698 = vsel %vm3365, %v3506, %v3697
        %3699 = vst [vmem:[#allocation2 + $0x8] sm:$0x1] %v3698
        %v3700 = vld [vmem:[#allocation2 + $0xc] sm:$0xf]
        %v3701 = vsel %vm3691, %v3513, %v3700
        %3702 = vst [vmem:[#allocation2 + $0xc] sm:$0xf] %v3701
        %3703 = vst.msk [vmem:[#allocation2 + $0x10] sm:$0xf] %vm3695, %v3522
        %v3704 = vld [vmem:[#allocation2 + $0x14] sm:$0x1]
        %v3705 = vsel %vm3365, %v3523, %v3704
        %3706 = vst [vmem:[#allocation2 + $0x14] sm:$0x1] %v3705
        %v3707 = vld [vmem:[#allocation2 + $0x18] sm:$0xf]
        %v3708 = vsel %vm3691, %v3530, %v3707
        %3709 = vst [vmem:[#allocation2 + $0x18] sm:$0xf] %v3708
        %3710 = vst.msk [vmem:[#allocation2 + $0x1c] sm:$0xf] %vm3695, %v3539
        %v3711 = vld [vmem:[#allocation2 + $0x20] sm:$0x1]
        %v3712 = vsel %vm3365, %v3540, %v3711
        %3713 = vst [vmem:[#allocation2 + $0x20] sm:$0x1] %v3712
        %v3714 = vld [vmem:[#allocation2 + $0x24] sm:$0xf]
        %v3715 = vsel %vm3691, %v3547, %v3714
        %3716 = vst [vmem:[#allocation2 + $0x24] sm:$0xf] %v3715
        %3717 = vst.msk [vmem:[#allocation2 + $0x28] sm:$0xf] %vm3695, %v3556
        %v3718 = vld [vmem:[#allocation2 + $0x2c] sm:$0x1]
        %v3719 = vsel %vm3365, %v3557, %v3718
        %3720 = vst [vmem:[#allocation2 + $0x2c] sm:$0x1] %v3719
        %v3721 = vld [vmem:[#allocation2 + $0x30] sm:$0xf]
        %v3722 = vsel %vm3691, %v3564, %v3721
        %3723 = vst [vmem:[#allocation2 + $0x30] sm:$0xf] %v3722
        %3724 = vst.msk [vmem:[#allocation2 + $0x34] sm:$0xf] %vm3695, %v3573
        %v3725 = vld [vmem:[#allocation2 + $0x38] sm:$0x1]
        %v3726 = vsel %vm3365, %v3574, %v3725
        %3727 = vst [vmem:[#allocation2 + $0x38] sm:$0x1] %v3726
        %v3728 = vld [vmem:[#allocation2 + $0x3c] sm:$0xf]
        %v3729 = vsel %vm3691, %v3581, %v3728
        %3730 = vst [vmem:[#allocation2 + $0x3c] sm:$0xf] %v3729
        %3731 = vst.msk [vmem:[#allocation2 + $0x40] sm:$0xf] %vm3695, %v3590
        %v3732 = vld [vmem:[#allocation2 + $0x44] sm:$0x1]
        %v3733 = vsel %vm3365, %v3591, %v3732
        %3734 = vst [vmem:[#allocation2 + $0x44] sm:$0x1] %v3733
        %v3735 = vld [vmem:[#allocation2 + $0x48] sm:$0xf]
        %v3736 = vsel %vm3691, %v3598, %v3735
        %3737 = vst [vmem:[#allocation2 + $0x48] sm:$0xf] %v3736
        %3738 = vst.msk [vmem:[#allocation2 + $0x4c] sm:$0xf] %vm3695, %v3607
        %v3739 = vld [vmem:[#allocation2 + $0x50] sm:$0x1]
        %v3740 = vsel %vm3365, %v3608, %v3739
        %3741 = vst [vmem:[#allocation2 + $0x50] sm:$0x1] %v3740
        %v3742 = vld [vmem:[#allocation2 + $0x54] sm:$0xf]
        %v3743 = vsel %vm3691, %v3615, %v3742
        %3744 = vst [vmem:[#allocation2 + $0x54] sm:$0xf] %v3743
        %3745 = vst.msk [vmem:[#allocation2 + $0x58] sm:$0xf] %vm3695, %v3624
        %v3746 = vld [vmem:[#allocation2 + $0x5c] sm:$0x1]
        %v3747 = vsel %vm3365, %v3625, %v3746
        %3748 = vst [vmem:[#allocation2 + $0x5c] sm:$0x1] %v3747
        %v3749 = vld [vmem:[#allocation2 + $0x60] sm:$0xf]
        %v3750 = vsel %vm3691, %v3632, %v3749
        %3751 = vst [vmem:[#allocation2 + $0x60] sm:$0xf] %v3750
        %3752 = vst.msk [vmem:[#allocation2 + $0x64] sm:$0xf] %vm3695, %v3641
        %v3753 = vld [vmem:[#allocation2 + $0x68] sm:$0x1]
        %v3754 = vsel %vm3365, %v3642, %v3753
        %3755 = vst [vmem:[#allocation2 + $0x68] sm:$0x1] %v3754
        %v3756 = vld [vmem:[#allocation2 + $0x6c] sm:$0xf]
        %v3757 = vsel %vm3691, %v3649, %v3756
        %3758 = vst [vmem:[#allocation2 + $0x6c] sm:$0xf] %v3757
        %3759 = vst.msk [vmem:[#allocation2 + $0x70] sm:$0xf] %vm3695, %v3658
        %v3760 = vld [vmem:[#allocation2 + $0x74] sm:$0x1]
        %v3761 = vsel %vm3365, %v3659, %v3760
        %3762 = vst [vmem:[#allocation2 + $0x74] sm:$0x1] %v3761
        %v3763 = vld [vmem:[#allocation2] sm:$0xf]
        %v3764 = vld [vmem:[#allocation2 + $0x4] sm:$0xf]
        %v3765 = vld [vmem:[#allocation2 + $0xc] sm:$0xf]
        %v3766 = vld [vmem:[#allocation2 + $0x10] sm:$0xf]
        %v3767 = vld [vmem:[#allocation2 + $0x18] sm:$0xf]
        %v3768 = vld [vmem:[#allocation2 + $0x1c] sm:$0xf]
        %v3769 = vld [vmem:[#allocation2 + $0x24] sm:$0xf]
        %v3770 = vld [vmem:[#allocation2 + $0x28] sm:$0xf]
        %v3771 = vld [vmem:[#allocation2 + $0x30] sm:$0xf]
        %v3772 = vld [vmem:[#allocation2 + $0x34] sm:$0xf]
        %v3773 = vld [vmem:[#allocation2 + $0x3c] sm:$0xf]
        %v3774 = vld [vmem:[#allocation2 + $0x40] sm:$0xf]
        %v3775 = vld [vmem:[#allocation2 + $0x48] sm:$0xf]
        %v3776 = vld [vmem:[#allocation2 + $0x4c] sm:$0xf]
        %v3777 = vld [vmem:[#allocation2 + $0x54] sm:$0xf]
        %v3778 = vld [vmem:[#allocation2 + $0x58] sm:$0xf]
        %v3779 = vld [vmem:[%s3] sm:$0xf]
        %v3780 = vld [vmem:[%s3 + $0x4] sm:$0xf]
        %v3781 = vld [vmem:[#allocation2 + $0x8] sm:$0x1]
        %v3782 = vld [vmem:[#allocation2 + $0x14] sm:$0x1]
        %v3783 = vld [vmem:[#allocation2 + $0x20] sm:$0x1]
        %v3784 = vld [vmem:[#allocation2 + $0x2c] sm:$0x1]
        %v3785 = vld [vmem:[#allocation2 + $0x38] sm:$0x1]
        %v3786 = vld [vmem:[#allocation2 + $0x44] sm:$0x1]
        %v3787 = vld [vmem:[#allocation2 + $0x50] sm:$0x1]
        %v3788 = vld [vmem:[#allocation2 + $0x5c] sm:$0x1]
        %v3790 = vshrl.u32 %v3763, 16
        %v3792 = vrot.slane %v3790, 4
        %v3793 = vshll.u32 %v3763, 16
        %v3795 = vrot.slane %v3793, 5
        %v3796 = vor.u32 %v3792, %v3795
        %v3797 = vrot.slane %v3796, 4
        %v3799 = vshll.u32 %v3764, 16
        %v3801 = vrot.slane %v3799, 5
        %v3802 = vsel %vm286, %v3797, %v3801
        %v3803 = vshrl.u32 %v3764, 16
        %v3805 = vrot.slane %v3803, 4
        %v3806 = vor.u32 %v3805, %v3801
        %v3807 = vrot.slane %v3806, 4
        %v3809 = vshll.u32 %v3781, 16
        %v3811 = vrot.slane %v3809, 5
        %v3812 = vsel %vm286, %v3807, %v3811
        %v3814 = vshrl.u32 %v3765, 16
        %v3816 = vrot.slane %v3814, 4
        %v3817 = vshll.u32 %v3765, 16
        %v3819 = vrot.slane %v3817, 5
        %v3820 = vor.u32 %v3816, %v3819
        %v3821 = vrot.slane %v3820, 4
        %v3823 = vshll.u32 %v3766, 16
        %v3825 = vrot.slane %v3823, 5
        %v3826 = vsel %vm286, %v3821, %v3825
        %v3827 = vshrl.u32 %v3766, 16
        %v3829 = vrot.slane %v3827, 4
        %v3830 = vor.u32 %v3829, %v3825
        %v3831 = vrot.slane %v3830, 4
        %v3833 = vshll.u32 %v3782, 16
        %v3835 = vrot.slane %v3833, 5
        %v3836 = vsel %vm286, %v3831, %v3835
        %v3838 = vshrl.u32 %v3767, 16
        %v3840 = vrot.slane %v3838, 4
        %v3841 = vshll.u32 %v3767, 16
        %v3843 = vrot.slane %v3841, 5
        %v3844 = vor.u32 %v3840, %v3843
        %v3845 = vrot.slane %v3844, 4
        %v3847 = vshll.u32 %v3768, 16
        %v3849 = vrot.slane %v3847, 5
        %v3850 = vsel %vm286, %v3845, %v3849
        %v3851 = vshrl.u32 %v3768, 16
        %v3853 = vrot.slane %v3851, 4
        %v3854 = vor.u32 %v3853, %v3849
        %v3855 = vrot.slane %v3854, 4
        %v3857 = vshll.u32 %v3783, 16
        %v3859 = vrot.slane %v3857, 5
        %v3860 = vsel %vm286, %v3855, %v3859
        %v3862 = vshrl.u32 %v3769, 16
        %v3864 = vrot.slane %v3862, 4
        %v3865 = vshll.u32 %v3769, 16
        %v3867 = vrot.slane %v3865, 5
        %v3868 = vor.u32 %v3864, %v3867
        %v3869 = vrot.slane %v3868, 4
        %v3871 = vshll.u32 %v3770, 16
        %v3873 = vrot.slane %v3871, 5
        %v3874 = vsel %vm286, %v3869, %v3873
        %v3875 = vshrl.u32 %v3770, 16
        %v3877 = vrot.slane %v3875, 4
        %v3878 = vor.u32 %v3877, %v3873
        %v3879 = vrot.slane %v3878, 4
        %v3881 = vshll.u32 %v3784, 16
        %v3883 = vrot.slane %v3881, 5
        %v3884 = vsel %vm286, %v3879, %v3883
        %v3886 = vshrl.u32 %v3771, 16
        %v3888 = vrot.slane %v3886, 4
        %v3889 = vshll.u32 %v3771, 16
        %v3891 = vrot.slane %v3889, 5
        %v3892 = vor.u32 %v3888, %v3891
        %v3893 = vrot.slane %v3892, 4
        %v3895 = vshll.u32 %v3772, 16
        %v3897 = vrot.slane %v3895, 5
        %v3898 = vsel %vm286, %v3893, %v3897
        %v3899 = vshrl.u32 %v3772, 16
        %v3901 = vrot.slane %v3899, 4
        %v3902 = vor.u32 %v3901, %v3897
        %v3903 = vrot.slane %v3902, 4
        %v3905 = vshll.u32 %v3785, 16
        %v3907 = vrot.slane %v3905, 5
        %v3908 = vsel %vm286, %v3903, %v3907
        %v3910 = vshrl.u32 %v3773, 16
        %v3912 = vrot.slane %v3910, 4
        %v3913 = vshll.u32 %v3773, 16
        %v3915 = vrot.slane %v3913, 5
        %v3916 = vor.u32 %v3912, %v3915
        %v3917 = vrot.slane %v3916, 4
        %v3919 = vshll.u32 %v3774, 16
        %v3921 = vrot.slane %v3919, 5
        %v3922 = vsel %vm286, %v3917, %v3921
        %v3923 = vshrl.u32 %v3774, 16
        %v3925 = vrot.slane %v3923, 4
        %v3926 = vor.u32 %v3925, %v3921
        %v3927 = vrot.slane %v3926, 4
        %v3929 = vshll.u32 %v3786, 16
        %v3931 = vrot.slane %v3929, 5
        %v3932 = vsel %vm286, %v3927, %v3931
        %v3934 = vshrl.u32 %v3775, 16
        %v3936 = vrot.slane %v3934, 4
        %v3937 = vshll.u32 %v3775, 16
        %v3939 = vrot.slane %v3937, 5
        %v3940 = vor.u32 %v3936, %v3939
        %v3941 = vrot.slane %v3940, 4
        %v3943 = vshll.u32 %v3776, 16
        %v3945 = vrot.slane %v3943, 5
        %v3946 = vsel %vm286, %v3941, %v3945
        %v3947 = vshrl.u32 %v3776, 16
        %v3949 = vrot.slane %v3947, 4
        %v3950 = vor.u32 %v3949, %v3945
        %v3951 = vrot.slane %v3950, 4
        %v3953 = vshll.u32 %v3787, 16
        %v3955 = vrot.slane %v3953, 5
        %v3956 = vsel %vm286, %v3951, %v3955
        %v3958 = vshrl.u32 %v3777, 16
        %v3960 = vrot.slane %v3958, 4
        %v3961 = vshll.u32 %v3777, 16
        %v3963 = vrot.slane %v3961, 5
        %v3964 = vor.u32 %v3960, %v3963
        %v3965 = vrot.slane %v3964, 4
        %v3967 = vshll.u32 %v3778, 16
        %v3969 = vrot.slane %v3967, 5
        %v3970 = vsel %vm286, %v3965, %v3969
        %v3971 = vshrl.u32 %v3778, 16
        %v3973 = vrot.slane %v3971, 4
        %v3974 = vor.u32 %v3973, %v3969
        %v3975 = vrot.slane %v3974, 4
        %v3977 = vshll.u32 %v3788, 16
        %v3979 = vrot.slane %v3977, 5
        %v3980 = vsel %vm286, %v3975, %v3979
        %s3981 = scalar_lea.vmem %s3, 8
        %v3982 = vld [vmem:[%s3981] sm:$0xf]
        %v3983 = vld [vmem:[%s3981 + $0x4] sm:$0xf]
        %v3984 = vunpack.c.l.b16 %v3802
        %v3985 = vunpack.c.l.b16 %v3812
        %v3986 = vunpack.c.l.b16 %v3826
        %v3987 = vunpack.c.l.b16 %v3836
        %v3988 = vunpack.c.l.b16 %v3850
        %v3989 = vunpack.c.l.b16 %v3860
        %v3990 = vunpack.c.l.b16 %v3874
        %v3991 = vunpack.c.l.b16 %v3884
        %v3992 = vunpack.c.l.b16 %v3898
        %v3993 = vunpack.c.l.b16 %v3908
        %v3994 = vunpack.c.l.b16 %v3922
        %v3995 = vunpack.c.l.b16 %v3932
        %v3996 = vunpack.c.l.b16 %v3946
        %v3997 = vunpack.c.l.b16 %v3956
        %v3998 = vunpack.c.l.b16 %v3970
        %v3999 = vunpack.c.l.b16 %v3980
        %v4000 = vpack.c.b16 %v3985, %v3984
        %v4001 = vpack.c.b16 %v3987, %v3986
        %v4002 = vpack.c.b16 %v3989, %v3988
        %v4003 = vpack.c.b16 %v3991, %v3990
        %v4004 = vpack.c.b16 %v3993, %v3992
        %v4005 = vpack.c.b16 %v3995, %v3994
        %v4006 = vpack.c.b16 %v3997, %v3996
        %v4007 = vpack.c.b16 %v3999, %v3998
        %v4010 = vunpack.c.l.b16 %v3982
        %v4011 = vunpack.c.l.b16 %v3983
        %v4012 = vpack.c.b16 %v4011, %v4010
        %vm4014 = vcmask 130048
        %v4016 = vsel %vm4014, %v4000, 0
        %v4019 = vsel %vm4014, %v4001, 0
        %v4022 = vsel %vm4014, %v4002, 0
        %v4025 = vsel %vm4014, %v4003, 0
        %v4028 = vsel %vm4014, %v4004, 0
        %v4031 = vsel %vm4014, %v4005, 0
        %v4034 = vsel %vm4014, %v4006, 0
        %v4037 = vsel %vm4014, %v4007, 0
        %4039 = vmatprep.subr.bf16.mxu0 0
        %4040 = vmatpush1.bf16.msra.mxu0 %v4012
        %4041 = vmatprep.subr.bf16.mxu0 0
        %4042 = vmatpush1.bf16.msra.mxu0 0
        %4043 = vmatprep.subr.bf16.mxu0 0
        %4044 = vmatpush1.bf16.msra.mxu0 0
        %4045 = vmatprep.subr.bf16.mxu0 0
        %4046 = vmatpush1.bf16.msra.mxu0 0
        %4047 = vmatprep.subr.bf16.mxu0 0
        %4048 = vmatpush1.bf16.msra.mxu0 0
        %4049 = vmatprep.subr.bf16.mxu0 0
        %4050 = vmatpush1.bf16.msra.mxu0 0
        %4051 = vmatprep.subr.bf16.mxu0 0
        %4052 = vmatpush1.bf16.msra.mxu0 0
        %4053 = vmatprep.subr.bf16.mxu0 0
        %4054 = vmatpush1.bf16.msra.mxu0 0
        %4055 = vmatprep.subr.bf16.mxu0 0
        %4056 = vmatpush1.bf16.msra.mxu0 0
        %4057 = vmatprep.subr.bf16.mxu0 0
        %4058 = vmatpush1.bf16.msra.mxu0 0
        %4059 = vmatprep.subr.bf16.mxu0 0
        %4060 = vmatpush1.bf16.msra.mxu0 0
        %4061 = vmatprep.subr.bf16.mxu0 0
        %4062 = vmatpush1.bf16.msra.mxu0 0
        %4063 = vmatprep.subr.bf16.mxu0 0
        %4064 = vmatpush1.bf16.msra.mxu0 0
        %4065 = vmatprep.subr.bf16.mxu0 0
        %4066 = vmatpush1.bf16.msra.mxu0 0
        %4067 = vmatprep.subr.bf16.mxu0 0
        %4068 = vmatpush1.bf16.msra.mxu0 0
        %4069 = vmatprep.subr.bf16.mxu0 0
        %4070 = vmatpush1.bf16.msra.mxu0 0
        %4071 = vmatprep.mubr.bf16.mxu0 0
        %4072 = vmatmul.mubr.bf16.gmra.mrb[0].mxu0 %v4016
        %v4073 = vpop.f32.mrb[0].mxu0
        %v4074 = vadd.f32 0.0, %v4073
        %v4075 = vpop.f32.mrb[0].mxu0
        %v4076 = vpop.f32.mrb[0].mxu0
        %v4077 = vadd.f32 0.0, %v4076
        %v4078 = vpop.f32.mrb[0].mxu0
        %4079 = vmatprep.mubr.bf16.mxu0 0
        %4080 = vmatmul.mubr.bf16.gmra.mrb[0].mxu0 %v4019
        %v4081 = vpop.f32.mrb[0].mxu0
        %v4082 = vadd.f32 0.0, %v4081
        %v4083 = vpop.f32.mrb[0].mxu0
        %v4084 = vpop.f32.mrb[0].mxu0
        %v4085 = vadd.f32 0.0, %v4084
        %v4086 = vpop.f32.mrb[0].mxu0
        %4087 = vmatprep.mubr.bf16.mxu0 0
        %4088 = vmatmul.mubr.bf16.gmra.mrb[0].mxu0 %v4022
        %v4089 = vpop.f32.mrb[0].mxu0
        %v4090 = vadd.f32 0.0, %v4089
        %v4091 = vpop.f32.mrb[0].mxu0
        %v4092 = vpop.f32.mrb[0].mxu0
        %v4093 = vadd.f32 0.0, %v4092
        %v4094 = vpop.f32.mrb[0].mxu0
        %4095 = vmatprep.mubr.bf16.mxu0 0
        %4096 = vmatmul.mubr.bf16.gmra.mrb[0].mxu0 %v4025
        %v4097 = vpop.f32.mrb[0].mxu0
        %v4098 = vadd.f32 0.0, %v4097
        %v4099 = vpop.f32.mrb[0].mxu0
        %v4100 = vpop.f32.mrb[0].mxu0
        %v4101 = vadd.f32 0.0, %v4100
        %v4102 = vpop.f32.mrb[0].mxu0
        %4103 = vmatprep.mubr.bf16.mxu0 0
        %4104 = vmatmul.mubr.bf16.gmra.mrb[0].mxu0 %v4028
        %v4105 = vpop.f32.mrb[0].mxu0
        %v4106 = vadd.f32 0.0, %v4105
        %v4107 = vpop.f32.mrb[0].mxu0
        %v4108 = vpop.f32.mrb[0].mxu0
        %v4109 = vadd.f32 0.0, %v4108
        %v4110 = vpop.f32.mrb[0].mxu0
        %4111 = vmatprep.mubr.bf16.mxu0 0
        %4112 = vmatmul.mubr.bf16.gmra.mrb[0].mxu0 %v4031
        %v4113 = vpop.f32.mrb[0].mxu0
        %v4114 = vadd.f32 0.0, %v4113
        %v4115 = vpop.f32.mrb[0].mxu0
        %v4116 = vpop.f32.mrb[0].mxu0
        %v4117 = vadd.f32 0.0, %v4116
        %v4118 = vpop.f32.mrb[0].mxu0
        %4119 = vmatprep.mubr.bf16.mxu0 0
        %4120 = vmatmul.mubr.bf16.gmra.mrb[0].mxu0 %v4034
        %v4121 = vpop.f32.mrb[0].mxu0
        %v4122 = vadd.f32 0.0, %v4121
        %v4123 = vpop.f32.mrb[0].mxu0
        %v4124 = vpop.f32.mrb[0].mxu0
        %v4125 = vadd.f32 0.0, %v4124
        %v4126 = vpop.f32.mrb[0].mxu0
        %4127 = vmatprep.mubr.bf16.mxu0 0
        %4128 = vmatmul.mubr.bf16.gmra.mrb[0].mxu0 %v4037
        %v4129 = vpop.f32.mrb[0].mxu0
        %v4130 = vadd.f32 0.0, %v4129
        %v4131 = vpop.f32.mrb[0].mxu0
        %v4132 = vpop.f32.mrb[0].mxu0
        %v4133 = vadd.f32 0.0, %v4132
        %v4134 = vpop.f32.mrb[0].mxu0
        %4135 = vdwg.mxu0
        %v4152 = vunpack.c.l.b16 %v3763
        %v4153 = vunpack.c.l.b16 %v3764
        %v4154 = vunpack.c.l.b16 %v3765
        %v4155 = vunpack.c.l.b16 %v3766
        %v4156 = vunpack.c.l.b16 %v3767
        %v4157 = vunpack.c.l.b16 %v3768
        %v4158 = vunpack.c.l.b16 %v3769
        %v4159 = vunpack.c.l.b16 %v3770
        %v4160 = vunpack.c.l.b16 %v3771
        %v4161 = vunpack.c.l.b16 %v3772
        %v4162 = vunpack.c.l.b16 %v3773
        %v4163 = vunpack.c.l.b16 %v3774
        %v4164 = vunpack.c.l.b16 %v3775
        %v4165 = vunpack.c.l.b16 %v3776
        %v4166 = vunpack.c.l.b16 %v3777
        %v4167 = vunpack.c.l.b16 %v3778
        %v4168 = vpack.c.b16 %v4153, %v4152
        %v4169 = vpack.c.b16 %v4155, %v4154
        %v4170 = vpack.c.b16 %v4157, %v4156
        %v4171 = vpack.c.b16 %v4159, %v4158
        %v4172 = vpack.c.b16 %v4161, %v4160
        %v4173 = vpack.c.b16 %v4163, %v4162
        %v4174 = vpack.c.b16 %v4165, %v4164
        %v4175 = vpack.c.b16 %v4167, %v4166
        %v4178 = vunpack.c.l.b16 %v3779
        %v4179 = vunpack.c.l.b16 %v3780
        %v4180 = vpack.c.b16 %v4179, %v4178
        %v4183 = vsel %vm4014, %v4168, 0
        %v4186 = vsel %vm4014, %v4169, 0
        %v4189 = vsel %vm4014, %v4170, 0
        %v4192 = vsel %vm4014, %v4171, 0
        %v4195 = vsel %vm4014, %v4172, 0
        %v4198 = vsel %vm4014, %v4173, 0
        %v4201 = vsel %vm4014, %v4174, 0
        %v4204 = vsel %vm4014, %v4175, 0
        %4206 = vmatprep.subr.bf16.mxu0 0
        %4207 = vmatpush1.bf16.msra.mxu0 %v4180
        %4208 = vmatprep.subr.bf16.mxu0 0
        %4209 = vmatpush1.bf16.msra.mxu0 0
        %4210 = vmatprep.subr.bf16.mxu0 0
        %4211 = vmatpush1.bf16.msra.mxu0 0
        %4212 = vmatprep.subr.bf16.mxu0 0
        %4213 = vmatpush1.bf16.msra.mxu0 0
        %4214 = vmatprep.subr.bf16.mxu0 0
        %4215 = vmatpush1.bf16.msra.mxu0 0
        %4216 = vmatprep.subr.bf16.mxu0 0
        %4217 = vmatpush1.bf16.msra.mxu0 0
        %4218 = vmatprep.subr.bf16.mxu0 0
        %4219 = vmatpush1.bf16.msra.mxu0 0
        %4220 = vmatprep.subr.bf16.mxu0 0
        %4221 = vmatpush1.bf16.msra.mxu0 0
        %4222 = vmatprep.subr.bf16.mxu0 0
        %4223 = vmatpush1.bf16.msra.mxu0 0
        %4224 = vmatprep.subr.bf16.mxu0 0
        %4225 = vmatpush1.bf16.msra.mxu0 0
        %4226 = vmatprep.subr.bf16.mxu0 0
        %4227 = vmatpush1.bf16.msra.mxu0 0
        %4228 = vmatprep.subr.bf16.mxu0 0
        %4229 = vmatpush1.bf16.msra.mxu0 0
        %4230 = vmatprep.subr.bf16.mxu0 0
        %4231 = vmatpush1.bf16.msra.mxu0 0
        %4232 = vmatprep.subr.bf16.mxu0 0
        %4233 = vmatpush1.bf16.msra.mxu0 0
        %4234 = vmatprep.subr.bf16.mxu0 0
        %4235 = vmatpush1.bf16.msra.mxu0 0
        %4236 = vmatprep.subr.bf16.mxu0 0
        %4237 = vmatpush1.bf16.msra.mxu0 0
        %4238 = vmatprep.mubr.bf16.mxu0 0
        %4239 = vmatmul.mubr.bf16.gmra.mrb[0].mxu0 %v4183
        %v4240 = vpop.f32.mrb[0].mxu0
        %v4241 = vadd.f32 %v4074, %v4240
        %v4242 = vpop.f32.mrb[0].mxu0
        %v4243 = vpop.f32.mrb[0].mxu0
        %v4244 = vadd.f32 %v4077, %v4243
        %v4245 = vpop.f32.mrb[0].mxu0
        %4246 = vmatprep.mubr.bf16.mxu0 0
        %4247 = vmatmul.mubr.bf16.gmra.mrb[0].mxu0 %v4186
        %v4248 = vpop.f32.mrb[0].mxu0
        %v4249 = vadd.f32 %v4082, %v4248
        %v4250 = vpop.f32.mrb[0].mxu0
        %v4251 = vpop.f32.mrb[0].mxu0
        %v4252 = vadd.f32 %v4085, %v4251
        %v4253 = vpop.f32.mrb[0].mxu0
        %4254 = vmatprep.mubr.bf16.mxu0 0
        %4255 = vmatmul.mubr.bf16.gmra.mrb[0].mxu0 %v4189
        %v4256 = vpop.f32.mrb[0].mxu0
        %v4257 = vadd.f32 %v4090, %v4256
        %v4258 = vpop.f32.mrb[0].mxu0
        %v4259 = vpop.f32.mrb[0].mxu0
        %v4260 = vadd.f32 %v4093, %v4259
        %v4261 = vpop.f32.mrb[0].mxu0
        %4262 = vmatprep.mubr.bf16.mxu0 0
        %4263 = vmatmul.mubr.bf16.gmra.mrb[0].mxu0 %v4192
        %v4264 = vpop.f32.mrb[0].mxu0
        %v4265 = vadd.f32 %v4098, %v4264
        %v4266 = vpop.f32.mrb[0].mxu0
        %v4267 = vpop.f32.mrb[0].mxu0
        %v4268 = vadd.f32 %v4101, %v4267
        %v4269 = vpop.f32.mrb[0].mxu0
        %4270 = vmatprep.mubr.bf16.mxu0 0
        %4271 = vmatmul.mubr.bf16.gmra.mrb[0].mxu0 %v4195
        %v4272 = vpop.f32.mrb[0].mxu0
        %v4273 = vadd.f32 %v4106, %v4272
        %v4274 = vpop.f32.mrb[0].mxu0
        %v4275 = vpop.f32.mrb[0].mxu0
        %v4276 = vadd.f32 %v4109, %v4275
        %v4277 = vpop.f32.mrb[0].mxu0
        %4278 = vmatprep.mubr.bf16.mxu0 0
        %4279 = vmatmul.mubr.bf16.gmra.mrb[0].mxu0 %v4198
        %v4280 = vpop.f32.mrb[0].mxu0
        %v4281 = vadd.f32 %v4114, %v4280
        %v4282 = vpop.f32.mrb[0].mxu0
        %v4283 = vpop.f32.mrb[0].mxu0
        %v4284 = vadd.f32 %v4117, %v4283
        %v4285 = vpop.f32.mrb[0].mxu0
        %4286 = vmatprep.mubr.bf16.mxu0 0
        %4287 = vmatmul.mubr.bf16.gmra.mrb[0].mxu0 %v4201
        %v4288 = vpop.f32.mrb[0].mxu0
        %v4289 = vadd.f32 %v4122, %v4288
        %v4290 = vpop.f32.mrb[0].mxu0
        %v4291 = vpop.f32.mrb[0].mxu0
        %v4292 = vadd.f32 %v4125, %v4291
        %v4293 = vpop.f32.mrb[0].mxu0
        %4294 = vmatprep.mubr.bf16.mxu0 0
        %4295 = vmatmul.mubr.bf16.gmra.mrb[0].mxu0 %v4204
        %v4296 = vpop.f32.mrb[0].mxu0
        %v4297 = vadd.f32 %v4130, %v4296
        %v4298 = vpop.f32.mrb[0].mxu0
        %v4299 = vpop.f32.mrb[0].mxu0
        %v4300 = vadd.f32 %v4133, %v4299
        %v4301 = vpop.f32.mrb[0].mxu0
        %4302 = vdwg.mxu0
        %v4303 = vld [vmem:[#allocation2] sm:$0xe]
        %v4304 = vld [vmem:[#allocation2 + $0xc] sm:$0xe]
        %v4305 = vld [vmem:[#allocation2 + $0x18] sm:$0xe]
        %v4306 = vld [vmem:[#allocation2 + $0x24] sm:$0xe]
        %v4307 = vld [vmem:[#allocation2 + $0x30] sm:$0xe]
        %v4308 = vld [vmem:[#allocation2 + $0x3c] sm:$0xe]
        %v4309 = vld [vmem:[#allocation2 + $0x48] sm:$0xe]
        %v4310 = vld [vmem:[#allocation2 + $0x54] sm:$0xe]
        %v4327 = vrot.slane %v4303, 5
        %v4328 = vrot.slane %v4327, 4
        %v4329 = vrot.slane %v3764, 5
        %v4330 = vsel %vm935, %v4328, %v4329
        %v4331 = vrot.slane %v4329, 4
        %v4332 = vrot.slane %v3781, 5
        %v4333 = vsel %vm935, %v4331, %v4332
        %v4334 = vrot.slane %v4304, 5
        %v4335 = vrot.slane %v4334, 4
        %v4336 = vrot.slane %v3766, 5
        %v4337 = vsel %vm935, %v4335, %v4336
        %v4338 = vrot.slane %v4336, 4
        %v4339 = vrot.slane %v3782, 5
        %v4340 = vsel %vm935, %v4338, %v4339
        %v4341 = vrot.slane %v4305, 5
        %v4342 = vrot.slane %v4341, 4
        %v4343 = vrot.slane %v3768, 5
        %v4344 = vsel %vm935, %v4342, %v4343
        %v4345 = vrot.slane %v4343, 4
        %v4346 = vrot.slane %v3783, 5
        %v4347 = vsel %vm935, %v4345, %v4346
        %v4348 = vrot.slane %v4306, 5
        %v4349 = vrot.slane %v4348, 4
        %v4350 = vrot.slane %v3770, 5
        %v4351 = vsel %vm935, %v4349, %v4350
        %v4352 = vrot.slane %v4350, 4
        %v4353 = vrot.slane %v3784, 5
        %v4354 = vsel %vm935, %v4352, %v4353
        %v4355 = vrot.slane %v4307, 5
        %v4356 = vrot.slane %v4355, 4
        %v4357 = vrot.slane %v3772, 5
        %v4358 = vsel %vm935, %v4356, %v4357
        %v4359 = vrot.slane %v4357, 4
        %v4360 = vrot.slane %v3785, 5
        %v4361 = vsel %vm935, %v4359, %v4360
        %v4362 = vrot.slane %v4308, 5
        %v4363 = vrot.slane %v4362, 4
        %v4364 = vrot.slane %v3774, 5
        %v4365 = vsel %vm935, %v4363, %v4364
        %v4366 = vrot.slane %v4364, 4
        %v4367 = vrot.slane %v3786, 5
        %v4368 = vsel %vm935, %v4366, %v4367
        %v4369 = vrot.slane %v4309, 5
        %v4370 = vrot.slane %v4369, 4
        %v4371 = vrot.slane %v3776, 5
        %v4372 = vsel %vm935, %v4370, %v4371
        %v4373 = vrot.slane %v4371, 4
        %v4374 = vrot.slane %v3787, 5
        %v4375 = vsel %vm935, %v4373, %v4374
        %v4376 = vrot.slane %v4310, 5
        %v4377 = vrot.slane %v4376, 4
        %v4378 = vrot.slane %v3778, 5
        %v4379 = vsel %vm935, %v4377, %v4378
        %v4380 = vrot.slane %v4378, 4
        %v4381 = vrot.slane %v3788, 5
        %v4382 = vsel %vm935, %v4380, %v4381
        %s4383 = scalar_lea.vmem %s3, 16
        %v4384 = vld [vmem:[%s4383] sm:$0xf]
        %v4385 = vld [vmem:[%s4383 + $0x4] sm:$0xf]
        %v4386 = vunpack.c.l.b16 %v4330
        %v4387 = vunpack.c.l.b16 %v4333
        %v4388 = vunpack.c.l.b16 %v4337
        %v4389 = vunpack.c.l.b16 %v4340
        %v4390 = vunpack.c.l.b16 %v4344
        %v4391 = vunpack.c.l.b16 %v4347
        %v4392 = vunpack.c.l.b16 %v4351
        %v4393 = vunpack.c.l.b16 %v4354
        %v4394 = vunpack.c.l.b16 %v4358
        %v4395 = vunpack.c.l.b16 %v4361
        %v4396 = vunpack.c.l.b16 %v4365
        %v4397 = vunpack.c.l.b16 %v4368
        %v4398 = vunpack.c.l.b16 %v4372
        %v4399 = vunpack.c.l.b16 %v4375
        %v4400 = vunpack.c.l.b16 %v4379
        %v4401 = vunpack.c.l.b16 %v4382
        %v4402 = vpack.c.b16 %v4387, %v4386
        %v4403 = vpack.c.b16 %v4389, %v4388
        %v4404 = vpack.c.b16 %v4391, %v4390
        %v4405 = vpack.c.b16 %v4393, %v4392
        %v4406 = vpack.c.b16 %v4395, %v4394
        %v4407 = vpack.c.b16 %v4397, %v4396
        %v4408 = vpack.c.b16 %v4399, %v4398
        %v4409 = vpack.c.b16 %v4401, %v4400
        %v4412 = vunpack.c.l.b16 %v4384
        %v4413 = vunpack.c.l.b16 %v4385
        %v4414 = vpack.c.b16 %v4413, %v4412
        %v4417 = vsel %vm4014, %v4402, 0
        %v4420 = vsel %vm4014, %v4403, 0
        %v4423 = vsel %vm4014, %v4404, 0
        %v4426 = vsel %vm4014, %v4405, 0
        %v4429 = vsel %vm4014, %v4406, 0
        %v4432 = vsel %vm4014, %v4407, 0
        %v4435 = vsel %vm4014, %v4408, 0
        %v4438 = vsel %vm4014, %v4409, 0
        %4440 = vmatprep.subr.bf16.mxu0 0
        %4441 = vmatpush1.bf16.msra.mxu0 %v4414
        %4442 = vmatprep.subr.bf16.mxu0 0
        %4443 = vmatpush1.bf16.msra.mxu0 0
        %4444 = vmatprep.subr.bf16.mxu0 0
        %4445 = vmatpush1.bf16.msra.mxu0 0
        %4446 = vmatprep.subr.bf16.mxu0 0
        %4447 = vmatpush1.bf16.msra.mxu0 0
        %4448 = vmatprep.subr.bf16.mxu0 0
        %4449 = vmatpush1.bf16.msra.mxu0 0
        %4450 = vmatprep.subr.bf16.mxu0 0
        %4451 = vmatpush1.bf16.msra.mxu0 0
        %4452 = vmatprep.subr.bf16.mxu0 0
        %4453 = vmatpush1.bf16.msra.mxu0 0
        %4454 = vmatprep.subr.bf16.mxu0 0
        %4455 = vmatpush1.bf16.msra.mxu0 0
        %4456 = vmatprep.subr.bf16.mxu0 0
        %4457 = vmatpush1.bf16.msra.mxu0 0
        %4458 = vmatprep.subr.bf16.mxu0 0
        %4459 = vmatpush1.bf16.msra.mxu0 0
        %4460 = vmatprep.subr.bf16.mxu0 0
        %4461 = vmatpush1.bf16.msra.mxu0 0
        %4462 = vmatprep.subr.bf16.mxu0 0
        %4463 = vmatpush1.bf16.msra.mxu0 0
        %4464 = vmatprep.subr.bf16.mxu0 0
        %4465 = vmatpush1.bf16.msra.mxu0 0
        %4466 = vmatprep.subr.bf16.mxu0 0
        %4467 = vmatpush1.bf16.msra.mxu0 0
        %4468 = vmatprep.subr.bf16.mxu0 0
        %4469 = vmatpush1.bf16.msra.mxu0 0
        %4470 = vmatprep.subr.bf16.mxu0 0
        %4471 = vmatpush1.bf16.msra.mxu0 0
        %4472 = vmatprep.mubr.bf16.mxu0 0
        %4473 = vmatmul.mubr.bf16.gmra.mrb[0].mxu0 %v4417
        %v4474 = vpop.f32.mrb[0].mxu0
        %v4475 = vadd.f32 0.0, %v4474
        %v4476 = vpop.f32.mrb[0].mxu0
        %v4477 = vpop.f32.mrb[0].mxu0
        %v4478 = vadd.f32 0.0, %v4477
        %v4479 = vpop.f32.mrb[0].mxu0
        %4480 = vmatprep.mubr.bf16.mxu0 0
        %4481 = vmatmul.mubr.bf16.gmra.mrb[0].mxu0 %v4420
        %v4482 = vpop.f32.mrb[0].mxu0
        %v4483 = vadd.f32 0.0, %v4482
        %v4484 = vpop.f32.mrb[0].mxu0
        %v4485 = vpop.f32.mrb[0].mxu0
        %v4486 = vadd.f32 0.0, %v4485
        %v4487 = vpop.f32.mrb[0].mxu0
        %4488 = vmatprep.mubr.bf16.mxu0 0
        %4489 = vmatmul.mubr.bf16.gmra.mrb[0].mxu0 %v4423
        %v4490 = vpop.f32.mrb[0].mxu0
        %v4491 = vadd.f32 0.0, %v4490
        %v4492 = vpop.f32.mrb[0].mxu0
        %v4493 = vpop.f32.mrb[0].mxu0
        %v4494 = vadd.f32 0.0, %v4493
        %v4495 = vpop.f32.mrb[0].mxu0
        %4496 = vmatprep.mubr.bf16.mxu0 0
        %4497 = vmatmul.mubr.bf16.gmra.mrb[0].mxu0 %v4426
        %v4498 = vpop.f32.mrb[0].mxu0
        %v4499 = vadd.f32 0.0, %v4498
        %v4500 = vpop.f32.mrb[0].mxu0
        %v4501 = vpop.f32.mrb[0].mxu0
        %v4502 = vadd.f32 0.0, %v4501
        %v4503 = vpop.f32.mrb[0].mxu0
        %4504 = vmatprep.mubr.bf16.mxu0 0
        %4505 = vmatmul.mubr.bf16.gmra.mrb[0].mxu0 %v4429
        %v4506 = vpop.f32.mrb[0].mxu0
        %v4507 = vadd.f32 0.0, %v4506
        %v4508 = vpop.f32.mrb[0].mxu0
        %v4509 = vpop.f32.mrb[0].mxu0
        %v4510 = vadd.f32 0.0, %v4509
        %v4511 = vpop.f32.mrb[0].mxu0
        %4512 = vmatprep.mubr.bf16.mxu0 0
        %4513 = vmatmul.mubr.bf16.gmra.mrb[0].mxu0 %v4432
        %v4514 = vpop.f32.mrb[0].mxu0
        %v4515 = vadd.f32 0.0, %v4514
        %v4516 = vpop.f32.mrb[0].mxu0
        %v4517 = vpop.f32.mrb[0].mxu0
        %v4518 = vadd.f32 0.0, %v4517
        %v4519 = vpop.f32.mrb[0].mxu0
        %4520 = vmatprep.mubr.bf16.mxu0 0
        %4521 = vmatmul.mubr.bf16.gmra.mrb[0].mxu0 %v4435
        %v4522 = vpop.f32.mrb[0].mxu0
        %v4523 = vadd.f32 0.0, %v4522
        %v4524 = vpop.f32.mrb[0].mxu0
        %v4525 = vpop.f32.mrb[0].mxu0
        %v4526 = vadd.f32 0.0, %v4525
        %v4527 = vpop.f32.mrb[0].mxu0
        %4528 = vmatprep.mubr.bf16.mxu0 0
        %4529 = vmatmul.mubr.bf16.gmra.mrb[0].mxu0 %v4438
        %v4530 = vpop.f32.mrb[0].mxu0
        %v4531 = vadd.f32 0.0, %v4530
        %v4532 = vpop.f32.mrb[0].mxu0
        %v4533 = vpop.f32.mrb[0].mxu0
        %v4534 = vadd.f32 0.0, %v4533
        %v4535 = vpop.f32.mrb[0].mxu0
        %4536 = vdwg.mxu0
        %v4537 = vadd.f32 %v4241, %v4475
        %v4538 = vadd.f32 %v4244, %v4478
        %v4539 = vadd.f32 %v4249, %v4483
        %v4540 = vadd.f32 %v4252, %v4486
        %v4541 = vadd.f32 %v4257, %v4491
        %v4542 = vadd.f32 %v4260, %v4494
        %v4543 = vadd.f32 %v4265, %v4499
        %v4544 = vadd.f32 %v4268, %v4502
        %v4545 = vadd.f32 %v4273, %v4507
        %v4546 = vadd.f32 %v4276, %v4510
        %v4547 = vadd.f32 %v4281, %v4515
        %v4548 = vadd.f32 %v4284, %v4518
        %v4549 = vadd.f32 %v4289, %v4523
        %v4550 = vadd.f32 %v4292, %v4526
        %v4551 = vadd.f32 %v4297, %v4531
        %v4552 = vadd.f32 %v4300, %v4534
        %s4553 = scalar_lea.vmem [#allocation2], 12
        %v4554 = vld [vmem:[%s4553] sm:$0xf]
        %v4555 = vld [vmem:[%s4553 + $0x4] sm:$0xf]
        %v4556 = vld [vmem:[%s4553 + $0xc] sm:$0xf]
        %v4557 = vld [vmem:[%s4553 + $0x10] sm:$0xf]
        %v4558 = vld [vmem:[%s4553 + $0x18] sm:$0xf]
        %v4559 = vld [vmem:[%s4553 + $0x1c] sm:$0xf]
        %v4560 = vld [vmem:[%s4553 + $0x24] sm:$0xf]
        %v4561 = vld [vmem:[%s4553 + $0x28] sm:$0xf]
        %v4562 = vld [vmem:[%s4553 + $0x30] sm:$0xf]
        %v4563 = vld [vmem:[%s4553 + $0x34] sm:$0xf]
        %v4564 = vld [vmem:[%s4553 + $0x3c] sm:$0xf]
        %v4565 = vld [vmem:[%s4553 + $0x40] sm:$0xf]
        %v4566 = vld [vmem:[%s4553 + $0x48] sm:$0xf]
        %v4567 = vld [vmem:[%s4553 + $0x4c] sm:$0xf]
        %v4568 = vld [vmem:[%s4553 + $0x54] sm:$0xf]
        %v4569 = vld [vmem:[%s4553 + $0x58] sm:$0xf]
        %s4570 = scalar_lea.vmem %s3, 24
        %v4571 = vld [vmem:[%s4570] sm:$0xf]
        %v4572 = vld [vmem:[%s4570 + $0x4] sm:$0xf]
        %v4589 = vunpack.c.l.b16 %v4554
        %v4590 = vunpack.c.l.b16 %v4555
        %v4591 = vunpack.c.l.b16 %v4556
        %v4592 = vunpack.c.l.b16 %v4557
        %v4593 = vunpack.c.l.b16 %v4558
        %v4594 = vunpack.c.l.b16 %v4559
        %v4595 = vunpack.c.l.b16 %v4560
        %v4596 = vunpack.c.l.b16 %v4561
        %v4597 = vunpack.c.l.b16 %v4562
        %v4598 = vunpack.c.l.b16 %v4563
        %v4599 = vunpack.c.l.b16 %v4564
        %v4600 = vunpack.c.l.b16 %v4565
        %v4601 = vunpack.c.l.b16 %v4566
        %v4602 = vunpack.c.l.b16 %v4567
        %v4603 = vunpack.c.l.b16 %v4568
        %v4604 = vunpack.c.l.b16 %v4569
        %v4605 = vpack.c.b16 %v4590, %v4589
        %v4606 = vpack.c.b16 %v4592, %v4591
        %v4607 = vpack.c.b16 %v4594, %v4593
        %v4608 = vpack.c.b16 %v4596, %v4595
        %v4609 = vpack.c.b16 %v4598, %v4597
        %v4610 = vpack.c.b16 %v4600, %v4599
        %v4611 = vpack.c.b16 %v4602, %v4601
        %v4612 = vpack.c.b16 %v4604, %v4603
        %v4615 = vunpack.c.l.b16 %v4571
        %v4616 = vunpack.c.l.b16 %v4572
        %v4617 = vpack.c.b16 %v4616, %v4615
        %v4620 = vsel %vm4014, %v4605, 0
        %v4623 = vsel %vm4014, %v4606, 0
        %v4626 = vsel %vm4014, %v4607, 0
        %v4629 = vsel %vm4014, %v4608, 0
        %v4632 = vsel %vm4014, %v4609, 0
        %v4635 = vsel %vm4014, %v4610, 0
        %v4638 = vsel %vm4014, %v4611, 0
        %v4641 = vsel %vm4014, %v4612, 0
        %4643 = vmatprep.subr.bf16.mxu0 0
        %4644 = vmatpush1.bf16.msra.mxu0 %v4617
        %4645 = vmatprep.subr.bf16.mxu0 0
        %4646 = vmatpush1.bf16.msra.mxu0 0
        %4647 = vmatprep.subr.bf16.mxu0 0
        %4648 = vmatpush1.bf16.msra.mxu0 0
        %4649 = vmatprep.subr.bf16.mxu0 0
        %4650 = vmatpush1.bf16.msra.mxu0 0
        %4651 = vmatprep.subr.bf16.mxu0 0
        %4652 = vmatpush1.bf16.msra.mxu0 0
        %4653 = vmatprep.subr.bf16.mxu0 0
        %4654 = vmatpush1.bf16.msra.mxu0 0
        %4655 = vmatprep.subr.bf16.mxu0 0
        %4656 = vmatpush1.bf16.msra.mxu0 0
        %4657 = vmatprep.subr.bf16.mxu0 0
        %4658 = vmatpush1.bf16.msra.mxu0 0
        %4659 = vmatprep.subr.bf16.mxu0 0
        %4660 = vmatpush1.bf16.msra.mxu0 0
        %4661 = vmatprep.subr.bf16.mxu0 0
        %4662 = vmatpush1.bf16.msra.mxu0 0
        %4663 = vmatprep.subr.bf16.mxu0 0
        %4664 = vmatpush1.bf16.msra.mxu0 0
        %4665 = vmatprep.subr.bf16.mxu0 0
        %4666 = vmatpush1.bf16.msra.mxu0 0
        %4667 = vmatprep.subr.bf16.mxu0 0
        %4668 = vmatpush1.bf16.msra.mxu0 0
        %4669 = vmatprep.subr.bf16.mxu0 0
        %4670 = vmatpush1.bf16.msra.mxu0 0
        %4671 = vmatprep.subr.bf16.mxu0 0
        %4672 = vmatpush1.bf16.msra.mxu0 0
        %4673 = vmatprep.subr.bf16.mxu0 0
        %4674 = vmatpush1.bf16.msra.mxu0 0
        %4675 = vmatprep.mubr.bf16.mxu0 0
        %4676 = vmatmul.mubr.bf16.gmra.mrb[0].mxu0 %v4620
        %v4677 = vpop.f32.mrb[0].mxu0
        %v4678 = vadd.f32 0.0, %v4677
        %v4679 = vpop.f32.mrb[0].mxu0
        %v4680 = vpop.f32.mrb[0].mxu0
        %v4681 = vadd.f32 0.0, %v4680
        %v4682 = vpop.f32.mrb[0].mxu0
        %4683 = vmatprep.mubr.bf16.mxu0 0
        %4684 = vmatmul.mubr.bf16.gmra.mrb[0].mxu0 %v4623
        %v4685 = vpop.f32.mrb[0].mxu0
        %v4686 = vadd.f32 0.0, %v4685
        %v4687 = vpop.f32.mrb[0].mxu0
        %v4688 = vpop.f32.mrb[0].mxu0
        %v4689 = vadd.f32 0.0, %v4688
        %v4690 = vpop.f32.mrb[0].mxu0
        %4691 = vmatprep.mubr.bf16.mxu0 0
        %4692 = vmatmul.mubr.bf16.gmra.mrb[0].mxu0 %v4626
        %v4693 = vpop.f32.mrb[0].mxu0
        %v4694 = vadd.f32 0.0, %v4693
        %v4695 = vpop.f32.mrb[0].mxu0
        %v4696 = vpop.f32.mrb[0].mxu0
        %v4697 = vadd.f32 0.0, %v4696
        %v4698 = vpop.f32.mrb[0].mxu0
        %4699 = vmatprep.mubr.bf16.mxu0 0
        %4700 = vmatmul.mubr.bf16.gmra.mrb[0].mxu0 %v4629
        %v4701 = vpop.f32.mrb[0].mxu0
        %v4702 = vadd.f32 0.0, %v4701
        %v4703 = vpop.f32.mrb[0].mxu0
        %v4704 = vpop.f32.mrb[0].mxu0
        %v4705 = vadd.f32 0.0, %v4704
        %v4706 = vpop.f32.mrb[0].mxu0
        %4707 = vmatprep.mubr.bf16.mxu0 0
        %4708 = vmatmul.mubr.bf16.gmra.mrb[0].mxu0 %v4632
        %v4709 = vpop.f32.mrb[0].mxu0
        %v4710 = vadd.f32 0.0, %v4709
        %v4711 = vpop.f32.mrb[0].mxu0
        %v4712 = vpop.f32.mrb[0].mxu0
        %v4713 = vadd.f32 0.0, %v4712
        %v4714 = vpop.f32.mrb[0].mxu0
        %4715 = vmatprep.mubr.bf16.mxu0 0
        %4716 = vmatmul.mubr.bf16.gmra.mrb[0].mxu0 %v4635
        %v4717 = vpop.f32.mrb[0].mxu0
        %v4718 = vadd.f32 0.0, %v4717
        %v4719 = vpop.f32.mrb[0].mxu0
        %v4720 = vpop.f32.mrb[0].mxu0
        %v4721 = vadd.f32 0.0, %v4720
        %v4722 = vpop.f32.mrb[0].mxu0
        %4723 = vmatprep.mubr.bf16.mxu0 0
        %4724 = vmatmul.mubr.bf16.gmra.mrb[0].mxu0 %v4638
        %v4725 = vpop.f32.mrb[0].mxu0
        %v4726 = vadd.f32 0.0, %v4725
        %v4727 = vpop.f32.mrb[0].mxu0
        %v4728 = vpop.f32.mrb[0].mxu0
        %v4729 = vadd.f32 0.0, %v4728
        %v4730 = vpop.f32.mrb[0].mxu0
        %4731 = vmatprep.mubr.bf16.mxu0 0
        %4732 = vmatmul.mubr.bf16.gmra.mrb[0].mxu0 %v4641
        %v4733 = vpop.f32.mrb[0].mxu0
        %v4734 = vadd.f32 0.0, %v4733
        %v4735 = vpop.f32.mrb[0].mxu0
        %v4736 = vpop.f32.mrb[0].mxu0
        %v4737 = vadd.f32 0.0, %v4736
        %v4738 = vpop.f32.mrb[0].mxu0
        %4739 = vdwg.mxu0
        %v4740 = vadd.f32 %v4537, %v4678
        %v4741 = vadd.f32 %v4538, %v4681
        %v4742 = vadd.f32 %v4539, %v4686
        %v4743 = vadd.f32 %v4540, %v4689
        %v4744 = vadd.f32 %v4541, %v4694
        %v4745 = vadd.f32 %v4542, %v4697
        %v4746 = vadd.f32 %v4543, %v4702
        %v4747 = vadd.f32 %v4544, %v4705
        %v4748 = vadd.f32 %v4545, %v4710
        %v4749 = vadd.f32 %v4546, %v4713
        %v4750 = vadd.f32 %v4547, %v4718
        %v4751 = vadd.f32 %v4548, %v4721
        %v4752 = vadd.f32 %v4549, %v4726
        %v4753 = vadd.f32 %v4550, %v4729
        %v4754 = vadd.f32 %v4551, %v4734
        %v4755 = vadd.f32 %v4552, %v4737
        %v4756 = vld [vmem:[%s4553] sm:$0xf]
        %v4757 = vld [vmem:[%s4553 + $0x4] sm:$0xf]
        %v4758 = vld [vmem:[%s4553 + $0x8] sm:$0x1]
        %v4759 = vld [vmem:[%s4553 + $0xc] sm:$0xf]
        %v4760 = vld [vmem:[%s4553 + $0x10] sm:$0xf]
        %v4761 = vld [vmem:[%s4553 + $0x14] sm:$0x1]
        %v4762 = vld [vmem:[%s4553 + $0x18] sm:$0xf]
        %v4763 = vld [vmem:[%s4553 + $0x1c] sm:$0xf]
        %v4764 = vld [vmem:[%s4553 + $0x20] sm:$0x1]
        %v4765 = vld [vmem:[%s4553 + $0x24] sm:$0xf]
        %v4766 = vld [vmem:[%s4553 + $0x28] sm:$0xf]
        %v4767 = vld [vmem:[%s4553 + $0x2c] sm:$0x1]
        %v4768 = vld [vmem:[%s4553 + $0x30] sm:$0xf]
        %v4769 = vld [vmem:[%s4553 + $0x34] sm:$0xf]
        %v4770 = vld [vmem:[%s4553 + $0x38] sm:$0x1]
        %v4771 = vld [vmem:[%s4553 + $0x3c] sm:$0xf]
        %v4772 = vld [vmem:[%s4553 + $0x40] sm:$0xf]
        %v4773 = vld [vmem:[%s4553 + $0x44] sm:$0x1]
        %v4774 = vld [vmem:[%s4553 + $0x48] sm:$0xf]
        %v4775 = vld [vmem:[%s4553 + $0x4c] sm:$0xf]
        %v4776 = vld [vmem:[%s4553 + $0x50] sm:$0x1]
        %v4777 = vld [vmem:[%s4553 + $0x54] sm:$0xf]
        %v4778 = vld [vmem:[%s4553 + $0x58] sm:$0xf]
        %v4779 = vld [vmem:[%s4553 + $0x5c] sm:$0x1]
        %v4781 = vshrl.u32 %v4756, 16
        %v4783 = vrot.slane %v4781, 4
        %v4784 = vshll.u32 %v4756, 16
        %v4786 = vrot.slane %v4784, 5
        %v4787 = vor.u32 %v4783, %v4786
        %v4788 = vrot.slane %v4787, 4
        %v4790 = vshll.u32 %v4757, 16
        %v4792 = vrot.slane %v4790, 5
        %v4793 = vsel %vm286, %v4788, %v4792
        %v4794 = vshrl.u32 %v4757, 16
        %v4796 = vrot.slane %v4794, 4
        %v4797 = vor.u32 %v4796, %v4792
        %v4798 = vrot.slane %v4797, 4
        %v4800 = vshll.u32 %v4758, 16
        %v4802 = vrot.slane %v4800, 5
        %v4803 = vsel %vm286, %v4798, %v4802
        %v4805 = vshrl.u32 %v4759, 16
        %v4807 = vrot.slane %v4805, 4
        %v4808 = vshll.u32 %v4759, 16
        %v4810 = vrot.slane %v4808, 5
        %v4811 = vor.u32 %v4807, %v4810
        %v4812 = vrot.slane %v4811, 4
        %v4814 = vshll.u32 %v4760, 16
        %v4816 = vrot.slane %v4814, 5
        %v4817 = vsel %vm286, %v4812, %v4816
        %v4818 = vshrl.u32 %v4760, 16
        %v4820 = vrot.slane %v4818, 4
        %v4821 = vor.u32 %v4820, %v4816
        %v4822 = vrot.slane %v4821, 4
        %v4824 = vshll.u32 %v4761, 16
        %v4826 = vrot.slane %v4824, 5
        %v4827 = vsel %vm286, %v4822, %v4826
        %v4829 = vshrl.u32 %v4762, 16
        %v4831 = vrot.slane %v4829, 4
        %v4832 = vshll.u32 %v4762, 16
        %v4834 = vrot.slane %v4832, 5
        %v4835 = vor.u32 %v4831, %v4834
        %v4836 = vrot.slane %v4835, 4
        %v4838 = vshll.u32 %v4763, 16
        %v4840 = vrot.slane %v4838, 5
        %v4841 = vsel %vm286, %v4836, %v4840
        %v4842 = vshrl.u32 %v4763, 16
        %v4844 = vrot.slane %v4842, 4
        %v4845 = vor.u32 %v4844, %v4840
        %v4846 = vrot.slane %v4845, 4
        %v4848 = vshll.u32 %v4764, 16
        %v4850 = vrot.slane %v4848, 5
        %v4851 = vsel %vm286, %v4846, %v4850
        %v4853 = vshrl.u32 %v4765, 16
        %v4855 = vrot.slane %v4853, 4
        %v4856 = vshll.u32 %v4765, 16
        %v4858 = vrot.slane %v4856, 5
        %v4859 = vor.u32 %v4855, %v4858
        %v4860 = vrot.slane %v4859, 4
        %v4862 = vshll.u32 %v4766, 16
        %v4864 = vrot.slane %v4862, 5
        %v4865 = vsel %vm286, %v4860, %v4864
        %v4866 = vshrl.u32 %v4766, 16
        %v4868 = vrot.slane %v4866, 4
        %v4869 = vor.u32 %v4868, %v4864
        %v4870 = vrot.slane %v4869, 4
        %v4872 = vshll.u32 %v4767, 16
        %v4874 = vrot.slane %v4872, 5
        %v4875 = vsel %vm286, %v4870, %v4874
        %v4877 = vshrl.u32 %v4768, 16
        %v4879 = vrot.slane %v4877, 4
        %v4880 = vshll.u32 %v4768, 16
        %v4882 = vrot.slane %v4880, 5
        %v4883 = vor.u32 %v4879, %v4882
        %v4884 = vrot.slane %v4883, 4
        %v4886 = vshll.u32 %v4769, 16
        %v4888 = vrot.slane %v4886, 5
        %v4889 = vsel %vm286, %v4884, %v4888
        %v4890 = vshrl.u32 %v4769, 16
        %v4892 = vrot.slane %v4890, 4
        %v4893 = vor.u32 %v4892, %v4888
        %v4894 = vrot.slane %v4893, 4
        %v4896 = vshll.u32 %v4770, 16
        %v4898 = vrot.slane %v4896, 5
        %v4899 = vsel %vm286, %v4894, %v4898
        %v4901 = vshrl.u32 %v4771, 16
        %v4903 = vrot.slane %v4901, 4
        %v4904 = vshll.u32 %v4771, 16
        %v4906 = vrot.slane %v4904, 5
        %v4907 = vor.u32 %v4903, %v4906
        %v4908 = vrot.slane %v4907, 4
        %v4910 = vshll.u32 %v4772, 16
        %v4912 = vrot.slane %v4910, 5
        %v4913 = vsel %vm286, %v4908, %v4912
        %v4914 = vshrl.u32 %v4772, 16
        %v4916 = vrot.slane %v4914, 4
        %v4917 = vor.u32 %v4916, %v4912
        %v4918 = vrot.slane %v4917, 4
        %v4920 = vshll.u32 %v4773, 16
        %v4922 = vrot.slane %v4920, 5
        %v4923 = vsel %vm286, %v4918, %v4922
        %v4925 = vshrl.u32 %v4774, 16
        %v4927 = vrot.slane %v4925, 4
        %v4928 = vshll.u32 %v4774, 16
        %v4930 = vrot.slane %v4928, 5
        %v4931 = vor.u32 %v4927, %v4930
        %v4932 = vrot.slane %v4931, 4
        %v4934 = vshll.u32 %v4775, 16
        %v4936 = vrot.slane %v4934, 5
        %v4937 = vsel %vm286, %v4932, %v4936
        %v4938 = vshrl.u32 %v4775, 16
        %v4940 = vrot.slane %v4938, 4
        %v4941 = vor.u32 %v4940, %v4936
        %v4942 = vrot.slane %v4941, 4
        %v4944 = vshll.u32 %v4776, 16
        %v4946 = vrot.slane %v4944, 5
        %v4947 = vsel %vm286, %v4942, %v4946
        %v4949 = vshrl.u32 %v4777, 16
        %v4951 = vrot.slane %v4949, 4
        %v4952 = vshll.u32 %v4777, 16
        %v4954 = vrot.slane %v4952, 5
        %v4955 = vor.u32 %v4951, %v4954
        %v4956 = vrot.slane %v4955, 4
        %v4958 = vshll.u32 %v4778, 16
        %v4960 = vrot.slane %v4958, 5
        %v4961 = vsel %vm286, %v4956, %v4960
        %v4962 = vshrl.u32 %v4778, 16
        %v4964 = vrot.slane %v4962, 4
        %v4965 = vor.u32 %v4964, %v4960
        %v4966 = vrot.slane %v4965, 4
        %v4968 = vshll.u32 %v4779, 16
        %v4970 = vrot.slane %v4968, 5
        %v4971 = vsel %vm286, %v4966, %v4970
        %s4972 = scalar_lea.vmem %s3, 32
        %v4973 = vld [vmem:[%s4972] sm:$0xf]
        %v4974 = vld [vmem:[%s4972 + $0x4] sm:$0xf]
        %v4975 = vunpack.c.l.b16 %v4793
        %v4976 = vunpack.c.l.b16 %v4803
        %v4977 = vunpack.c.l.b16 %v4817
        %v4978 = vunpack.c.l.b16 %v4827
        %v4979 = vunpack.c.l.b16 %v4841
        %v4980 = vunpack.c.l.b16 %v4851
        %v4981 = vunpack.c.l.b16 %v4865
        %v4982 = vunpack.c.l.b16 %v4875
        %v4983 = vunpack.c.l.b16 %v4889
        %v4984 = vunpack.c.l.b16 %v4899
        %v4985 = vunpack.c.l.b16 %v4913
        %v4986 = vunpack.c.l.b16 %v4923
        %v4987 = vunpack.c.l.b16 %v4937
        %v4988 = vunpack.c.l.b16 %v4947
        %v4989 = vunpack.c.l.b16 %v4961
        %v4990 = vunpack.c.l.b16 %v4971
        %v4991 = vpack.c.b16 %v4976, %v4975
        %v4992 = vpack.c.b16 %v4978, %v4977
        %v4993 = vpack.c.b16 %v4980, %v4979
        %v4994 = vpack.c.b16 %v4982, %v4981
        %v4995 = vpack.c.b16 %v4984, %v4983
        %v4996 = vpack.c.b16 %v4986, %v4985
        %v4997 = vpack.c.b16 %v4988, %v4987
        %v4998 = vpack.c.b16 %v4990, %v4989
        %v5001 = vunpack.c.l.b16 %v4973
        %v5002 = vunpack.c.l.b16 %v4974
        %v5003 = vpack.c.b16 %v5002, %v5001
        %v5006 = vsel %vm4014, %v4991, 0
        %v5009 = vsel %vm4014, %v4992, 0
        %v5012 = vsel %vm4014, %v4993, 0
        %v5015 = vsel %vm4014, %v4994, 0
        %v5018 = vsel %vm4014, %v4995, 0
        %v5021 = vsel %vm4014, %v4996, 0
        %v5024 = vsel %vm4014, %v4997, 0
        %v5027 = vsel %vm4014, %v4998, 0
        %5029 = vmatprep.subr.bf16.mxu0 0
        %5030 = vmatpush1.bf16.msra.mxu0 %v5003
        %5031 = vmatprep.subr.bf16.mxu0 0
        %5032 = vmatpush1.bf16.msra.mxu0 0
        %5033 = vmatprep.subr.bf16.mxu0 0
        %5034 = vmatpush1.bf16.msra.mxu0 0
        %5035 = vmatprep.subr.bf16.mxu0 0
        %5036 = vmatpush1.bf16.msra.mxu0 0
        %5037 = vmatprep.subr.bf16.mxu0 0
        %5038 = vmatpush1.bf16.msra.mxu0 0
        %5039 = vmatprep.subr.bf16.mxu0 0
        %5040 = vmatpush1.bf16.msra.mxu0 0
        %5041 = vmatprep.subr.bf16.mxu0 0
        %5042 = vmatpush1.bf16.msra.mxu0 0
        %5043 = vmatprep.subr.bf16.mxu0 0
        %5044 = vmatpush1.bf16.msra.mxu0 0
        %5045 = vmatprep.subr.bf16.mxu0 0
        %5046 = vmatpush1.bf16.msra.mxu0 0
        %5047 = vmatprep.subr.bf16.mxu0 0
        %5048 = vmatpush1.bf16.msra.mxu0 0
        %5049 = vmatprep.subr.bf16.mxu0 0
        %5050 = vmatpush1.bf16.msra.mxu0 0
        %5051 = vmatprep.subr.bf16.mxu0 0
        %5052 = vmatpush1.bf16.msra.mxu0 0
        %5053 = vmatprep.subr.bf16.mxu0 0
        %5054 = vmatpush1.bf16.msra.mxu0 0
        %5055 = vmatprep.subr.bf16.mxu0 0
        %5056 = vmatpush1.bf16.msra.mxu0 0
        %5057 = vmatprep.subr.bf16.mxu0 0
        %5058 = vmatpush1.bf16.msra.mxu0 0
        %5059 = vmatprep.subr.bf16.mxu0 0
        %5060 = vmatpush1.bf16.msra.mxu0 0
        %5061 = vmatprep.mubr.bf16.mxu0 0
        %5062 = vmatmul.mubr.bf16.gmra.mrb[0].mxu0 %v5006
        %v5063 = vpop.f32.mrb[0].mxu0
        %v5064 = vadd.f32 0.0, %v5063
        %v5065 = vpop.f32.mrb[0].mxu0
        %v5066 = vpop.f32.mrb[0].mxu0
        %v5067 = vadd.f32 0.0, %v5066
        %v5068 = vpop.f32.mrb[0].mxu0
        %5069 = vmatprep.mubr.bf16.mxu0 0
        %5070 = vmatmul.mubr.bf16.gmra.mrb[0].mxu0 %v5009
        %v5071 = vpop.f32.mrb[0].mxu0
        %v5072 = vadd.f32 0.0, %v5071
        %v5073 = vpop.f32.mrb[0].mxu0
        %v5074 = vpop.f32.mrb[0].mxu0
        %v5075 = vadd.f32 0.0, %v5074
        %v5076 = vpop.f32.mrb[0].mxu0
        %5077 = vmatprep.mubr.bf16.mxu0 0
        %5078 = vmatmul.mubr.bf16.gmra.mrb[0].mxu0 %v5012
        %v5079 = vpop.f32.mrb[0].mxu0
        %v5080 = vadd.f32 0.0, %v5079
        %v5081 = vpop.f32.mrb[0].mxu0
        %v5082 = vpop.f32.mrb[0].mxu0
        %v5083 = vadd.f32 0.0, %v5082
        %v5084 = vpop.f32.mrb[0].mxu0
        %5085 = vmatprep.mubr.bf16.mxu0 0
        %5086 = vmatmul.mubr.bf16.gmra.mrb[0].mxu0 %v5015
        %v5087 = vpop.f32.mrb[0].mxu0
        %v5088 = vadd.f32 0.0, %v5087
        %v5089 = vpop.f32.mrb[0].mxu0
        %v5090 = vpop.f32.mrb[0].mxu0
        %v5091 = vadd.f32 0.0, %v5090
        %v5092 = vpop.f32.mrb[0].mxu0
        %5093 = vmatprep.mubr.bf16.mxu0 0
        %5094 = vmatmul.mubr.bf16.gmra.mrb[0].mxu0 %v5018
        %v5095 = vpop.f32.mrb[0].mxu0
        %v5096 = vadd.f32 0.0, %v5095
        %v5097 = vpop.f32.mrb[0].mxu0
        %v5098 = vpop.f32.mrb[0].mxu0
        %v5099 = vadd.f32 0.0, %v5098
        %v5100 = vpop.f32.mrb[0].mxu0
        %5101 = vmatprep.mubr.bf16.mxu0 0
        %5102 = vmatmul.mubr.bf16.gmra.mrb[0].mxu0 %v5021
        %v5103 = vpop.f32.mrb[0].mxu0
        %v5104 = vadd.f32 0.0, %v5103
        %v5105 = vpop.f32.mrb[0].mxu0
        %v5106 = vpop.f32.mrb[0].mxu0
        %v5107 = vadd.f32 0.0, %v5106
        %v5108 = vpop.f32.mrb[0].mxu0
        %5109 = vmatprep.mubr.bf16.mxu0 0
        %5110 = vmatmul.mubr.bf16.gmra.mrb[0].mxu0 %v5024
        %v5111 = vpop.f32.mrb[0].mxu0
        %v5112 = vadd.f32 0.0, %v5111
        %v5113 = vpop.f32.mrb[0].mxu0
        %v5114 = vpop.f32.mrb[0].mxu0
        %v5115 = vadd.f32 0.0, %v5114
        %v5116 = vpop.f32.mrb[0].mxu0
        %5117 = vmatprep.mubr.bf16.mxu0 0
        %5118 = vmatmul.mubr.bf16.gmra.mrb[0].mxu0 %v5027
        %v5119 = vpop.f32.mrb[0].mxu0
        %v5120 = vadd.f32 0.0, %v5119
        %v5121 = vpop.f32.mrb[0].mxu0
        %v5122 = vpop.f32.mrb[0].mxu0
        %v5123 = vadd.f32 0.0, %v5122
        %v5124 = vpop.f32.mrb[0].mxu0
        %5125 = vdwg.mxu0
        %v5126 = vadd.f32 %v4740, %v5064
        %v5127 = vadd.f32 %v4741, %v5067
        %v5128 = vadd.f32 %v4742, %v5072
        %v5129 = vadd.f32 %v4743, %v5075
        %v5130 = vadd.f32 %v4744, %v5080
        %v5131 = vadd.f32 %v4745, %v5083
        %v5132 = vadd.f32 %v4746, %v5088
        %v5133 = vadd.f32 %v4747, %v5091
        %v5134 = vadd.f32 %v4748, %v5096
        %v5135 = vadd.f32 %v4749, %v5099
        %v5136 = vadd.f32 %v4750, %v5104
        %v5137 = vadd.f32 %v4751, %v5107
        %v5138 = vadd.f32 %v4752, %v5112
        %v5139 = vadd.f32 %v4753, %v5115
        %v5140 = vadd.f32 %v4754, %v5120
        %v5141 = vadd.f32 %v4755, %v5123
        %v5142 = vld [vmem:[%s4553] sm:$0xe]
        %v5143 = vld [vmem:[%s4553 + $0xc] sm:$0xe]
        %v5144 = vld [vmem:[%s4553 + $0x18] sm:$0xe]
        %v5145 = vld [vmem:[%s4553 + $0x24] sm:$0xe]
        %v5146 = vld [vmem:[%s4553 + $0x30] sm:$0xe]
        %v5147 = vld [vmem:[%s4553 + $0x3c] sm:$0xe]
        %v5148 = vld [vmem:[%s4553 + $0x48] sm:$0xe]
        %v5149 = vld [vmem:[%s4553 + $0x54] sm:$0xe]
        %v5174 = vrot.slane %v5142, 5
        %v5175 = vrot.slane %v5174, 4
        %v5176 = vrot.slane %v4757, 5
        %v5177 = vsel %vm935, %v5175, %v5176
        %v5178 = vrot.slane %v5176, 4
        %v5179 = vrot.slane %v4758, 5
        %v5180 = vsel %vm935, %v5178, %v5179
        %v5181 = vrot.slane %v5143, 5
        %v5182 = vrot.slane %v5181, 4
        %v5183 = vrot.slane %v4760, 5
        %v5184 = vsel %vm935, %v5182, %v5183
        %v5185 = vrot.slane %v5183, 4
        %v5186 = vrot.slane %v4761, 5
        %v5187 = vsel %vm935, %v5185, %v5186
        %v5188 = vrot.slane %v5144, 5
        %v5189 = vrot.slane %v5188, 4
        %v5190 = vrot.slane %v4763, 5
        %v5191 = vsel %vm935, %v5189, %v5190
        %v5192 = vrot.slane %v5190, 4
        %v5193 = vrot.slane %v4764, 5
        %v5194 = vsel %vm935, %v5192, %v5193
        %v5195 = vrot.slane %v5145, 5
        %v5196 = vrot.slane %v5195, 4
        %v5197 = vrot.slane %v4766, 5
        %v5198 = vsel %vm935, %v5196, %v5197
        %v5199 = vrot.slane %v5197, 4
        %v5200 = vrot.slane %v4767, 5
        %v5201 = vsel %vm935, %v5199, %v5200
        %v5202 = vrot.slane %v5146, 5
        %v5203 = vrot.slane %v5202, 4
        %v5204 = vrot.slane %v4769, 5
        %v5205 = vsel %vm935, %v5203, %v5204
        %v5206 = vrot.slane %v5204, 4
        %v5207 = vrot.slane %v4770, 5
        %v5208 = vsel %vm935, %v5206, %v5207
        %v5209 = vrot.slane %v5147, 5
        %v5210 = vrot.slane %v5209, 4
        %v5211 = vrot.slane %v4772, 5
        %v5212 = vsel %vm935, %v5210, %v5211
        %v5213 = vrot.slane %v5211, 4
        %v5214 = vrot.slane %v4773, 5
        %v5215 = vsel %vm935, %v5213, %v5214
        %v5216 = vrot.slane %v5148, 5
        %v5217 = vrot.slane %v5216, 4
        %v5218 = vrot.slane %v4775, 5
        %v5219 = vsel %vm935, %v5217, %v5218
        %v5220 = vrot.slane %v5218, 4
        %v5221 = vrot.slane %v4776, 5
        %v5222 = vsel %vm935, %v5220, %v5221
        %v5223 = vrot.slane %v5149, 5
        %v5224 = vrot.slane %v5223, 4
        %v5225 = vrot.slane %v4778, 5
        %v5226 = vsel %vm935, %v5224, %v5225
        %v5227 = vrot.slane %v5225, 4
        %v5228 = vrot.slane %v4779, 5
        %v5229 = vsel %vm935, %v5227, %v5228
        %s5230 = scalar_lea.vmem %s3, 40
        %v5231 = vld [vmem:[%s5230] sm:$0xf]
        %v5232 = vld [vmem:[%s5230 + $0x4] sm:$0xf]
        %v5233 = vunpack.c.l.b16 %v5177
        %v5234 = vunpack.c.l.b16 %v5180
        %v5235 = vunpack.c.l.b16 %v5184
        %v5236 = vunpack.c.l.b16 %v5187
        %v5237 = vunpack.c.l.b16 %v5191
        %v5238 = vunpack.c.l.b16 %v5194
        %v5239 = vunpack.c.l.b16 %v5198
        %v5240 = vunpack.c.l.b16 %v5201
        %v5241 = vunpack.c.l.b16 %v5205
        %v5242 = vunpack.c.l.b16 %v5208
        %v5243 = vunpack.c.l.b16 %v5212
        %v5244 = vunpack.c.l.b16 %v5215
        %v5245 = vunpack.c.l.b16 %v5219
        %v5246 = vunpack.c.l.b16 %v5222
        %v5247 = vunpack.c.l.b16 %v5226
        %v5248 = vunpack.c.l.b16 %v5229
        %v5249 = vpack.c.b16 %v5234, %v5233
        %v5250 = vpack.c.b16 %v5236, %v5235
        %v5251 = vpack.c.b16 %v5238, %v5237
        %v5252 = vpack.c.b16 %v5240, %v5239
        %v5253 = vpack.c.b16 %v5242, %v5241
        %v5254 = vpack.c.b16 %v5244, %v5243
        %v5255 = vpack.c.b16 %v5246, %v5245
        %v5256 = vpack.c.b16 %v5248, %v5247
        %v5259 = vunpack.c.l.b16 %v5231
        %v5260 = vunpack.c.l.b16 %v5232
        %v5261 = vpack.c.b16 %v5260, %v5259
        %v5264 = vsel %vm4014, %v5249, 0
        %v5267 = vsel %vm4014, %v5250, 0
        %v5270 = vsel %vm4014, %v5251, 0
        %v5273 = vsel %vm4014, %v5252, 0
        %v5276 = vsel %vm4014, %v5253, 0
        %v5279 = vsel %vm4014, %v5254, 0
        %v5282 = vsel %vm4014, %v5255, 0
        %v5285 = vsel %vm4014, %v5256, 0
        %5287 = vmatprep.subr.bf16.mxu0 0
        %5288 = vmatpush1.bf16.msra.mxu0 %v5261
        %5289 = vmatprep.subr.bf16.mxu0 0
        %5290 = vmatpush1.bf16.msra.mxu0 0
        %5291 = vmatprep.subr.bf16.mxu0 0
        %5292 = vmatpush1.bf16.msra.mxu0 0
        %5293 = vmatprep.subr.bf16.mxu0 0
        %5294 = vmatpush1.bf16.msra.mxu0 0
        %5295 = vmatprep.subr.bf16.mxu0 0
        %5296 = vmatpush1.bf16.msra.mxu0 0
        %5297 = vmatprep.subr.bf16.mxu0 0
        %5298 = vmatpush1.bf16.msra.mxu0 0
        %5299 = vmatprep.subr.bf16.mxu0 0
        %5300 = vmatpush1.bf16.msra.mxu0 0
        %5301 = vmatprep.subr.bf16.mxu0 0
        %5302 = vmatpush1.bf16.msra.mxu0 0
        %5303 = vmatprep.subr.bf16.mxu0 0
        %5304 = vmatpush1.bf16.msra.mxu0 0
        %5305 = vmatprep.subr.bf16.mxu0 0
        %5306 = vmatpush1.bf16.msra.mxu0 0
        %5307 = vmatprep.subr.bf16.mxu0 0
        %5308 = vmatpush1.bf16.msra.mxu0 0
        %5309 = vmatprep.subr.bf16.mxu0 0
        %5310 = vmatpush1.bf16.msra.mxu0 0
        %5311 = vmatprep.subr.bf16.mxu0 0
        %5312 = vmatpush1.bf16.msra.mxu0 0
        %5313 = vmatprep.subr.bf16.mxu0 0
        %5314 = vmatpush1.bf16.msra.mxu0 0
        %5315 = vmatprep.subr.bf16.mxu0 0
        %5316 = vmatpush1.bf16.msra.mxu0 0
        %5317 = vmatprep.subr.bf16.mxu0 0
        %5318 = vmatpush1.bf16.msra.mxu0 0
        %5319 = vmatprep.mubr.bf16.mxu0 0
        %5320 = vmatmul.mubr.bf16.gmra.mrb[0].mxu0 %v5264
        %v5321 = vpop.f32.mrb[0].mxu0
        %v5322 = vadd.f32 0.0, %v5321
        %v5323 = vpop.f32.mrb[0].mxu0
        %v5324 = vpop.f32.mrb[0].mxu0
        %v5325 = vadd.f32 0.0, %v5324
        %v5326 = vpop.f32.mrb[0].mxu0
        %5327 = vmatprep.mubr.bf16.mxu0 0
        %5328 = vmatmul.mubr.bf16.gmra.mrb[0].mxu0 %v5267
        %v5329 = vpop.f32.mrb[0].mxu0
        %v5330 = vadd.f32 0.0, %v5329
        %v5331 = vpop.f32.mrb[0].mxu0
        %v5332 = vpop.f32.mrb[0].mxu0
        %v5333 = vadd.f32 0.0, %v5332
        %v5334 = vpop.f32.mrb[0].mxu0
        %5335 = vmatprep.mubr.bf16.mxu0 0
        %5336 = vmatmul.mubr.bf16.gmra.mrb[0].mxu0 %v5270
        %v5337 = vpop.f32.mrb[0].mxu0
        %v5338 = vadd.f32 0.0, %v5337
        %v5339 = vpop.f32.mrb[0].mxu0
        %v5340 = vpop.f32.mrb[0].mxu0
        %v5341 = vadd.f32 0.0, %v5340
        %v5342 = vpop.f32.mrb[0].mxu0
        %5343 = vmatprep.mubr.bf16.mxu0 0
        %5344 = vmatmul.mubr.bf16.gmra.mrb[0].mxu0 %v5273
        %v5345 = vpop.f32.mrb[0].mxu0
        %v5346 = vadd.f32 0.0, %v5345
        %v5347 = vpop.f32.mrb[0].mxu0
        %v5348 = vpop.f32.mrb[0].mxu0
        %v5349 = vadd.f32 0.0, %v5348
        %v5350 = vpop.f32.mrb[0].mxu0
        %5351 = vmatprep.mubr.bf16.mxu0 0
        %5352 = vmatmul.mubr.bf16.gmra.mrb[0].mxu0 %v5276
        %v5353 = vpop.f32.mrb[0].mxu0
        %v5354 = vadd.f32 0.0, %v5353
        %v5355 = vpop.f32.mrb[0].mxu0
        %v5356 = vpop.f32.mrb[0].mxu0
        %v5357 = vadd.f32 0.0, %v5356
        %v5358 = vpop.f32.mrb[0].mxu0
        %5359 = vmatprep.mubr.bf16.mxu0 0
        %5360 = vmatmul.mubr.bf16.gmra.mrb[0].mxu0 %v5279
        %v5361 = vpop.f32.mrb[0].mxu0
        %v5362 = vadd.f32 0.0, %v5361
        %v5363 = vpop.f32.mrb[0].mxu0
        %v5364 = vpop.f32.mrb[0].mxu0
        %v5365 = vadd.f32 0.0, %v5364
        %v5366 = vpop.f32.mrb[0].mxu0
        %5367 = vmatprep.mubr.bf16.mxu0 0
        %5368 = vmatmul.mubr.bf16.gmra.mrb[0].mxu0 %v5282
        %v5369 = vpop.f32.mrb[0].mxu0
        %v5370 = vadd.f32 0.0, %v5369
        %v5371 = vpop.f32.mrb[0].mxu0
        %v5372 = vpop.f32.mrb[0].mxu0
        %v5373 = vadd.f32 0.0, %v5372
        %v5374 = vpop.f32.mrb[0].mxu0
        %5375 = vmatprep.mubr.bf16.mxu0 0
        %5376 = vmatmul.mubr.bf16.gmra.mrb[0].mxu0 %v5285
        %v5377 = vpop.f32.mrb[0].mxu0
        %v5378 = vadd.f32 0.0, %v5377
        %v5379 = vpop.f32.mrb[0].mxu0
        %v5380 = vpop.f32.mrb[0].mxu0
        %v5381 = vadd.f32 0.0, %v5380
        %v5382 = vpop.f32.mrb[0].mxu0
        %5383 = vdwg.mxu0
        %v5384 = vadd.f32 %v5126, %v5322
        %v5385 = vadd.f32 %v5127, %v5325
        %v5386 = vadd.f32 %v5128, %v5330
        %v5387 = vadd.f32 %v5129, %v5333
        %v5388 = vadd.f32 %v5130, %v5338
        %v5389 = vadd.f32 %v5131, %v5341
        %v5390 = vadd.f32 %v5132, %v5346
        %v5391 = vadd.f32 %v5133, %v5349
        %v5392 = vadd.f32 %v5134, %v5354
        %v5393 = vadd.f32 %v5135, %v5357
        %v5394 = vadd.f32 %v5136, %v5362
        %v5395 = vadd.f32 %v5137, %v5365
        %v5396 = vadd.f32 %v5138, %v5370
        %v5397 = vadd.f32 %v5139, %v5373
        %v5398 = vadd.f32 %v5140, %v5378
        %v5399 = vadd.f32 %v5141, %v5381
        %s5400 = scalar_lea.vmem [#allocation2], 24
        %v5401 = vld [vmem:[%s5400] sm:$0xf]
        %v5402 = vld [vmem:[%s5400 + $0x4] sm:$0xf]
        %v5403 = vld [vmem:[%s5400 + $0xc] sm:$0xf]
        %v5404 = vld [vmem:[%s5400 + $0x10] sm:$0xf]
        %v5405 = vld [vmem:[%s5400 + $0x18] sm:$0xf]
        %v5406 = vld [vmem:[%s5400 + $0x1c] sm:$0xf]
        %v5407 = vld [vmem:[%s5400 + $0x24] sm:$0xf]
        %v5408 = vld [vmem:[%s5400 + $0x28] sm:$0xf]
        %v5409 = vld [vmem:[%s5400 + $0x30] sm:$0xf]
        %v5410 = vld [vmem:[%s5400 + $0x34] sm:$0xf]
        %v5411 = vld [vmem:[%s5400 + $0x3c] sm:$0xf]
        %v5412 = vld [vmem:[%s5400 + $0x40] sm:$0xf]
        %v5413 = vld [vmem:[%s5400 + $0x48] sm:$0xf]
        %v5414 = vld [vmem:[%s5400 + $0x4c] sm:$0xf]
        %v5415 = vld [vmem:[%s5400 + $0x54] sm:$0xf]
        %v5416 = vld [vmem:[%s5400 + $0x58] sm:$0xf]
        %s5417 = scalar_lea.vmem %s3, 48
        %v5418 = vld [vmem:[%s5417] sm:$0xf]
        %v5419 = vld [vmem:[%s5417 + $0x4] sm:$0xf]
        %v5436 = vunpack.c.l.b16 %v5401
        %v5437 = vunpack.c.l.b16 %v5402
        %v5438 = vunpack.c.l.b16 %v5403
        %v5439 = vunpack.c.l.b16 %v5404
        %v5440 = vunpack.c.l.b16 %v5405
        %v5441 = vunpack.c.l.b16 %v5406
        %v5442 = vunpack.c.l.b16 %v5407
        %v5443 = vunpack.c.l.b16 %v5408
        %v5444 = vunpack.c.l.b16 %v5409
        %v5445 = vunpack.c.l.b16 %v5410
        %v5446 = vunpack.c.l.b16 %v5411
        %v5447 = vunpack.c.l.b16 %v5412
        %v5448 = vunpack.c.l.b16 %v5413
        %v5449 = vunpack.c.l.b16 %v5414
        %v5450 = vunpack.c.l.b16 %v5415
        %v5451 = vunpack.c.l.b16 %v5416
        %v5452 = vpack.c.b16 %v5437, %v5436
        %v5453 = vpack.c.b16 %v5439, %v5438
        %v5454 = vpack.c.b16 %v5441, %v5440
        %v5455 = vpack.c.b16 %v5443, %v5442
        %v5456 = vpack.c.b16 %v5445, %v5444
        %v5457 = vpack.c.b16 %v5447, %v5446
        %v5458 = vpack.c.b16 %v5449, %v5448
        %v5459 = vpack.c.b16 %v5451, %v5450
        %v5462 = vunpack.c.l.b16 %v5418
        %v5463 = vunpack.c.l.b16 %v5419
        %v5464 = vpack.c.b16 %v5463, %v5462
        %v5467 = vsel %vm4014, %v5452, 0
        %v5470 = vsel %vm4014, %v5453, 0
        %v5473 = vsel %vm4014, %v5454, 0
        %v5476 = vsel %vm4014, %v5455, 0
        %v5479 = vsel %vm4014, %v5456, 0
        %v5482 = vsel %vm4014, %v5457, 0
        %v5485 = vsel %vm4014, %v5458, 0
        %v5488 = vsel %vm4014, %v5459, 0
        %5490 = vmatprep.subr.bf16.mxu0 0
        %5491 = vmatpush1.bf16.msra.mxu0 %v5464
        %5492 = vmatprep.subr.bf16.mxu0 0
        %5493 = vmatpush1.bf16.msra.mxu0 0
        %5494 = vmatprep.subr.bf16.mxu0 0
        %5495 = vmatpush1.bf16.msra.mxu0 0
        %5496 = vmatprep.subr.bf16.mxu0 0
        %5497 = vmatpush1.bf16.msra.mxu0 0
        %5498 = vmatprep.subr.bf16.mxu0 0
        %5499 = vmatpush1.bf16.msra.mxu0 0
        %5500 = vmatprep.subr.bf16.mxu0 0
        %5501 = vmatpush1.bf16.msra.mxu0 0
        %5502 = vmatprep.subr.bf16.mxu0 0
        %5503 = vmatpush1.bf16.msra.mxu0 0
        %5504 = vmatprep.subr.bf16.mxu0 0
        %5505 = vmatpush1.bf16.msra.mxu0 0
        %5506 = vmatprep.subr.bf16.mxu0 0
        %5507 = vmatpush1.bf16.msra.mxu0 0
        %5508 = vmatprep.subr.bf16.mxu0 0
        %5509 = vmatpush1.bf16.msra.mxu0 0
        %5510 = vmatprep.subr.bf16.mxu0 0
        %5511 = vmatpush1.bf16.msra.mxu0 0
        %5512 = vmatprep.subr.bf16.mxu0 0
        %5513 = vmatpush1.bf16.msra.mxu0 0
        %5514 = vmatprep.subr.bf16.mxu0 0
        %5515 = vmatpush1.bf16.msra.mxu0 0
        %5516 = vmatprep.subr.bf16.mxu0 0
        %5517 = vmatpush1.bf16.msra.mxu0 0
        %5518 = vmatprep.subr.bf16.mxu0 0
        %5519 = vmatpush1.bf16.msra.mxu0 0
        %5520 = vmatprep.subr.bf16.mxu0 0
        %5521 = vmatpush1.bf16.msra.mxu0 0
        %5522 = vmatprep.mubr.bf16.mxu0 0
        %5523 = vmatmul.mubr.bf16.gmra.mrb[0].mxu0 %v5467
        %v5524 = vpop.f32.mrb[0].mxu0
        %v5525 = vadd.f32 0.0, %v5524
        %v5526 = vpop.f32.mrb[0].mxu0
        %v5527 = vpop.f32.mrb[0].mxu0
        %v5528 = vadd.f32 0.0, %v5527
        %v5529 = vpop.f32.mrb[0].mxu0
        %5530 = vmatprep.mubr.bf16.mxu0 0
        %5531 = vmatmul.mubr.bf16.gmra.mrb[0].mxu0 %v5470
        %v5532 = vpop.f32.mrb[0].mxu0
        %v5533 = vadd.f32 0.0, %v5532
        %v5534 = vpop.f32.mrb[0].mxu0
        %v5535 = vpop.f32.mrb[0].mxu0
        %v5536 = vadd.f32 0.0, %v5535
        %v5537 = vpop.f32.mrb[0].mxu0
        %5538 = vmatprep.mubr.bf16.mxu0 0
        %5539 = vmatmul.mubr.bf16.gmra.mrb[0].mxu0 %v5473
        %v5540 = vpop.f32.mrb[0].mxu0
        %v5541 = vadd.f32 0.0, %v5540
        %v5542 = vpop.f32.mrb[0].mxu0
        %v5543 = vpop.f32.mrb[0].mxu0
        %v5544 = vadd.f32 0.0, %v5543
        %v5545 = vpop.f32.mrb[0].mxu0
        %5546 = vmatprep.mubr.bf16.mxu0 0
        %5547 = vmatmul.mubr.bf16.gmra.mrb[0].mxu0 %v5476
        %v5548 = vpop.f32.mrb[0].mxu0
        %v5549 = vadd.f32 0.0, %v5548
        %v5550 = vpop.f32.mrb[0].mxu0
        %v5551 = vpop.f32.mrb[0].mxu0
        %v5552 = vadd.f32 0.0, %v5551
        %v5553 = vpop.f32.mrb[0].mxu0
        %5554 = vmatprep.mubr.bf16.mxu0 0
        %5555 = vmatmul.mubr.bf16.gmra.mrb[0].mxu0 %v5479
        %v5556 = vpop.f32.mrb[0].mxu0
        %v5557 = vadd.f32 0.0, %v5556
        %v5558 = vpop.f32.mrb[0].mxu0
        %v5559 = vpop.f32.mrb[0].mxu0
        %v5560 = vadd.f32 0.0, %v5559
        %v5561 = vpop.f32.mrb[0].mxu0
        %5562 = vmatprep.mubr.bf16.mxu0 0
        %5563 = vmatmul.mubr.bf16.gmra.mrb[0].mxu0 %v5482
        %v5564 = vpop.f32.mrb[0].mxu0
        %v5565 = vadd.f32 0.0, %v5564
        %v5566 = vpop.f32.mrb[0].mxu0
        %v5567 = vpop.f32.mrb[0].mxu0
        %v5568 = vadd.f32 0.0, %v5567
        %v5569 = vpop.f32.mrb[0].mxu0
        %5570 = vmatprep.mubr.bf16.mxu0 0
        %5571 = vmatmul.mubr.bf16.gmra.mrb[0].mxu0 %v5485
        %v5572 = vpop.f32.mrb[0].mxu0
        %v5573 = vadd.f32 0.0, %v5572
        %v5574 = vpop.f32.mrb[0].mxu0
        %v5575 = vpop.f32.mrb[0].mxu0
        %v5576 = vadd.f32 0.0, %v5575
        %v5577 = vpop.f32.mrb[0].mxu0
        %5578 = vmatprep.mubr.bf16.mxu0 0
        %5579 = vmatmul.mubr.bf16.gmra.mrb[0].mxu0 %v5488
        %v5580 = vpop.f32.mrb[0].mxu0
        %v5581 = vadd.f32 0.0, %v5580
        %v5582 = vpop.f32.mrb[0].mxu0
        %v5583 = vpop.f32.mrb[0].mxu0
        %v5584 = vadd.f32 0.0, %v5583
        %v5585 = vpop.f32.mrb[0].mxu0
        %5586 = vdwg.mxu0
        %v5587 = vadd.f32 %v5384, %v5525
        %v5588 = vadd.f32 %v5385, %v5528
        %v5589 = vadd.f32 %v5386, %v5533
        %v5590 = vadd.f32 %v5387, %v5536
        %v5591 = vadd.f32 %v5388, %v5541
        %v5592 = vadd.f32 %v5389, %v5544
        %v5593 = vadd.f32 %v5390, %v5549
        %v5594 = vadd.f32 %v5391, %v5552
        %v5595 = vadd.f32 %v5392, %v5557
        %v5596 = vadd.f32 %v5393, %v5560
        %v5597 = vadd.f32 %v5394, %v5565
        %v5598 = vadd.f32 %v5395, %v5568
        %v5599 = vadd.f32 %v5396, %v5573
        %v5600 = vadd.f32 %v5397, %v5576
        %v5601 = vadd.f32 %v5398, %v5581
        %v5602 = vadd.f32 %v5399, %v5584
        %v5603 = vld [vmem:[%s5400] sm:$0xf]
        %v5604 = vld [vmem:[%s5400 + $0x4] sm:$0xf]
        %v5605 = vld [vmem:[%s5400 + $0x8] sm:$0x1]
        %v5606 = vld [vmem:[%s5400 + $0xc] sm:$0xf]
        %v5607 = vld [vmem:[%s5400 + $0x10] sm:$0xf]
        %v5608 = vld [vmem:[%s5400 + $0x14] sm:$0x1]
        %v5609 = vld [vmem:[%s5400 + $0x18] sm:$0xf]
        %v5610 = vld [vmem:[%s5400 + $0x1c] sm:$0xf]
        %v5611 = vld [vmem:[%s5400 + $0x20] sm:$0x1]
        %v5612 = vld [vmem:[%s5400 + $0x24] sm:$0xf]
        %v5613 = vld [vmem:[%s5400 + $0x28] sm:$0xf]
        %v5614 = vld [vmem:[%s5400 + $0x2c] sm:$0x1]
        %v5615 = vld [vmem:[%s5400 + $0x30] sm:$0xf]
        %v5616 = vld [vmem:[%s5400 + $0x34] sm:$0xf]
        %v5617 = vld [vmem:[%s5400 + $0x38] sm:$0x1]
        %v5618 = vld [vmem:[%s5400 + $0x3c] sm:$0xf]
        %v5619 = vld [vmem:[%s5400 + $0x40] sm:$0xf]
        %v5620 = vld [vmem:[%s5400 + $0x44] sm:$0x1]
        %v5621 = vld [vmem:[%s5400 + $0x48] sm:$0xf]
        %v5622 = vld [vmem:[%s5400 + $0x4c] sm:$0xf]
        %v5623 = vld [vmem:[%s5400 + $0x50] sm:$0x1]
        %v5624 = vld [vmem:[%s5400 + $0x54] sm:$0xf]
        %v5625 = vld [vmem:[%s5400 + $0x58] sm:$0xf]
        %v5626 = vld [vmem:[%s5400 + $0x5c] sm:$0x1]
        %v5628 = vshrl.u32 %v5603, 16
        %v5630 = vrot.slane %v5628, 4
        %v5631 = vshll.u32 %v5603, 16
        %v5633 = vrot.slane %v5631, 5
        %v5634 = vor.u32 %v5630, %v5633
        %v5635 = vrot.slane %v5634, 4
        %v5637 = vshll.u32 %v5604, 16
        %v5639 = vrot.slane %v5637, 5
        %v5640 = vsel %vm286, %v5635, %v5639
        %v5641 = vshrl.u32 %v5604, 16
        %v5643 = vrot.slane %v5641, 4
        %v5644 = vor.u32 %v5643, %v5639
        %v5645 = vrot.slane %v5644, 4
        %v5647 = vshll.u32 %v5605, 16
        %v5649 = vrot.slane %v5647, 5
        %v5650 = vsel %vm286, %v5645, %v5649
        %v5652 = vshrl.u32 %v5606, 16
        %v5654 = vrot.slane %v5652, 4
        %v5655 = vshll.u32 %v5606, 16
        %v5657 = vrot.slane %v5655, 5
        %v5658 = vor.u32 %v5654, %v5657
        %v5659 = vrot.slane %v5658, 4
        %v5661 = vshll.u32 %v5607, 16
        %v5663 = vrot.slane %v5661, 5
        %v5664 = vsel %vm286, %v5659, %v5663
        %v5665 = vshrl.u32 %v5607, 16
        %v5667 = vrot.slane %v5665, 4
        %v5668 = vor.u32 %v5667, %v5663
        %v5669 = vrot.slane %v5668, 4
        %v5671 = vshll.u32 %v5608, 16
        %v5673 = vrot.slane %v5671, 5
        %v5674 = vsel %vm286, %v5669, %v5673
        %v5676 = vshrl.u32 %v5609, 16
        %v5678 = vrot.slane %v5676, 4
        %v5679 = vshll.u32 %v5609, 16
        %v5681 = vrot.slane %v5679, 5
        %v5682 = vor.u32 %v5678, %v5681
        %v5683 = vrot.slane %v5682, 4
        %v5685 = vshll.u32 %v5610, 16
        %v5687 = vrot.slane %v5685, 5
        %v5688 = vsel %vm286, %v5683, %v5687
        %v5689 = vshrl.u32 %v5610, 16
        %v5691 = vrot.slane %v5689, 4
        %v5692 = vor.u32 %v5691, %v5687
        %v5693 = vrot.slane %v5692, 4
        %v5695 = vshll.u32 %v5611, 16
        %v5697 = vrot.slane %v5695, 5
        %v5698 = vsel %vm286, %v5693, %v5697
        %v5700 = vshrl.u32 %v5612, 16
        %v5702 = vrot.slane %v5700, 4
        %v5703 = vshll.u32 %v5612, 16
        %v5705 = vrot.slane %v5703, 5
        %v5706 = vor.u32 %v5702, %v5705
        %v5707 = vrot.slane %v5706, 4
        %v5709 = vshll.u32 %v5613, 16
        %v5711 = vrot.slane %v5709, 5
        %v5712 = vsel %vm286, %v5707, %v5711
        %v5713 = vshrl.u32 %v5613, 16
        %v5715 = vrot.slane %v5713, 4
        %v5716 = vor.u32 %v5715, %v5711
        %v5717 = vrot.slane %v5716, 4
        %v5719 = vshll.u32 %v5614, 16
        %v5721 = vrot.slane %v5719, 5
        %v5722 = vsel %vm286, %v5717, %v5721
        %v5724 = vshrl.u32 %v5615, 16
        %v5726 = vrot.slane %v5724, 4
        %v5727 = vshll.u32 %v5615, 16
        %v5729 = vrot.slane %v5727, 5
        %v5730 = vor.u32 %v5726, %v5729
        %v5731 = vrot.slane %v5730, 4
        %v5733 = vshll.u32 %v5616, 16
        %v5735 = vrot.slane %v5733, 5
        %v5736 = vsel %vm286, %v5731, %v5735
        %v5737 = vshrl.u32 %v5616, 16
        %v5739 = vrot.slane %v5737, 4
        %v5740 = vor.u32 %v5739, %v5735
        %v5741 = vrot.slane %v5740, 4
        %v5743 = vshll.u32 %v5617, 16
        %v5745 = vrot.slane %v5743, 5
        %v5746 = vsel %vm286, %v5741, %v5745
        %v5748 = vshrl.u32 %v5618, 16
        %v5750 = vrot.slane %v5748, 4
        %v5751 = vshll.u32 %v5618, 16
        %v5753 = vrot.slane %v5751, 5
        %v5754 = vor.u32 %v5750, %v5753
        %v5755 = vrot.slane %v5754, 4
        %v5757 = vshll.u32 %v5619, 16
        %v5759 = vrot.slane %v5757, 5
        %v5760 = vsel %vm286, %v5755, %v5759
        %v5761 = vshrl.u32 %v5619, 16
        %v5763 = vrot.slane %v5761, 4
        %v5764 = vor.u32 %v5763, %v5759
        %v5765 = vrot.slane %v5764, 4
        %v5767 = vshll.u32 %v5620, 16
        %v5769 = vrot.slane %v5767, 5
        %v5770 = vsel %vm286, %v5765, %v5769
        %v5772 = vshrl.u32 %v5621, 16
        %v5774 = vrot.slane %v5772, 4
        %v5775 = vshll.u32 %v5621, 16
        %v5777 = vrot.slane %v5775, 5
        %v5778 = vor.u32 %v5774, %v5777
        %v5779 = vrot.slane %v5778, 4
        %v5781 = vshll.u32 %v5622, 16
        %v5783 = vrot.slane %v5781, 5
        %v5784 = vsel %vm286, %v5779, %v5783
        %v5785 = vshrl.u32 %v5622, 16
        %v5787 = vrot.slane %v5785, 4
        %v5788 = vor.u32 %v5787, %v5783
        %v5789 = vrot.slane %v5788, 4
        %v5791 = vshll.u32 %v5623, 16
        %v5793 = vrot.slane %v5791, 5
        %v5794 = vsel %vm286, %v5789, %v5793
        %v5796 = vshrl.u32 %v5624, 16
        %v5798 = vrot.slane %v5796, 4
        %v5799 = vshll.u32 %v5624, 16
        %v5801 = vrot.slane %v5799, 5
        %v5802 = vor.u32 %v5798, %v5801
        %v5803 = vrot.slane %v5802, 4
        %v5805 = vshll.u32 %v5625, 16
        %v5807 = vrot.slane %v5805, 5
        %v5808 = vsel %vm286, %v5803, %v5807
        %v5809 = vshrl.u32 %v5625, 16
        %v5811 = vrot.slane %v5809, 4
        %v5812 = vor.u32 %v5811, %v5807
        %v5813 = vrot.slane %v5812, 4
        %v5815 = vshll.u32 %v5626, 16
        %v5817 = vrot.slane %v5815, 5
        %v5818 = vsel %vm286, %v5813, %v5817
        %s5819 = scalar_lea.vmem %s3, 56
        %v5820 = vld [vmem:[%s5819] sm:$0xf]
        %v5821 = vld [vmem:[%s5819 + $0x4] sm:$0xf]
        %v5822 = vunpack.c.l.b16 %v5640
        %v5823 = vunpack.c.l.b16 %v5650
        %v5824 = vunpack.c.l.b16 %v5664
        %v5825 = vunpack.c.l.b16 %v5674
        %v5826 = vunpack.c.l.b16 %v5688
        %v5827 = vunpack.c.l.b16 %v5698
        %v5828 = vunpack.c.l.b16 %v5712
        %v5829 = vunpack.c.l.b16 %v5722
        %v5830 = vunpack.c.l.b16 %v5736
        %v5831 = vunpack.c.l.b16 %v5746
        %v5832 = vunpack.c.l.b16 %v5760
        %v5833 = vunpack.c.l.b16 %v5770
        %v5834 = vunpack.c.l.b16 %v5784
        %v5835 = vunpack.c.l.b16 %v5794
        %v5836 = vunpack.c.l.b16 %v5808
        %v5837 = vunpack.c.l.b16 %v5818
        %v5838 = vpack.c.b16 %v5823, %v5822
        %v5839 = vpack.c.b16 %v5825, %v5824
        %v5840 = vpack.c.b16 %v5827, %v5826
        %v5841 = vpack.c.b16 %v5829, %v5828
        %v5842 = vpack.c.b16 %v5831, %v5830
        %v5843 = vpack.c.b16 %v5833, %v5832
        %v5844 = vpack.c.b16 %v5835, %v5834
        %v5845 = vpack.c.b16 %v5837, %v5836
        %v5848 = vunpack.c.l.b16 %v5820
        %v5849 = vunpack.c.l.b16 %v5821
        %v5850 = vpack.c.b16 %v5849, %v5848
        %v5853 = vsel %vm4014, %v5838, 0
        %v5856 = vsel %vm4014, %v5839, 0
        %v5859 = vsel %vm4014, %v5840, 0
        %v5862 = vsel %vm4014, %v5841, 0
        %v5865 = vsel %vm4014, %v5842, 0
        %v5868 = vsel %vm4014, %v5843, 0
        %v5871 = vsel %vm4014, %v5844, 0
        %v5874 = vsel %vm4014, %v5845, 0
        %5876 = vmatprep.subr.bf16.mxu0 0
        %5877 = vmatpush1.bf16.msra.mxu0 %v5850
        %5878 = vmatprep.subr.bf16.mxu0 0
        %5879 = vmatpush1.bf16.msra.mxu0 0
        %5880 = vmatprep.subr.bf16.mxu0 0
        %5881 = vmatpush1.bf16.msra.mxu0 0
        %5882 = vmatprep.subr.bf16.mxu0 0
        %5883 = vmatpush1.bf16.msra.mxu0 0
        %5884 = vmatprep.subr.bf16.mxu0 0
        %5885 = vmatpush1.bf16.msra.mxu0 0
        %5886 = vmatprep.subr.bf16.mxu0 0
        %5887 = vmatpush1.bf16.msra.mxu0 0
        %5888 = vmatprep.subr.bf16.mxu0 0
        %5889 = vmatpush1.bf16.msra.mxu0 0
        %5890 = vmatprep.subr.bf16.mxu0 0
        %5891 = vmatpush1.bf16.msra.mxu0 0
        %5892 = vmatprep.subr.bf16.mxu0 0
        %5893 = vmatpush1.bf16.msra.mxu0 0
        %5894 = vmatprep.subr.bf16.mxu0 0
        %5895 = vmatpush1.bf16.msra.mxu0 0
        %5896 = vmatprep.subr.bf16.mxu0 0
        %5897 = vmatpush1.bf16.msra.mxu0 0
        %5898 = vmatprep.subr.bf16.mxu0 0
        %5899 = vmatpush1.bf16.msra.mxu0 0
        %5900 = vmatprep.subr.bf16.mxu0 0
        %5901 = vmatpush1.bf16.msra.mxu0 0
        %5902 = vmatprep.subr.bf16.mxu0 0
        %5903 = vmatpush1.bf16.msra.mxu0 0
        %5904 = vmatprep.subr.bf16.mxu0 0
        %5905 = vmatpush1.bf16.msra.mxu0 0
        %5906 = vmatprep.subr.bf16.mxu0 0
        %5907 = vmatpush1.bf16.msra.mxu0 0
        %5908 = vmatprep.mubr.bf16.mxu0 0
        %5909 = vmatmul.mubr.bf16.gmra.mrb[0].mxu0 %v5853
        %v5910 = vpop.f32.mrb[0].mxu0
        %v5911 = vadd.f32 0.0, %v5910
        %v5912 = vpop.f32.mrb[0].mxu0
        %v5913 = vpop.f32.mrb[0].mxu0
        %v5914 = vadd.f32 0.0, %v5913
        %v5915 = vpop.f32.mrb[0].mxu0
        %5916 = vmatprep.mubr.bf16.mxu0 0
        %5917 = vmatmul.mubr.bf16.gmra.mrb[0].mxu0 %v5856
        %v5918 = vpop.f32.mrb[0].mxu0
        %v5919 = vadd.f32 0.0, %v5918
        %v5920 = vpop.f32.mrb[0].mxu0
        %v5921 = vpop.f32.mrb[0].mxu0
        %v5922 = vadd.f32 0.0, %v5921
        %v5923 = vpop.f32.mrb[0].mxu0
        %5924 = vmatprep.mubr.bf16.mxu0 0
        %5925 = vmatmul.mubr.bf16.gmra.mrb[0].mxu0 %v5859
        %v5926 = vpop.f32.mrb[0].mxu0
        %v5927 = vadd.f32 0.0, %v5926
        %v5928 = vpop.f32.mrb[0].mxu0
        %v5929 = vpop.f32.mrb[0].mxu0
        %v5930 = vadd.f32 0.0, %v5929
        %v5931 = vpop.f32.mrb[0].mxu0
        %5932 = vmatprep.mubr.bf16.mxu0 0
        %5933 = vmatmul.mubr.bf16.gmra.mrb[0].mxu0 %v5862
        %v5934 = vpop.f32.mrb[0].mxu0
        %v5935 = vadd.f32 0.0, %v5934
        %v5936 = vpop.f32.mrb[0].mxu0
        %v5937 = vpop.f32.mrb[0].mxu0
        %v5938 = vadd.f32 0.0, %v5937
        %v5939 = vpop.f32.mrb[0].mxu0
        %5940 = vmatprep.mubr.bf16.mxu0 0
        %5941 = vmatmul.mubr.bf16.gmra.mrb[0].mxu0 %v5865
        %v5942 = vpop.f32.mrb[0].mxu0
        %v5943 = vadd.f32 0.0, %v5942
        %v5944 = vpop.f32.mrb[0].mxu0
        %v5945 = vpop.f32.mrb[0].mxu0
        %v5946 = vadd.f32 0.0, %v5945
        %v5947 = vpop.f32.mrb[0].mxu0
        %5948 = vmatprep.mubr.bf16.mxu0 0
        %5949 = vmatmul.mubr.bf16.gmra.mrb[0].mxu0 %v5868
        %v5950 = vpop.f32.mrb[0].mxu0
        %v5951 = vadd.f32 0.0, %v5950
        %v5952 = vpop.f32.mrb[0].mxu0
        %v5953 = vpop.f32.mrb[0].mxu0
        %v5954 = vadd.f32 0.0, %v5953
        %v5955 = vpop.f32.mrb[0].mxu0
        %5956 = vmatprep.mubr.bf16.mxu0 0
        %5957 = vmatmul.mubr.bf16.gmra.mrb[0].mxu0 %v5871
        %v5958 = vpop.f32.mrb[0].mxu0
        %v5959 = vadd.f32 0.0, %v5958
        %v5960 = vpop.f32.mrb[0].mxu0
        %v5961 = vpop.f32.mrb[0].mxu0
        %v5962 = vadd.f32 0.0, %v5961
        %v5963 = vpop.f32.mrb[0].mxu0
        %5964 = vmatprep.mubr.bf16.mxu0 0
        %5965 = vmatmul.mubr.bf16.gmra.mrb[0].mxu0 %v5874
        %v5966 = vpop.f32.mrb[0].mxu0
        %v5967 = vadd.f32 0.0, %v5966
        %v5968 = vpop.f32.mrb[0].mxu0
        %v5969 = vpop.f32.mrb[0].mxu0
        %v5970 = vadd.f32 0.0, %v5969
        %v5971 = vpop.f32.mrb[0].mxu0
        %5972 = vdwg.mxu0
        %v5973 = vadd.f32 %v5587, %v5911
        %v5974 = vadd.f32 %v5588, %v5914
        %v5975 = vadd.f32 %v5589, %v5919
        %v5976 = vadd.f32 %v5590, %v5922
        %v5977 = vadd.f32 %v5591, %v5927
        %v5978 = vadd.f32 %v5592, %v5930
        %v5979 = vadd.f32 %v5593, %v5935
        %v5980 = vadd.f32 %v5594, %v5938
        %v5981 = vadd.f32 %v5595, %v5943
        %v5982 = vadd.f32 %v5596, %v5946
        %v5983 = vadd.f32 %v5597, %v5951
        %v5984 = vadd.f32 %v5598, %v5954
        %v5985 = vadd.f32 %v5599, %v5959
        %v5986 = vadd.f32 %v5600, %v5962
        %v5987 = vadd.f32 %v5601, %v5967
        %v5988 = vadd.f32 %v5602, %v5970
        %v5989 = vld [vmem:[%s5400] sm:$0xe]
        %v5990 = vld [vmem:[%s5400 + $0xc] sm:$0xe]
        %v5991 = vld [vmem:[%s5400 + $0x18] sm:$0xe]
        %v5992 = vld [vmem:[%s5400 + $0x24] sm:$0xe]
        %v5993 = vld [vmem:[%s5400 + $0x30] sm:$0xe]
        %v5994 = vld [vmem:[%s5400 + $0x3c] sm:$0xe]
        %v5995 = vld [vmem:[%s5400 + $0x48] sm:$0xe]
        %v5996 = vld [vmem:[%s5400 + $0x54] sm:$0xe]
        %v6021 = vrot.slane %v5989, 5
        %v6022 = vrot.slane %v6021, 4
        %v6023 = vrot.slane %v5604, 5
        %v6024 = vsel %vm935, %v6022, %v6023
        %v6025 = vrot.slane %v6023, 4
        %v6026 = vrot.slane %v5605, 5
        %v6027 = vsel %vm935, %v6025, %v6026
        %v6028 = vrot.slane %v5990, 5
        %v6029 = vrot.slane %v6028, 4
        %v6030 = vrot.slane %v5607, 5
        %v6031 = vsel %vm935, %v6029, %v6030
        %v6032 = vrot.slane %v6030, 4
        %v6033 = vrot.slane %v5608, 5
        %v6034 = vsel %vm935, %v6032, %v6033
        %v6035 = vrot.slane %v5991, 5
        %v6036 = vrot.slane %v6035, 4
        %v6037 = vrot.slane %v5610, 5
        %v6038 = vsel %vm935, %v6036, %v6037
        %v6039 = vrot.slane %v6037, 4
        %v6040 = vrot.slane %v5611, 5
        %v6041 = vsel %vm935, %v6039, %v6040
        %v6042 = vrot.slane %v5992, 5
        %v6043 = vrot.slane %v6042, 4
        %v6044 = vrot.slane %v5613, 5
        %v6045 = vsel %vm935, %v6043, %v6044
        %v6046 = vrot.slane %v6044, 4
        %v6047 = vrot.slane %v5614, 5
        %v6048 = vsel %vm935, %v6046, %v6047
        %v6049 = vrot.slane %v5993, 5
        %v6050 = vrot.slane %v6049, 4
        %v6051 = vrot.slane %v5616, 5
        %v6052 = vsel %vm935, %v6050, %v6051
        %v6053 = vrot.slane %v6051, 4
        %v6054 = vrot.slane %v5617, 5
        %v6055 = vsel %vm935, %v6053, %v6054
        %v6056 = vrot.slane %v5994, 5
        %v6057 = vrot.slane %v6056, 4
        %v6058 = vrot.slane %v5619, 5
        %v6059 = vsel %vm935, %v6057, %v6058
        %v6060 = vrot.slane %v6058, 4
        %v6061 = vrot.slane %v5620, 5
        %v6062 = vsel %vm935, %v6060, %v6061
        %v6063 = vrot.slane %v5995, 5
        %v6064 = vrot.slane %v6063, 4
        %v6065 = vrot.slane %v5622, 5
        %v6066 = vsel %vm935, %v6064, %v6065
        %v6067 = vrot.slane %v6065, 4
        %v6068 = vrot.slane %v5623, 5
        %v6069 = vsel %vm935, %v6067, %v6068
        %v6070 = vrot.slane %v5996, 5
        %v6071 = vrot.slane %v6070, 4
        %v6072 = vrot.slane %v5625, 5
        %v6073 = vsel %vm935, %v6071, %v6072
        %v6074 = vrot.slane %v6072, 4
        %v6075 = vrot.slane %v5626, 5
        %v6076 = vsel %vm935, %v6074, %v6075
        %s6077 = scalar_lea.vmem %s3, 64
        %v6078 = vld [vmem:[%s6077] sm:$0xf]
        %v6079 = vld [vmem:[%s6077 + $0x4] sm:$0xf]
        %v6080 = vunpack.c.l.b16 %v6024
        %v6081 = vunpack.c.l.b16 %v6027
        %v6082 = vunpack.c.l.b16 %v6031
        %v6083 = vunpack.c.l.b16 %v6034
        %v6084 = vunpack.c.l.b16 %v6038
        %v6085 = vunpack.c.l.b16 %v6041
        %v6086 = vunpack.c.l.b16 %v6045
        %v6087 = vunpack.c.l.b16 %v6048
        %v6088 = vunpack.c.l.b16 %v6052
        %v6089 = vunpack.c.l.b16 %v6055
        %v6090 = vunpack.c.l.b16 %v6059
        %v6091 = vunpack.c.l.b16 %v6062
        %v6092 = vunpack.c.l.b16 %v6066
        %v6093 = vunpack.c.l.b16 %v6069
        %v6094 = vunpack.c.l.b16 %v6073
        %v6095 = vunpack.c.l.b16 %v6076
        %v6096 = vpack.c.b16 %v6081, %v6080
        %v6097 = vpack.c.b16 %v6083, %v6082
        %v6098 = vpack.c.b16 %v6085, %v6084
        %v6099 = vpack.c.b16 %v6087, %v6086
        %v6100 = vpack.c.b16 %v6089, %v6088
        %v6101 = vpack.c.b16 %v6091, %v6090
        %v6102 = vpack.c.b16 %v6093, %v6092
        %v6103 = vpack.c.b16 %v6095, %v6094
        %v6106 = vunpack.c.l.b16 %v6078
        %v6107 = vunpack.c.l.b16 %v6079
        %v6108 = vpack.c.b16 %v6107, %v6106
        %v6111 = vsel %vm4014, %v6096, 0
        %v6114 = vsel %vm4014, %v6097, 0
        %v6117 = vsel %vm4014, %v6098, 0
        %v6120 = vsel %vm4014, %v6099, 0
        %v6123 = vsel %vm4014, %v6100, 0
        %v6126 = vsel %vm4014, %v6101, 0
        %v6129 = vsel %vm4014, %v6102, 0
        %v6132 = vsel %vm4014, %v6103, 0
        %6134 = vmatprep.subr.bf16.mxu0 0
        %6135 = vmatpush1.bf16.msra.mxu0 %v6108
        %6136 = vmatprep.subr.bf16.mxu0 0
        %6137 = vmatpush1.bf16.msra.mxu0 0
        %6138 = vmatprep.subr.bf16.mxu0 0
        %6139 = vmatpush1.bf16.msra.mxu0 0
        %6140 = vmatprep.subr.bf16.mxu0 0
        %6141 = vmatpush1.bf16.msra.mxu0 0
        %6142 = vmatprep.subr.bf16.mxu0 0
        %6143 = vmatpush1.bf16.msra.mxu0 0
        %6144 = vmatprep.subr.bf16.mxu0 0
        %6145 = vmatpush1.bf16.msra.mxu0 0
        %6146 = vmatprep.subr.bf16.mxu0 0
        %6147 = vmatpush1.bf16.msra.mxu0 0
        %6148 = vmatprep.subr.bf16.mxu0 0
        %6149 = vmatpush1.bf16.msra.mxu0 0
        %6150 = vmatprep.subr.bf16.mxu0 0
        %6151 = vmatpush1.bf16.msra.mxu0 0
        %6152 = vmatprep.subr.bf16.mxu0 0
        %6153 = vmatpush1.bf16.msra.mxu0 0
        %6154 = vmatprep.subr.bf16.mxu0 0
        %6155 = vmatpush1.bf16.msra.mxu0 0
        %6156 = vmatprep.subr.bf16.mxu0 0
        %6157 = vmatpush1.bf16.msra.mxu0 0
        %6158 = vmatprep.subr.bf16.mxu0 0
        %6159 = vmatpush1.bf16.msra.mxu0 0
        %6160 = vmatprep.subr.bf16.mxu0 0
        %6161 = vmatpush1.bf16.msra.mxu0 0
        %6162 = vmatprep.subr.bf16.mxu0 0
        %6163 = vmatpush1.bf16.msra.mxu0 0
        %6164 = vmatprep.subr.bf16.mxu0 0
        %6165 = vmatpush1.bf16.msra.mxu0 0
        %6166 = vmatprep.mubr.bf16.mxu0 0
        %6167 = vmatmul.mubr.bf16.gmra.mrb[0].mxu0 %v6111
        %v6168 = vpop.f32.mrb[0].mxu0
        %v6169 = vadd.f32 0.0, %v6168
        %v6170 = vpop.f32.mrb[0].mxu0
        %v6171 = vpop.f32.mrb[0].mxu0
        %v6172 = vadd.f32 0.0, %v6171
        %v6173 = vpop.f32.mrb[0].mxu0
        %6174 = vmatprep.mubr.bf16.mxu0 0
        %6175 = vmatmul.mubr.bf16.gmra.mrb[0].mxu0 %v6114
        %v6176 = vpop.f32.mrb[0].mxu0
        %v6177 = vadd.f32 0.0, %v6176
        %v6178 = vpop.f32.mrb[0].mxu0
        %v6179 = vpop.f32.mrb[0].mxu0
        %v6180 = vadd.f32 0.0, %v6179
        %v6181 = vpop.f32.mrb[0].mxu0
        %6182 = vmatprep.mubr.bf16.mxu0 0
        %6183 = vmatmul.mubr.bf16.gmra.mrb[0].mxu0 %v6117
        %v6184 = vpop.f32.mrb[0].mxu0
        %v6185 = vadd.f32 0.0, %v6184
        %v6186 = vpop.f32.mrb[0].mxu0
        %v6187 = vpop.f32.mrb[0].mxu0
        %v6188 = vadd.f32 0.0, %v6187
        %v6189 = vpop.f32.mrb[0].mxu0
        %6190 = vmatprep.mubr.bf16.mxu0 0
        %6191 = vmatmul.mubr.bf16.gmra.mrb[0].mxu0 %v6120
        %v6192 = vpop.f32.mrb[0].mxu0
        %v6193 = vadd.f32 0.0, %v6192
        %v6194 = vpop.f32.mrb[0].mxu0
        %v6195 = vpop.f32.mrb[0].mxu0
        %v6196 = vadd.f32 0.0, %v6195
        %v6197 = vpop.f32.mrb[0].mxu0
        %6198 = vmatprep.mubr.bf16.mxu0 0
        %6199 = vmatmul.mubr.bf16.gmra.mrb[0].mxu0 %v6123
        %v6200 = vpop.f32.mrb[0].mxu0
        %v6201 = vadd.f32 0.0, %v6200
        %v6202 = vpop.f32.mrb[0].mxu0
        %v6203 = vpop.f32.mrb[0].mxu0
        %v6204 = vadd.f32 0.0, %v6203
        %v6205 = vpop.f32.mrb[0].mxu0
        %6206 = vmatprep.mubr.bf16.mxu0 0
        %6207 = vmatmul.mubr.bf16.gmra.mrb[0].mxu0 %v6126
        %v6208 = vpop.f32.mrb[0].mxu0
        %v6209 = vadd.f32 0.0, %v6208
        %v6210 = vpop.f32.mrb[0].mxu0
        %v6211 = vpop.f32.mrb[0].mxu0
        %v6212 = vadd.f32 0.0, %v6211
        %v6213 = vpop.f32.mrb[0].mxu0
        %6214 = vmatprep.mubr.bf16.mxu0 0
        %6215 = vmatmul.mubr.bf16.gmra.mrb[0].mxu0 %v6129
        %v6216 = vpop.f32.mrb[0].mxu0
        %v6217 = vadd.f32 0.0, %v6216
        %v6218 = vpop.f32.mrb[0].mxu0
        %v6219 = vpop.f32.mrb[0].mxu0
        %v6220 = vadd.f32 0.0, %v6219
        %v6221 = vpop.f32.mrb[0].mxu0
        %6222 = vmatprep.mubr.bf16.mxu0 0
        %6223 = vmatmul.mubr.bf16.gmra.mrb[0].mxu0 %v6132
        %v6224 = vpop.f32.mrb[0].mxu0
        %v6225 = vadd.f32 0.0, %v6224
        %v6226 = vpop.f32.mrb[0].mxu0
        %v6227 = vpop.f32.mrb[0].mxu0
        %v6228 = vadd.f32 0.0, %v6227
        %v6229 = vpop.f32.mrb[0].mxu0
        %6230 = vdwg.mxu0
        %v6231 = vadd.f32 %v5973, %v6169
        %v6232 = vadd.f32 %v5974, %v6172
        %v6233 = vadd.f32 %v5975, %v6177
        %v6234 = vadd.f32 %v5976, %v6180
        %v6235 = vadd.f32 %v5977, %v6185
        %v6236 = vadd.f32 %v5978, %v6188
        %v6237 = vadd.f32 %v5979, %v6193
        %v6238 = vadd.f32 %v5980, %v6196
        %v6239 = vadd.f32 %v5981, %v6201
        %v6240 = vadd.f32 %v5982, %v6204
        %v6241 = vadd.f32 %v5983, %v6209
        %v6242 = vadd.f32 %v5984, %v6212
        %v6243 = vadd.f32 %v5985, %v6217
        %v6244 = vadd.f32 %v5986, %v6220
        %v6245 = vadd.f32 %v5987, %v6225
        %v6246 = vadd.f32 %v5988, %v6228
        %v6247 = vld [vmem:[%s4] sm:$0x1]
        %v6249 = vlaneseq
        %v6250 = vshrl.u32 %v6249, 7
        %v6251 = vsub.s32 0, %v6250
        %v6252 = vrot.slane %v6247, %v6251
        %v6254 = vadd.f32 %v6231, %v6252
        %v6255 = vadd.f32 %v6232, %v6252
        %v6256 = vadd.f32 %v6233, %v6252
        %v6257 = vadd.f32 %v6234, %v6252
        %v6258 = vadd.f32 %v6235, %v6252
        %v6259 = vadd.f32 %v6236, %v6252
        %v6260 = vadd.f32 %v6237, %v6252
        %v6261 = vadd.f32 %v6238, %v6252
        %v6262 = vadd.f32 %v6239, %v6252
        %v6263 = vadd.f32 %v6240, %v6252
        %v6264 = vadd.f32 %v6241, %v6252
        %v6265 = vadd.f32 %v6242, %v6252
        %v6266 = vadd.f32 %v6243, %v6252
        %v6267 = vadd.f32 %v6244, %v6252
        %v6268 = vadd.f32 %v6245, %v6252
        %v6269 = vadd.f32 %v6246, %v6252
        %v6270 = vmax.f32 %v6254, 0.0
        %v6271 = vmax.f32 %v6255, 0.0
        %v6272 = vmax.f32 %v6256, 0.0
        %v6273 = vmax.f32 %v6257, 0.0
        %v6274 = vmax.f32 %v6258, 0.0
        %v6275 = vmax.f32 %v6259, 0.0
        %v6276 = vmax.f32 %v6260, 0.0
        %v6277 = vmax.f32 %v6261, 0.0
        %v6278 = vmax.f32 %v6262, 0.0
        %v6279 = vmax.f32 %v6263, 0.0
        %v6280 = vmax.f32 %v6264, 0.0
        %v6281 = vmax.f32 %v6265, 0.0
        %v6282 = vmax.f32 %v6266, 0.0
        %v6283 = vmax.f32 %v6267, 0.0
        %v6284 = vmax.f32 %v6268, 0.0
        %v6285 = vmax.f32 %v6269, 0.0
        %vm6286 = vcmask 261120
        %6287 = vst.msk [vmem:[%s241] sm:$0xff] %vm6286, %v6270
        %6288 = vst.msk [vmem:[%s241 + $0x8] sm:$0xff] %vm6286, %v6271
        %6289 = vst.msk [vmem:[%s241 + $0x10] sm:$0xff] %vm6286, %v6272
        %6290 = vst.msk [vmem:[%s241 + $0x18] sm:$0xff] %vm6286, %v6273
        %6291 = vst.msk [vmem:[%s241 + $0x20] sm:$0xff] %vm6286, %v6274
        %6292 = vst.msk [vmem:[%s241 + $0x28] sm:$0xff] %vm6286, %v6275
        %6293 = vst.msk [vmem:[%s241 + $0x30] sm:$0xff] %vm6286, %v6276
        %6294 = vst.msk [vmem:[%s241 + $0x38] sm:$0xff] %vm6286, %v6277
        %6295 = vst.msk [vmem:[%s241 + $0x40] sm:$0xff] %vm6286, %v6278
        %6296 = vst.msk [vmem:[%s241 + $0x48] sm:$0xff] %vm6286, %v6279
        %6297 = vst.msk [vmem:[%s241 + $0x50] sm:$0xff] %vm6286, %v6280
        %6298 = vst.msk [vmem:[%s241 + $0x58] sm:$0xff] %vm6286, %v6281
        %6299 = vst.msk [vmem:[%s241 + $0x60] sm:$0xff] %vm6286, %v6282
        %6300 = vst.msk [vmem:[%s241 + $0x68] sm:$0xff] %vm6286, %v6283
        %6301 = vst.msk [vmem:[%s241 + $0x70] sm:$0xff] %vm6286, %v6284
        %6302 = vst.msk [vmem:[%s241 + $0x78] sm:$0xff] %vm6286, %v6285
        %s6303 = sand.u32 %s153, 1
        %s6304 = scalar_lea.sflag [#allocation4], %s6303
        %s6305 = sand.u32 %s153, 1
        %s6306 = smul.addr %s6305, 128
        %s6307 = scalar_lea.vmem [#allocation3], %s6306
        // Predicated region
        $region41: #{unet_basic_block.1} parent=39 // pred_check
          %p6308 = pneg %p163
        $region42: #{unet_basic_block.1} parent=39 // pred_check_branch
          %6310 = sbr.rel (%p6308) target = $region44
        $region43: #{unet_basic_block.1} parent=39 // pred_region
          %s6311 = smul.u32 8, %s24
          %s6313 = ssub.s32 2048, 2048
          %6314 = vsyncadd %s6304, %s6313
          %s6315 = smul.addr %s6311, 2
          %s6316 = smul.addr %s23, 32
          %s6317 = sadd.s32 %s6315, %s6316
          %s6318 = smul.addr %s6317, 128
          %s6319 = scalar_lea.hbm %s5, %s6318
          %s6320 = sshll.u32 %s6307, 4
          %s6321 = int_to_ptr.vmem [resolvable:$true] %s6320
          %6326 = dma.vmem_to_hbm [thread:$0]  %s6321, 2048, %s6319, %s6304, 128, 128, 8
        $region44: #{unet_basic_block.1} parent=39 // pred_fallthru
          _
      $region40: #{unet_basic_block.1} parent=5 // pred_fallthru
        _
      %p6327 = scmp.le.s32.totalorder 2, %s14
      // Predicated region
      $region45: #{unet_basic_block.1} parent=5 // pred_check
        %p6328 = pneg %p6327
      $region46: #{unet_basic_block.1} parent=5 // pred_check_branch
        %6330 = sbr.rel (%p6328) target = $region48
      $region47: #{unet_basic_block.1} parent=5 // pred_region
        %s6331 = ssub.s32 %s14, 2
        // Predicated region
        $region49: #{unet_basic_block.1} parent=47 // pred_check
          %p6332 = pneg %p169
        $region50: #{unet_basic_block.1} parent=47 // pred_check_branch
          %6334 = sbr.rel (%p6332) target = $region52
        $region51: #{unet_basic_block.1} parent=47 // pred_region
          %s6335 = sand.u32 %s154, 1
          %s6336 = scalar_lea.sflag [#allocation4], %s6335
          %s6337 = sand.u32 %s154, 1
          %s6338 = smul.addr %s6337, 128
          %s6339 = scalar_lea.vmem [#allocation3], %s6338
          %6340 = dma.done %s6336, 2048
        $region52: #{unet_basic_block.1} parent=47 // pred_fallthru
          _
      $region48: #{unet_basic_block.1} parent=5 // pred_fallthru
        _
    $region6: #{unet_basic_block.1} parent=1 // loop_footer
      %s18 = sadd.s32 1, %s14
    $region7: #{unet_basic_block.1} parent=1 // loop_footer_branch
      %13 = sbr.rel target = $region3
    $region8: #{unet_basic_block.1} parent=1 // loop_exit
      _
    %6341 = vsyncpa [#allocation4], 1
    %s6342 = scalar_lea.sflag [#allocation4], 1
    %6343 = vsyncpa %s6342, 1

</llo_original>
